<compile_context>
chip_gen: v5e
topology: v5e:2x2
jax: 0.10.0
libtpu: 0.0.40
codegen_flags: <defaults>
</compile_context>

<pallas_src>
import jax
import jax.numpy as jnp
from jax import lax
from jax.experimental import pallas as pl
from jax.experimental.pallas import tpu as pltpu


# ----------------------------------------------------------------------------
# Pallas kernel
# ----------------------------------------------------------------------------
def _make_aspp_kernel(rates, H, W, rmax, Cin, Cout):
    nr = len(rates)
    HW = H * W
    Hp, Wp = H + 2 * rmax, W + 2 * rmax

    def kernel(x_ref, wc_ref, w3_ref, wp_ref, bm_ref, bp_ref, out_ref, pool_ref):
        # x_ref   : (H, W, Cin) bf16       -- UNPADDED image (one batch element)
        # wc_ref  : (Cin, (nr+1)*Cout) bf16 -- [w0 | center taps of c1..cK], BN folded
        # w3_ref  : (nr, 8*Cin, Cout) bf16  -- per-rate fused non-center taps, BN folded
        # wp_ref  : (Cin, Cout) bf16        -- image-pool 1x1 conv
        # bm_ref  : (1, (nr+1)*Cout) f32    -- fused BN biases for c0..cK
        # bp_ref  : (1, Cout) f32           -- image-pool conv bias
        # out_ref : (HW, (nr+1)*Cout) bf16  -- fused branch outputs (column slices)
        # pool_ref: (1, Cout) f32           -- pooled branch (broadcast in wrapper)

        x = x_ref[...]                                            # (H, W, Cin) bf16

        # Zero-padded slab built in VMEM (halo never travels over HBM).
        zrow = jnp.zeros((rmax, W, Cin), x.dtype)
        xp = jnp.concatenate([zrow, x, zrow], axis=0)             # (Hp, W, Cin)
        zcol = jnp.zeros((Hp, rmax, Cin), x.dtype)
        xp = jnp.concatenate([zcol, xp, zcol], axis=1)            # (Hp, Wp, Cin)

        x_center = x.reshape(HW, Cin)                             # center tap (no shift)

        # --- shared center tap: one wide MXU matmul covers c0 + all center taps ----
        hc = jnp.dot(x_center, wc_ref[...], preferred_element_type=jnp.float32)

        # --- c0 branch: bias + ReLU, store into its column slice --------------------
        out_ref[:, 0:Cout] = jnp.maximum(
            hc[:, 0:Cout] + bm_ref[:, 0:Cout], 0.0).astype(out_ref.dtype)

        # --- dilated 3x3 branches: 8 non-center taps fused into one K=8*Cin matmul --
        for i, r in enumerate(rates):
            taps = []
            for ky in range(3):
                for kx in range(3):
                    if ky == 1 and kx == 1:
                        continue
                    ry = rmax + (ky - 1) * r
                    rx = rmax + (kx - 1) * r
                    taps.append(xp[ry:ry + H, rx:rx + W, :].reshape(HW, Cin))
            lhs = jnp.concatenate(taps, axis=-1)                  # (HW, 8*Cin) bf16
            acc = jnp.dot(lhs, w3_ref[i],
                          preferred_element_type=jnp.float32)    # (HW, Cout) f32
            lo = (i + 1) * Cout
            out_ref[:, lo:lo + Cout] = jnp.maximum(
                hc[:, lo:lo + Cout] + acc + bm_ref[:, lo:lo + Cout],
                0.0).astype(out_ref.dtype)

        # --- imagepool: global mean (ones-row matmul) -> 1x1 conv (+bias) -> ReLU ----
        # (bilinear upsample from 1x1 is a pure broadcast; done in the wrapper so the
        #  kernel stores only (1, Cout) instead of HW identical rows)
        ones_row = jnp.ones((1, HW), jnp.bfloat16)
        pooled = jnp.dot(ones_row, x_center,
                         preferred_element_type=jnp.float32) * (1.0 / HW)  # (1, Cin)
        hp = jnp.dot(pooled.astype(jnp.bfloat16), wp_ref[...],
                     preferred_element_type=jnp.float32)
        pool_ref[...] = jnp.maximum(hp + bp_ref[...], 0.0).astype(pool_ref.dtype)

    return kernel


# ----------------------------------------------------------------------------
# Wrapper (layout glue + pallas_call)
# ----------------------------------------------------------------------------
def aspp_forward(x_nchw, params, rates):
    N, Cin, H, W = x_nchw.shape
    Cout = params['w0'].shape[1]
    nr = len(rates)
    rmax = max(rates)
    HW = H * W
    Cfused = (nr + 1) * Cout
    eps = 1e-5

    # NCHW -> NHWC, bf16, NO spatial padding (halo is created inside the kernel).
    x_nhwc = jnp.transpose(x_nchw, (0, 2, 3, 1)).astype(jnp.bfloat16)

    # Fold inference-mode BN into per-Cout weight scaling + bias vector.
    scales, biases = [], []
    for name in ['c0'] + [f'c{i + 1}' for i in range(nr)]:
        s = params[f'{name}_gamma'] / jnp.sqrt(params[f'{name}_var'] + eps)
        scales.append(s)
        biases.append(params[f'{name}_beta'] - params[f'{name}_mean'] * s)

    w0_f = params['w0'] * scales[0][None, :]                        # (Cin, Cout)
    w3_f = [params['w3'][i] * scales[i + 1][None, None, None, :]     # (3,3,Cin,Cout)
            for i in range(nr)]

    # Wide "center" weight: c0 plus the center tap of every dilated branch.
    wc = jnp.concatenate([w0_f] + [w3_f[i][1, 1] for i in range(nr)],
                         axis=1).astype(jnp.bfloat16)               # (Cin, Cfused)

    # Fused non-center taps per rate: rows ordered tap-major (ky,kx row-major, center
    # skipped) then Cin, matching the kernel's LHS concatenation order.
    w3t = jnp.stack(
        [jnp.concatenate([w3_f[i][ky, kx] for ky in range(3) for kx in range(3)
                          if not (ky == 1 and kx == 1)], axis=0)    # (8*Cin, Cout)
         for i in range(nr)], axis=0).astype(jnp.bfloat16)          # (nr, 8*Cin, Cout)

    wp = params['wp'].astype(jnp.bfloat16)
    b_main = jnp.concatenate(biases).reshape(1, Cfused).astype(jnp.float32)
    b_pool = params['bp'].reshape(1, Cout).astype(jnp.float32)

    kernel = _make_aspp_kernel(tuple(rates), H, W, rmax, Cin, Cout)

    # Weight/bias operands have constant index maps -> Pallas DMAs them only once
    # across the batch grid (single-buffering them is only a VMEM-capacity concern at
    # production sizes; see TODO about production tiling).
    in_specs = [
        pl.BlockSpec((None, H, W, Cin), lambda n: (n, 0, 0, 0)),
        pl.BlockSpec((Cin, Cfused), lambda n: (0, 0)),
        pl.BlockSpec((nr, 8 * Cin, Cout), lambda n: (0, 0, 0)),
        pl.BlockSpec((Cin, Cout), lambda n: (0, 0)),
        pl.BlockSpec((1, Cfused), lambda n: (0, 0)),
        pl.BlockSpec((1, Cout), lambda n: (0, 0)),
    ]
    out_specs = (
        pl.BlockSpec((None, HW, Cfused), lambda n: (n, 0, 0)),
        pl.BlockSpec((None, 1, Cout), lambda n: (n, 0, 0)),
    )
    out_shape = (
        jax.ShapeDtypeStruct((N, HW, Cfused), jnp.bfloat16),
        jax.ShapeDtypeStruct((N, 1, Cout), jnp.float32),
    )

    main, pool = pl.pallas_call(
        kernel,
        grid=(N,),
        in_specs=in_specs,
        out_specs=out_specs,
        out_shape=out_shape,
        compiler_params=pltpu.CompilerParams(
            dimension_semantics=("parallel",)),
    )(x_nhwc, wc, w3t, wp, b_main, b_pool)

    # Fused slab -> NCHW channel-concat order [c0, c1..cK, imagepool].
    main = main.astype(jnp.float32).reshape(N, H, W, nr + 1, Cout)
    main_nchw = jnp.transpose(main, (0, 3, 4, 1, 2)).reshape(N, Cfused, H, W)
    pool_nchw = jnp.broadcast_to(pool.reshape(N, Cout, 1, 1), (N, Cout, H, W))
    return jnp.concatenate([main_nchw, pool_nchw], axis=1)


# ----------------------------------------------------------------------------
# Deterministic synthetic parameter init (shapes from _ASPP.__init__)
# ----------------------------------------------------------------------------
def init_params(key, in_ch, out_ch, rates):
    nr = len(rates)
    keys = jax.random.split(key, 5)
    p = {
        'w0': 0.1 * jax.random.normal(keys[0], (in_ch, out_ch), jnp.float32),
        'w3': 0.1 * jax.random.normal(keys[1], (nr, 3, 3, in_ch, out_ch), jnp.float32),
        'wp': 0.1 * jax.random.normal(keys[2], (in_ch, out_ch), jnp.float32),
        'bp': 0.1 * jax.random.normal(keys[3], (out_ch,), jnp.float32),
    }
    for i, name in enumerate(['c0'] + [f'c{j + 1}' for j in range(nr)]):
        k = jax.random.fold_in(keys[4], i)
        k1, k2, k3, k4 = jax.random.split(k, 4)
        p[f'{name}_gamma'] = jax.random.uniform(k1, (out_ch,), jnp.float32, 0.5, 1.5)
        p[f'{name}_beta'] = 0.1 * jax.random.normal(k2, (out_ch,), jnp.float32)
        p[f'{name}_mean'] = 0.1 * jax.random.normal(k3, (out_ch,), jnp.float32)
        p[f'{name}_var'] = jax.random.uniform(k4, (out_ch,), jnp.float32, 0.5, 1.5)
    return p


# ----------------------------------------------------------------------------
# Pure-JAX reference (XLA convs, f32) for correctness checking
# ----------------------------------------------------------------------------
def aspp_reference(x_nchw, params, rates):
    eps = 1e-5
    N, Cin, H, W = x_nchw.shape
    Cout = params['w0'].shape[1]
    dn = ('NCHW', 'OIHW', 'NCHW')

    def affine(y, name):
        s = params[f'{name}_gamma'] / jnp.sqrt(params[f'{name}_var'] + eps)
        b = params[f'{name}_beta'] - params[f'{name}_mean'] * s
        return y * s[None, :, None, None] + b[None, :, None, None]

    outs = []
    w0 = jnp.transpose(params['w0'], (1, 0))[:, :, None, None]
    y = lax.conv_general_dilated(x_nchw, w0, (1, 1), 'VALID',
                                 dimension_numbers=dn,
                                 precision=lax.Precision.HIGHEST)
    outs.append(jnp.maximum(affine(y, 'c0'), 0.0))
    for i, r in enumerate(rates):
        w = jnp.transpose(params['w3'][i], (3, 2, 0, 1))     # (Cout, Cin, 3, 3)
        y = lax.conv_general_dilated(x_nchw, w, (1, 1), [(r, r), (r, r)],
                                     rhs_dilation=(r, r), dimension_numbers=dn,
                                     precision=lax.Precision.HIGHEST)
        outs.append(jnp.maximum(affine(y, f'c{i + 1}'), 0.0))
    pooled = jnp.mean(x_nchw, axis=(2, 3), keepdims=True)
    wp = jnp.transpose(params['wp'], (1, 0))[:, :, None, None]
    y = lax.conv_general_dilated(pooled, wp, (1, 1), 'VALID',
                                 dimension_numbers=dn,
                                 precision=lax.Precision.HIGHEST)
    y = jnp.maximum(y + params['bp'][None, :, None, None], 0.0)
    outs.append(jnp.broadcast_to(y, (N, Cout, H, W)))   # bilinear from 1x1 == broadcast
    return jnp.concatenate(outs, axis=1)


if __name__ == "__main__":
    in_ch, out_ch = 32, 32
    rates = (2, 4, 6)
    N, H, W = 2, 16, 16

    key = jax.random.PRNGKey(0)
    k_x, k_p = jax.random.split(key)
    x = jax.random.normal(k_x, (N, in_ch, H, W), jnp.float32)
    params = init_params(k_p, in_ch, out_ch, rates)

    out = jax.block_until_ready(aspp_forward(x, params, rates))

    assert out.shape == (N, out_ch * (len(rates) + 2), H, W)
    assert bool(jnp.all(jnp.isfinite(out)))

    ref = aspp_reference(x, params, rates)
    max_err = float(jnp.max(jnp.abs(out - ref)))
    rel_err = float(jnp.linalg.norm(out - ref) / jnp.linalg.norm(ref))
    # bf16 matmul inputs + bf16 output store with f32 accumulation -> loose tolerance.
    assert max_err < 1.5e-1, f"max abs err {max_err}"
    assert rel_err < 2e-2, f"rel err {rel_err}"

    print("KERNEL_OK")
</pallas_src>

<mosaic_0001>
module attributes {stable_mosaic.version = 11 : i64} {
  func.func @kernel(%arg0: i32, %arg1: memref<1x16x16x32xbf16, #tpu.memory_space<vmem>>, %arg2: memref<32x128xbf16, #tpu.memory_space<vmem>>, %arg3: memref<3x256x32xbf16, #tpu.memory_space<vmem>>, %arg4: memref<32x32xbf16, #tpu.memory_space<vmem>>, %arg5: memref<1x128xf32, #tpu.memory_space<vmem>>, %arg6: memref<1x32xf32, #tpu.memory_space<vmem>>, %arg7: memref<1x256x128xbf16, #tpu.memory_space<vmem>>, %arg8: memref<1x1x32xf32, #tpu.memory_space<vmem>>) attributes {dimension_semantics = [#tpu.dimension_semantics<parallel>], iteration_bounds = array<i64: 2>, scalar_prefetch = 0 : i64, scratch_operands = 0 : i64, tpu.core_type = #tpu.core_type<tc>, window_params = [{transform_indices = @transform_0, window_bounds = array<i64: 1, 16, 16, 32>}, {pipeline_mode = #tpu.pipeline_mode<synchronous>, transform_indices = @transform_1, window_bounds = array<i64: 32, 128>}, {pipeline_mode = #tpu.pipeline_mode<synchronous>, transform_indices = @transform_2, window_bounds = array<i64: 3, 256, 32>}, {pipeline_mode = #tpu.pipeline_mode<synchronous>, transform_indices = @transform_3, window_bounds = array<i64: 32, 32>}, {pipeline_mode = #tpu.pipeline_mode<synchronous>, transform_indices = @transform_4, window_bounds = array<i64: 1, 128>}, {pipeline_mode = #tpu.pipeline_mode<synchronous>, transform_indices = @transform_5, window_bounds = array<i64: 1, 32>}, {transform_indices = @transform_6, window_bounds = array<i64: 1, 256, 128>}, {transform_indices = @transform_7, window_bounds = array<i64: 1, 1, 32>}]} {
    %c0 = arith.constant 0 : index
    %c0_0 = arith.constant 0 : index
    %c0_1 = arith.constant 0 : index
    %c0_2 = arith.constant 0 : index
    %0 = vector.load %arg1[%c0, %c0_0, %c0_1, %c0_2] : memref<1x16x16x32xbf16, #tpu.memory_space<vmem>>, vector<1x16x16x32xbf16>
    %1 = vector.shape_cast %0 : vector<1x16x16x32xbf16> to vector<16x16x32xbf16>
    %cst = arith.constant 0.000000e+00 : bf16
    %2 = vector.broadcast %cst : bf16 to vector<6x16x32xbf16>
    %3 = tpu.concatenate %2, %1, %2 in 0 : vector<6x16x32xbf16>, vector<16x16x32xbf16>, vector<6x16x32xbf16> -> vector<28x16x32xbf16>
    %cst_3 = arith.constant 0.000000e+00 : bf16
    %4 = vector.broadcast %cst_3 : bf16 to vector<28x6x32xbf16>
    %5 = tpu.concatenate %4, %3, %4 in 1 : vector<28x6x32xbf16>, vector<28x16x32xbf16>, vector<28x6x32xbf16> -> vector<28x28x32xbf16>
    %6 = vector.shape_cast %1 : vector<16x16x32xbf16> to vector<256x32xbf16>
    %c0_4 = arith.constant 0 : index
    %c0_5 = arith.constant 0 : index
    %7 = vector.load %arg2[%c0_4, %c0_5] : memref<32x128xbf16, #tpu.memory_space<vmem>>, vector<32x128xbf16>
    %cst_6 = arith.constant dense<0.000000e+00> : vector<256x128xf32>
    %8 = tpu.matmul %6, %7, %cst_6 {dimension_numbers = #tpu.dot_dimension_numbers<[1], [0], [0], [1], [0, 0, 1, 1], [], []>} : vector<256x32xbf16>, vector<32x128xbf16>, vector<256x128xf32> -> vector<256x128xf32>
    %9 = vector.extract_strided_slice %8 {offsets = [0, 0], sizes = [256, 32], strides = [1, 1]} : vector<256x128xf32> to vector<256x32xf32>
    %c0_7 = arith.constant 0 : index
    %c0_8 = arith.constant 0 : index
    %10 = vector.load %arg5[%c0_7, %c0_8] : memref<1x128xf32, #tpu.memory_space<vmem>>, vector<1x32xf32>
    %11 = vector.broadcast %10 : vector<1x32xf32> to vector<256x32xf32>
    %12 = arith.addf %9, %11 : vector<256x32xf32>
    %cst_9 = arith.constant 0.000000e+00 : f32
    %13 = vector.broadcast %cst_9 : f32 to vector<256x32xf32>
    %14 = arith.maximumf %12, %13 : vector<256x32xf32>
    %15 = arith.truncf %14 : vector<256x32xf32> to vector<256x32xbf16>
    %c0_10 = arith.constant 0 : index
    %c0_11 = arith.constant 0 : index
    %c0_12 = arith.constant 0 : index
    %16 = vector.load %arg7[%c0_10, %c0_11, %c0_12] : memref<1x256x128xbf16, #tpu.memory_space<vmem>>, vector<1x256x32xbf16>
    %17 = vector.shape_cast %16 : vector<1x256x32xbf16> to vector<256x32xbf16>
    %18 = vector.shape_cast %15 : vector<256x32xbf16> to vector<1x256x32xbf16>
    tpu.vector_store %arg7[%c0_10, %c0_11, %c0_12], %18 {strides = array<i32>} : memref<1x256x128xbf16, #tpu.memory_space<vmem>>, vector<1x256x32xbf16>,
    %19 = vector.extract_strided_slice %5 {offsets = [4, 4, 0], sizes = [16, 16, 32], strides = [1, 1, 1]} : vector<28x28x32xbf16> to vector<16x16x32xbf16>
    %20 = vector.shape_cast %19 : vector<16x16x32xbf16> to vector<256x32xbf16>
    %21 = vector.extract_strided_slice %5 {offsets = [4, 6, 0], sizes = [16, 16, 32], strides = [1, 1, 1]} : vector<28x28x32xbf16> to vector<16x16x32xbf16>
    %22 = vector.shape_cast %21 : vector<16x16x32xbf16> to vector<256x32xbf16>
    %23 = vector.extract_strided_slice %5 {offsets = [4, 8, 0], sizes = [16, 16, 32], strides = [1, 1, 1]} : vector<28x28x32xbf16> to vector<16x16x32xbf16>
    %24 = vector.shape_cast %23 : vector<16x16x32xbf16> to vector<256x32xbf16>
    %25 = vector.extract_strided_slice %5 {offsets = [6, 4, 0], sizes = [16, 16, 32], strides = [1, 1, 1]} : vector<28x28x32xbf16> to vector<16x16x32xbf16>
    %26 = vector.shape_cast %25 : vector<16x16x32xbf16> to vector<256x32xbf16>
    %27 = vector.extract_strided_slice %5 {offsets = [6, 8, 0], sizes = [16, 16, 32], strides = [1, 1, 1]} : vector<28x28x32xbf16> to vector<16x16x32xbf16>
    %28 = vector.shape_cast %27 : vector<16x16x32xbf16> to vector<256x32xbf16>
    %29 = vector.extract_strided_slice %5 {offsets = [8, 4, 0], sizes = [16, 16, 32], strides = [1, 1, 1]} : vector<28x28x32xbf16> to vector<16x16x32xbf16>
    %30 = vector.shape_cast %29 : vector<16x16x32xbf16> to vector<256x32xbf16>
    %31 = vector.extract_strided_slice %5 {offsets = [8, 6, 0], sizes = [16, 16, 32], strides = [1, 1, 1]} : vector<28x28x32xbf16> to vector<16x16x32xbf16>
    %32 = vector.shape_cast %31 : vector<16x16x32xbf16> to vector<256x32xbf16>
    %33 = vector.extract_strided_slice %5 {offsets = [8, 8, 0], sizes = [16, 16, 32], strides = [1, 1, 1]} : vector<28x28x32xbf16> to vector<16x16x32xbf16>
    %34 = vector.shape_cast %33 : vector<16x16x32xbf16> to vector<256x32xbf16>
    %35 = tpu.concatenate %20, %22, %24, %26, %28, %30, %32, %34 in 1 : vector<256x32xbf16>, vector<256x32xbf16>, vector<256x32xbf16>, vector<256x32xbf16>, vector<256x32xbf16>, vector<256x32xbf16>, vector<256x32xbf16>, vector<256x32xbf16> -> vector<256x256xbf16>
    %c0_13 = arith.constant 0 : index
    %c0_14 = arith.constant 0 : index
    %c0_15 = arith.constant 0 : index
    %36 = vector.load %arg3[%c0_13, %c0_14, %c0_15] : memref<3x256x32xbf16, #tpu.memory_space<vmem>>, vector<1x256x32xbf16>
    %37 = vector.shape_cast %36 : vector<1x256x32xbf16> to vector<256x32xbf16>
    %cst_16 = arith.constant dense<0.000000e+00> : vector<256x32xf32>
    %38 = tpu.matmul %35, %37, %cst_16 {dimension_numbers = #tpu.dot_dimension_numbers<[1], [0], [0], [1], [0, 0, 1, 1], [], []>} : vector<256x256xbf16>, vector<256x32xbf16>, vector<256x32xf32> -> vector<256x32xf32>
    %39 = vector.extract_strided_slice %8 {offsets = [0, 32], sizes = [256, 32], strides = [1, 1]} : vector<256x128xf32> to vector<256x32xf32>
    %40 = arith.addf %39, %38 : vector<256x32xf32>
    %c0_17 = arith.constant 0 : index
    %c32 = arith.constant 32 : index
    %41 = vector.load %arg5[%c0_17, %c32] : memref<1x128xf32, #tpu.memory_space<vmem>>, vector<1x32xf32>
    %42 = vector.broadcast %41 : vector<1x32xf32> to vector<256x32xf32>
    %43 = arith.addf %40, %42 : vector<256x32xf32>
    %cst_18 = arith.constant 0.000000e+00 : f32
    %44 = vector.broadcast %cst_18 : f32 to vector<256x32xf32>
    %45 = arith.maximumf %43, %44 : vector<256x32xf32>
    %46 = arith.truncf %45 : vector<256x32xf32> to vector<256x32xbf16>
    %c0_19 = arith.constant 0 : index
    %c0_20 = arith.constant 0 : index
    %c32_21 = arith.constant 32 : index
    %47 = vector.load %arg7[%c0_19, %c0_20, %c32_21] : memref<1x256x128xbf16, #tpu.memory_space<vmem>>, vector<1x256x32xbf16>
    %48 = vector.shape_cast %47 : vector<1x256x32xbf16> to vector<256x32xbf16>
    %49 = vector.shape_cast %46 : vector<256x32xbf16> to vector<1x256x32xbf16>
    tpu.vector_store %arg7[%c0_19, %c0_20, %c32_21], %49 {strides = array<i32>} : memref<1x256x128xbf16, #tpu.memory_space<vmem>>, vector<1x256x32xbf16>,
    %50 = vector.extract_strided_slice %5 {offsets = [2, 2, 0], sizes = [16, 16, 32], strides = [1, 1, 1]} : vector<28x28x32xbf16> to vector<16x16x32xbf16>
    %51 = vector.shape_cast %50 : vector<16x16x32xbf16> to vector<256x32xbf16>
    %52 = vector.extract_strided_slice %5 {offsets = [2, 6, 0], sizes = [16, 16, 32], strides = [1, 1, 1]} : vector<28x28x32xbf16> to vector<16x16x32xbf16>
    %53 = vector.shape_cast %52 : vector<16x16x32xbf16> to vector<256x32xbf16>
    %54 = vector.extract_strided_slice %5 {offsets = [2, 10, 0], sizes = [16, 16, 32], strides = [1, 1, 1]} : vector<28x28x32xbf16> to vector<16x16x32xbf16>
    %55 = vector.shape_cast %54 : vector<16x16x32xbf16> to vector<256x32xbf16>
    %56 = vector.extract_strided_slice %5 {offsets = [6, 2, 0], sizes = [16, 16, 32], strides = [1, 1, 1]} : vector<28x28x32xbf16> to vector<16x16x32xbf16>
    %57 = vector.shape_cast %56 : vector<16x16x32xbf16> to vector<256x32xbf16>
    %58 = vector.extract_strided_slice %5 {offsets = [6, 10, 0], sizes = [16, 16, 32], strides = [1, 1, 1]} : vector<28x28x32xbf16> to vector<16x16x32xbf16>
    %59 = vector.shape_cast %58 : vector<16x16x32xbf16> to vector<256x32xbf16>
    %60 = vector.extract_strided_slice %5 {offsets = [10, 2, 0], sizes = [16, 16, 32], strides = [1, 1, 1]} : vector<28x28x32xbf16> to vector<16x16x32xbf16>
    %61 = vector.shape_cast %60 : vector<16x16x32xbf16> to vector<256x32xbf16>
    %62 = vector.extract_strided_slice %5 {offsets = [10, 6, 0], sizes = [16, 16, 32], strides = [1, 1, 1]} : vector<28x28x32xbf16> to vector<16x16x32xbf16>
    %63 = vector.shape_cast %62 : vector<16x16x32xbf16> to vector<256x32xbf16>
    %64 = vector.extract_strided_slice %5 {offsets = [10, 10, 0], sizes = [16, 16, 32], strides = [1, 1, 1]} : vector<28x28x32xbf16> to vector<16x16x32xbf16>
    %65 = vector.shape_cast %64 : vector<16x16x32xbf16> to vector<256x32xbf16>
    %66 = tpu.concatenate %51, %53, %55, %57, %59, %61, %63, %65 in 1 : vector<256x32xbf16>, vector<256x32xbf16>, vector<256x32xbf16>, vector<256x32xbf16>, vector<256x32xbf16>, vector<256x32xbf16>, vector<256x32xbf16>, vector<256x32xbf16> -> vector<256x256xbf16>
    %c1 = arith.constant 1 : index
    %c0_22 = arith.constant 0 : index
    %c0_23 = arith.constant 0 : index
    %67 = vector.load %arg3[%c1, %c0_22, %c0_23] : memref<3x256x32xbf16, #tpu.memory_space<vmem>>, vector<1x256x32xbf16>
    %68 = vector.shape_cast %67 : vector<1x256x32xbf16> to vector<256x32xbf16>
    %cst_24 = arith.constant dense<0.000000e+00> : vector<256x32xf32>
    %69 = tpu.matmul %66, %68, %cst_24 {dimension_numbers = #tpu.dot_dimension_numbers<[1], [0], [0], [1], [0, 0, 1, 1], [], []>} : vector<256x256xbf16>, vector<256x32xbf16>, vector<256x32xf32> -> vector<256x32xf32>
    %70 = vector.extract_strided_slice %8 {offsets = [0, 64], sizes = [256, 32], strides = [1, 1]} : vector<256x128xf32> to vector<256x32xf32>
    %71 = arith.addf %70, %69 : vector<256x32xf32>
    %c0_25 = arith.constant 0 : index
    %c64 = arith.constant 64 : index
    %72 = vector.load %arg5[%c0_25, %c64] : memref<1x128xf32, #tpu.memory_space<vmem>>, vector<1x32xf32>
    %73 = vector.broadcast %72 : vector<1x32xf32> to vector<256x32xf32>
    %74 = arith.addf %71, %73 : vector<256x32xf32>
    %cst_26 = arith.constant 0.000000e+00 : f32
    %75 = vector.broadcast %cst_26 : f32 to vector<256x32xf32>
    %76 = arith.maximumf %74, %75 : vector<256x32xf32>
    %77 = arith.truncf %76 : vector<256x32xf32> to vector<256x32xbf16>
    %c0_27 = arith.constant 0 : index
    %c0_28 = arith.constant 0 : index
    %c64_29 = arith.constant 64 : index
    %78 = vector.load %arg7[%c0_27, %c0_28, %c64_29] : memref<1x256x128xbf16, #tpu.memory_space<vmem>>, vector<1x256x32xbf16>
    %79 = vector.shape_cast %78 : vector<1x256x32xbf16> to vector<256x32xbf16>
    %80 = vector.shape_cast %77 : vector<256x32xbf16> to vector<1x256x32xbf16>
    tpu.vector_store %arg7[%c0_27, %c0_28, %c64_29], %80 {strides = array<i32>} : memref<1x256x128xbf16, #tpu.memory_space<vmem>>, vector<1x256x32xbf16>,
    %81 = vector.extract_strided_slice %5 {offsets = [0, 0, 0], sizes = [16, 16, 32], strides = [1, 1, 1]} : vector<28x28x32xbf16> to vector<16x16x32xbf16>
    %82 = vector.shape_cast %81 : vector<16x16x32xbf16> to vector<256x32xbf16>
    %83 = vector.extract_strided_slice %5 {offsets = [0, 6, 0], sizes = [16, 16, 32], strides = [1, 1, 1]} : vector<28x28x32xbf16> to vector<16x16x32xbf16>
    %84 = vector.shape_cast %83 : vector<16x16x32xbf16> to vector<256x32xbf16>
    %85 = vector.extract_strided_slice %5 {offsets = [0, 12, 0], sizes = [16, 16, 32], strides = [1, 1, 1]} : vector<28x28x32xbf16> to vector<16x16x32xbf16>
    %86 = vector.shape_cast %85 : vector<16x16x32xbf16> to vector<256x32xbf16>
    %87 = vector.extract_strided_slice %5 {offsets = [6, 0, 0], sizes = [16, 16, 32], strides = [1, 1, 1]} : vector<28x28x32xbf16> to vector<16x16x32xbf16>
    %88 = vector.shape_cast %87 : vector<16x16x32xbf16> to vector<256x32xbf16>
    %89 = vector.extract_strided_slice %5 {offsets = [6, 12, 0], sizes = [16, 16, 32], strides = [1, 1, 1]} : vector<28x28x32xbf16> to vector<16x16x32xbf16>
    %90 = vector.shape_cast %89 : vector<16x16x32xbf16> to vector<256x32xbf16>
    %91 = vector.extract_strided_slice %5 {offsets = [12, 0, 0], sizes = [16, 16, 32], strides = [1, 1, 1]} : vector<28x28x32xbf16> to vector<16x16x32xbf16>
    %92 = vector.shape_cast %91 : vector<16x16x32xbf16> to vector<256x32xbf16>
    %93 = vector.extract_strided_slice %5 {offsets = [12, 6, 0], sizes = [16, 16, 32], strides = [1, 1, 1]} : vector<28x28x32xbf16> to vector<16x16x32xbf16>
    %94 = vector.shape_cast %93 : vector<16x16x32xbf16> to vector<256x32xbf16>
    %95 = vector.extract_strided_slice %5 {offsets = [12, 12, 0], sizes = [16, 16, 32], strides = [1, 1, 1]} : vector<28x28x32xbf16> to vector<16x16x32xbf16>
    %96 = vector.shape_cast %95 : vector<16x16x32xbf16> to vector<256x32xbf16>
    %97 = tpu.concatenate %82, %84, %86, %88, %90, %92, %94, %96 in 1 : vector<256x32xbf16>, vector<256x32xbf16>, vector<256x32xbf16>, vector<256x32xbf16>, vector<256x32xbf16>, vector<256x32xbf16>, vector<256x32xbf16>, vector<256x32xbf16> -> vector<256x256xbf16>
    %c2 = arith.constant 2 : index
    %c0_30 = arith.constant 0 : index
    %c0_31 = arith.constant 0 : index
    %98 = vector.load %arg3[%c2, %c0_30, %c0_31] : memref<3x256x32xbf16, #tpu.memory_space<vmem>>, vector<1x256x32xbf16>
    %99 = vector.shape_cast %98 : vector<1x256x32xbf16> to vector<256x32xbf16>
    %cst_32 = arith.constant dense<0.000000e+00> : vector<256x32xf32>
    %100 = tpu.matmul %97, %99, %cst_32 {dimension_numbers = #tpu.dot_dimension_numbers<[1], [0], [0], [1], [0, 0, 1, 1], [], []>} : vector<256x256xbf16>, vector<256x32xbf16>, vector<256x32xf32> -> vector<256x32xf32>
    %101 = vector.extract_strided_slice %8 {offsets = [0, 96], sizes = [256, 32], strides = [1, 1]} : vector<256x128xf32> to vector<256x32xf32>
    %102 = arith.addf %101, %100 : vector<256x32xf32>
    %c0_33 = arith.constant 0 : index
    %c96 = arith.constant 96 : index
    %103 = vector.load %arg5[%c0_33, %c96] : memref<1x128xf32, #tpu.memory_space<vmem>>, vector<1x32xf32>
    %104 = vector.broadcast %103 : vector<1x32xf32> to vector<256x32xf32>
    %105 = arith.addf %102, %104 : vector<256x32xf32>
    %cst_34 = arith.constant 0.000000e+00 : f32
    %106 = vector.broadcast %cst_34 : f32 to vector<256x32xf32>
    %107 = arith.maximumf %105, %106 : vector<256x32xf32>
    %108 = arith.truncf %107 : vector<256x32xf32> to vector<256x32xbf16>
    %c0_35 = arith.constant 0 : index
    %c0_36 = arith.constant 0 : index
    %c96_37 = arith.constant 96 : index
    %109 = vector.load %arg7[%c0_35, %c0_36, %c96_37] : memref<1x256x128xbf16, #tpu.memory_space<vmem>>, vector<1x256x32xbf16>
    %110 = vector.shape_cast %109 : vector<1x256x32xbf16> to vector<256x32xbf16>
    %111 = vector.shape_cast %108 : vector<256x32xbf16> to vector<1x256x32xbf16>
    tpu.vector_store %arg7[%c0_35, %c0_36, %c96_37], %111 {strides = array<i32>} : memref<1x256x128xbf16, #tpu.memory_space<vmem>>, vector<1x256x32xbf16>,
    %cst_38 = arith.constant 1.000000e+00 : bf16
    %112 = vector.broadcast %cst_38 : bf16 to vector<1x256xbf16>
    %cst_39 = arith.constant dense<0.000000e+00> : vector<1x32xf32>
    %113 = tpu.matmul %112, %6, %cst_39 {dimension_numbers = #tpu.dot_dimension_numbers<[1], [0], [0], [1], [0, 0, 1, 1], [], []>} : vector<1x256xbf16>, vector<256x32xbf16>, vector<1x32xf32> -> vector<1x32xf32>
    %cst_40 = arith.constant 3.906250e-03 : f32
    %114 = vector.broadcast %cst_40 : f32 to vector<1x32xf32>
    %115 = arith.mulf %113, %114 : vector<1x32xf32>
    %116 = arith.truncf %115 : vector<1x32xf32> to vector<1x32xbf16>
    %c0_41 = arith.constant 0 : index
    %c0_42 = arith.constant 0 : index
    %117 = vector.load %arg4[%c0_41, %c0_42] : memref<32x32xbf16, #tpu.memory_space<vmem>>, vector<32x32xbf16>
    %cst_43 = arith.constant dense<0.000000e+00> : vector<1x32xf32>
    %118 = tpu.matmul %116, %117, %cst_43 {dimension_numbers = #tpu.dot_dimension_numbers<[1], [0], [0], [1], [0, 0, 1, 1], [], []>} : vector<1x32xbf16>, vector<32x32xbf16>, vector<1x32xf32> -> vector<1x32xf32>
    %c0_44 = arith.constant 0 : index
    %c0_45 = arith.constant 0 : index
    %119 = vector.load %arg6[%c0_44, %c0_45] : memref<1x32xf32, #tpu.memory_space<vmem>>, vector<1x32xf32>
    %120 = arith.addf %118, %119 : vector<1x32xf32>
    %cst_46 = arith.constant 0.000000e+00 : f32
    %121 = vector.broadcast %cst_46 : f32 to vector<1x32xf32>
    %122 = arith.maximumf %120, %121 : vector<1x32xf32>
    %c0_47 = arith.constant 0 : index
    %c0_48 = arith.constant 0 : index
    %c0_49 = arith.constant 0 : index
    %123 = vector.load %arg8[%c0_47, %c0_48, %c0_49] : memref<1x1x32xf32, #tpu.memory_space<vmem>>, vector<1x1x32xf32>
    %124 = vector.shape_cast %123 : vector<1x1x32xf32> to vector<1x32xf32>
    %125 = vector.shape_cast %122 : vector<1x32xf32> to vector<1x1x32xf32>
    tpu.vector_store %arg8[%c0_47, %c0_48, %c0_49], %125 {strides = array<i32>} : memref<1x1x32xf32, #tpu.memory_space<vmem>>, vector<1x1x32xf32>,
    return
  }
  func.func @transform_0(%arg0: i32) -> (i32, i32, i32, i32) {
    %c0_i32 = arith.constant 0 : i32
    %c0_i32_0 = arith.constant 0 : i32
    %c0_i32_1 = arith.constant 0 : i32
    %c0_i32_2 = arith.constant 0 : i32
    return %arg0, %c0_i32, %c0_i32_0, %c0_i32_1 : i32, i32, i32, i32
  }
  func.func @transform_1(%arg0: i32) -> (i32, i32) {
    %c0_i32 = arith.constant 0 : i32
    %c0_i32_0 = arith.constant 0 : i32
    %c0_i32_1 = arith.constant 0 : i32
    return %c0_i32, %c0_i32_0 : i32, i32
  }
  func.func @transform_2(%arg0: i32) -> (i32, i32, i32) {
    %c0_i32 = arith.constant 0 : i32
    %c0_i32_0 = arith.constant 0 : i32
    %c0_i32_1 = arith.constant 0 : i32
    %c0_i32_2 = arith.constant 0 : i32
    return %c0_i32, %c0_i32_0, %c0_i32_1 : i32, i32, i32
  }
  func.func @transform_3(%arg0: i32) -> (i32, i32) {
    %c0_i32 = arith.constant 0 : i32
    %c0_i32_0 = arith.constant 0 : i32
    %c0_i32_1 = arith.constant 0 : i32
    return %c0_i32, %c0_i32_0 : i32, i32
  }
  func.func @transform_4(%arg0: i32) -> (i32, i32) {
    %c0_i32 = arith.constant 0 : i32
    %c0_i32_0 = arith.constant 0 : i32
    %c0_i32_1 = arith.constant 0 : i32
    return %c0_i32, %c0_i32_0 : i32, i32
  }
  func.func @transform_5(%arg0: i32) -> (i32, i32) {
    %c0_i32 = arith.constant 0 : i32
    %c0_i32_0 = arith.constant 0 : i32
    %c0_i32_1 = arith.constant 0 : i32
    return %c0_i32, %c0_i32_0 : i32, i32
  }
  func.func @transform_6(%arg0: i32) -> (i32, i32, i32) {
    %c0_i32 = arith.constant 0 : i32
    %c0_i32_0 = arith.constant 0 : i32
    %c0_i32_1 = arith.constant 0 : i32
    return %arg0, %c0_i32, %c0_i32_0 : i32, i32, i32
  }
  func.func @transform_7(%arg0: i32) -> (i32, i32, i32) {
    %c0_i32 = arith.constant 0 : i32
    %c0_i32_0 = arith.constant 0 : i32
    %c0_i32_1 = arith.constant 0 : i32
    return %arg0, %c0_i32, %c0_i32_0 : i32, i32, i32
  }
}

</mosaic_0001>

<llo_original>
// kernel: tpu_custom_call.1
$region0: #{tpu_custom_call.1}
  #allocation0 [shape = 'u32[]', space=smem, size = 0x4, offset = 0x4, fixed_abs, tag = 'smem constant byte address 0x4 - core index']
  #allocation1 [shape = 'u32[72,128]{1,0:T(1,128)}', space=vmem, size = 0x9000, scoped, tag = 'internal scratch']
  %s0 = inlined_call_operand.vmem [shape: bf16[2,16,16,32], index: 0, kind: input, shape index: {}]
  %s1 = inlined_call_operand.vmem [shape: bf16[32,128], index: 1, kind: input, shape index: {}]
  %s2 = inlined_call_operand.vmem [shape: bf16[3,256,32], index: 2, kind: input, shape index: {}]
  %s3 = inlined_call_operand.vmem [shape: bf16[32,32], index: 3, kind: input, shape index: {}]
  %s4 = inlined_call_operand.vmem [shape: f32[1,128], index: 4, kind: input, shape index: {}]
  %s5 = inlined_call_operand.vmem [shape: f32[1,32], index: 5, kind: input, shape index: {}]
  %s6 = inlined_call_operand.hbm [shape: bf16[2,256,128], index: 6, kind: output, shape index: {0}]
  %s7 = inlined_call_operand.hbm [shape: f32[2,1,32], index: 7, kind: output, shape index: {1}]
  %8 = xla_tuple %s6, %s7
  %s9 = sld [smem:[#allocation0]]
  $region65: #{tpu_custom_call.1} parent=0
    _
  %s11 = ssub.s32 1, %s9
  %s12 = scalar_select 0, %s11, %s9
  $region1: #{tpu_custom_call.1} parent=0
    #allocation2 [shape = 'u8[131072]{0}', space=vmem, size = 0x20000, scoped, tag = 'output window, operand 0']
    #allocation3 [shape = 's32[2]{0}', space=sflag, size = 0x8, scoped, tag = 'scoped memory for tpu_custom_call.1']
    #allocation4 [shape = 'u8[1024]{0}', space=vmem, size = 0x400, scoped, tag = 'output window, operand 1']
    #allocation5 [shape = 's32[2]{0}', space=sflag, size = 0x8, scoped, tag = 'scoped memory for tpu_custom_call.1']
    %13 = vsyncpa [#allocation3], 0
    %s14 = scalar_lea.sflag [#allocation3], 1
    %15 = vsyncpa %s14, 0
    %16 = vsyncpa [#allocation5], 0
    %s17 = scalar_lea.sflag [#allocation5], 1
    %18 = vsyncpa %s17, 0
    loop: start=0, step=1, limit=4
    $region2: #{tpu_custom_call.1} parent=1 // loop_pre_header
      _
    $region3: #{tpu_custom_call.1} parent=1 // loop_header
      %s20 = sphi 0, %s24
      %p21 = scmp.ge.s32.totalorder %s20, 4
      %s30 = sphi 0, %s32
      %s33 = sphi 0, %s30
      %s34 = sphi 0, %s33
      %s50 = sphi 0, %s34
      %s54 = sphi 0, %s54
      %s56 = sphi 0, %s54
      %s57 = sphi 0, %s56
      %s71 = sphi 0, %s57
      %s75 = sphi 0, %s75
      %s77 = sphi 0, %s75
      %s78 = sphi 0, %s77
      %s92 = sphi 0, %s78
      %s96 = sphi 0, %s96
      %s98 = sphi 0, %s96
      %s99 = sphi 0, %s98
      %s113 = sphi 0, %s99
      %s117 = sphi 0, %s117
      %s119 = sphi 0, %s117
      %s120 = sphi 0, %s119
      %s134 = sphi 0, %s120
      %s138 = sphi 0, %s138
      %s140 = sphi 0, %s138
      %s141 = sphi 0, %s140
      %s155 = sphi 0, %s141
      %s161 = sphi 0, %s163
      %s164 = sphi 0, %s161
      %s165 = sphi 0, %s164
      %s181 = sphi 0, %s165
      %s187 = sphi 0, %s189
      %s190 = sphi 0, %s187
      %s191 = sphi 0, %s190
      %s207 = sphi 0, %s191
    $region4: #{tpu_custom_call.1} parent=1 // loop_header_branch
      %23 = sbr.rel (%p21) target = $region8
    $region5: #{tpu_custom_call.1} parent=1 // loop_body
      %s25 = ssub.s32 %s20, 1
      %s26 = ssub.s32 %s20, 2
      %s27 = sadd.s32 %s20, 1
      %s28 = ssub.s32 %s20, %s27
      %p29 = scmp.eq.s32.totalorder %s28, 0
      %s31 = sadd.s32 %s30, 1
      %s32 = scalar_select %p29, %s30, %s31
      %p35 = pneg %p29
      %p36 = scmp.eq.s32.totalorder %s20, 1
      %p37 = por %p35, %p36
      %p38 = scmp.ne.s32.totalorder %s30, %s33
      %p39 = scmp.eq.s32.totalorder %s20, 0
      %p40 = por %p38, %p39
      %p41 = scmp.ne.s32.totalorder %s30, %s33
      %p42 = scmp.eq.s32.totalorder %s25, 1
      %p43 = por %p41, %p42
      %p44 = scmp.ne.s32.totalorder %s33, %s34
      %p45 = scmp.eq.s32.totalorder %s25, 0
      %p46 = por %p44, %p45
      %p47 = scmp.ne.s32.totalorder %s33, %s34
      %p48 = scmp.eq.s32.totalorder %s26, 1
      %p49 = por %p47, %p48
      %p51 = scmp.ne.s32.totalorder %s34, %s50
      %p52 = scmp.eq.s32.totalorder %s26, 0
      %p53 = por %p51, %p52
      %s55 = sadd.s32 %s54, 1
      %p58 = scmp.eq.s32.totalorder %s20, 1
      %p59 = scmp.ne.s32.totalorder %s54, %s56
      %p60 = scmp.eq.s32.totalorder %s20, 0
      %p61 = por %p59, %p60
      %p62 = scmp.ne.s32.totalorder %s54, %s56
      %p63 = scmp.eq.s32.totalorder %s25, 1
      %p64 = por %p62, %p63
      %p65 = scmp.ne.s32.totalorder %s56, %s57
      %p66 = scmp.eq.s32.totalorder %s25, 0
      %p67 = por %p65, %p66
      %p68 = scmp.ne.s32.totalorder %s56, %s57
      %p69 = scmp.eq.s32.totalorder %s26, 1
      %p70 = por %p68, %p69
      %p72 = scmp.ne.s32.totalorder %s57, %s71
      %p73 = scmp.eq.s32.totalorder %s26, 0
      %p74 = por %p72, %p73
      %s76 = sadd.s32 %s75, 1
      %p79 = scmp.eq.s32.totalorder %s20, 1
      %p80 = scmp.ne.s32.totalorder %s75, %s77
      %p81 = scmp.eq.s32.totalorder %s20, 0
      %p82 = por %p80, %p81
      %p83 = scmp.ne.s32.totalorder %s75, %s77
      %p84 = scmp.eq.s32.totalorder %s25, 1
      %p85 = por %p83, %p84
      %p86 = scmp.ne.s32.totalorder %s77, %s78
      %p87 = scmp.eq.s32.totalorder %s25, 0
      %p88 = por %p86, %p87
      %p89 = scmp.ne.s32.totalorder %s77, %s78
      %p90 = scmp.eq.s32.totalorder %s26, 1
      %p91 = por %p89, %p90
      %p93 = scmp.ne.s32.totalorder %s78, %s92
      %p94 = scmp.eq.s32.totalorder %s26, 0
      %p95 = por %p93, %p94
      %s97 = sadd.s32 %s96, 1
      %p100 = scmp.eq.s32.totalorder %s20, 1
      %p101 = scmp.ne.s32.totalorder %s96, %s98
      %p102 = scmp.eq.s32.totalorder %s20, 0
      %p103 = por %p101, %p102
      %p104 = scmp.ne.s32.totalorder %s96, %s98
      %p105 = scmp.eq.s32.totalorder %s25, 1
      %p106 = por %p104, %p105
      %p107 = scmp.ne.s32.totalorder %s98, %s99
      %p108 = scmp.eq.s32.totalorder %s25, 0
      %p109 = por %p107, %p108
      %p110 = scmp.ne.s32.totalorder %s98, %s99
      %p111 = scmp.eq.s32.totalorder %s26, 1
      %p112 = por %p110, %p111
      %p114 = scmp.ne.s32.totalorder %s99, %s113
      %p115 = scmp.eq.s32.totalorder %s26, 0
      %p116 = por %p114, %p115
      %s118 = sadd.s32 %s117, 1
      %p121 = scmp.eq.s32.totalorder %s20, 1
      %p122 = scmp.ne.s32.totalorder %s117, %s119
      %p123 = scmp.eq.s32.totalorder %s20, 0
      %p124 = por %p122, %p123
      %p125 = scmp.ne.s32.totalorder %s117, %s119
      %p126 = scmp.eq.s32.totalorder %s25, 1
      %p127 = por %p125, %p126
      %p128 = scmp.ne.s32.totalorder %s119, %s120
      %p129 = scmp.eq.s32.totalorder %s25, 0
      %p130 = por %p128, %p129
      %p131 = scmp.ne.s32.totalorder %s119, %s120
      %p132 = scmp.eq.s32.totalorder %s26, 1
      %p133 = por %p131, %p132
      %p135 = scmp.ne.s32.totalorder %s120, %s134
      %p136 = scmp.eq.s32.totalorder %s26, 0
      %p137 = por %p135, %p136
      %s139 = sadd.s32 %s138, 1
      %p142 = scmp.eq.s32.totalorder %s20, 1
      %p143 = scmp.ne.s32.totalorder %s138, %s140
      %p144 = scmp.eq.s32.totalorder %s20, 0
      %p145 = por %p143, %p144
      %p146 = scmp.ne.s32.totalorder %s138, %s140
      %p147 = scmp.eq.s32.totalorder %s25, 1
      %p148 = por %p146, %p147
      %p149 = scmp.ne.s32.totalorder %s140, %s141
      %p150 = scmp.eq.s32.totalorder %s25, 0
      %p151 = por %p149, %p150
      %p152 = scmp.ne.s32.totalorder %s140, %s141
      %p153 = scmp.eq.s32.totalorder %s26, 1
      %p154 = por %p152, %p153
      %p156 = scmp.ne.s32.totalorder %s141, %s155
      %p157 = scmp.eq.s32.totalorder %s26, 0
      %p158 = por %p156, %p157
      %s159 = ssub.s32 %s20, %s27
      %p160 = scmp.eq.s32.totalorder %s159, 0
      %s162 = sadd.s32 %s161, 1
      %s163 = scalar_select %p160, %s161, %s162
      %p166 = pneg %p160
      %p167 = scmp.eq.s32.totalorder %s20, 1
      %p168 = por %p166, %p167
      %p169 = scmp.ne.s32.totalorder %s161, %s164
      %p170 = scmp.eq.s32.totalorder %s20, 0
      %p171 = por %p169, %p170
      %p172 = scmp.ne.s32.totalorder %s161, %s164
      %p173 = scmp.eq.s32.totalorder %s25, 1
      %p174 = por %p172, %p173
      %p175 = scmp.ne.s32.totalorder %s164, %s165
      %p176 = scmp.eq.s32.totalorder %s25, 0
      %p177 = por %p175, %p176
      %p178 = scmp.ne.s32.totalorder %s164, %s165
      %p179 = scmp.eq.s32.totalorder %s26, 1
      %p180 = por %p178, %p179
      %p182 = scmp.ne.s32.totalorder %s165, %s181
      %p183 = scmp.eq.s32.totalorder %s26, 0
      %p184 = por %p182, %p183
      %s185 = ssub.s32 %s20, %s27
      %p186 = scmp.eq.s32.totalorder %s185, 0
      %s188 = sadd.s32 %s187, 1
      %s189 = scalar_select %p186, %s187, %s188
      %p192 = pneg %p186
      %p193 = scmp.eq.s32.totalorder %s20, 1
      %p194 = por %p192, %p193
      %p195 = scmp.ne.s32.totalorder %s187, %s190
      %p196 = scmp.eq.s32.totalorder %s20, 0
      %p197 = por %p195, %p196
      %p198 = scmp.ne.s32.totalorder %s187, %s190
      %p199 = scmp.eq.s32.totalorder %s25, 1
      %p200 = por %p198, %p199
      %p201 = scmp.ne.s32.totalorder %s190, %s191
      %p202 = scmp.eq.s32.totalorder %s25, 0
      %p203 = por %p201, %p202
      %p204 = scmp.ne.s32.totalorder %s190, %s191
      %p205 = scmp.eq.s32.totalorder %s26, 1
      %p206 = por %p204, %p205
      %p208 = scmp.ne.s32.totalorder %s191, %s207
      %p209 = scmp.eq.s32.totalorder %s26, 0
      %p210 = por %p208, %p209
      %p211 = scmp.le.s32.totalorder 1, %s20
      %p212 = scmp.lt.s32.totalorder %s20, 3
      %p213 = pnand %p211, %p212
      %p214 = pneg %p213
      // Predicated region
      $region9: #{tpu_custom_call.1} parent=5 // pred_check
        _
      $region10: #{tpu_custom_call.1} parent=5 // pred_check_branch
        %216 = sbr.rel (%p213) target = $region12
      $region11: #{tpu_custom_call.1} parent=5 // pred_region
        %s217 = ssub.s32 %s20, 1
        // Predicated region
        $region13: #{tpu_custom_call.1} parent=11 // pred_check
          %p218 = pneg %p67
        $region14: #{tpu_custom_call.1} parent=11 // pred_check_branch
          %220 = sbr.rel (%p218) target = $region16
        $region15: #{tpu_custom_call.1} parent=11 // pred_region
          _
        $region16: #{tpu_custom_call.1} parent=11 // pred_fallthru
          _
        // Predicated region
        $region17: #{tpu_custom_call.1} parent=11 // pred_check
          %p221 = pneg %p88
        $region18: #{tpu_custom_call.1} parent=11 // pred_check_branch
          %223 = sbr.rel (%p221) target = $region20
        $region19: #{tpu_custom_call.1} parent=11 // pred_region
          _
        $region20: #{tpu_custom_call.1} parent=11 // pred_fallthru
          _
        // Predicated region
        $region21: #{tpu_custom_call.1} parent=11 // pred_check
          %p224 = pneg %p109
        $region22: #{tpu_custom_call.1} parent=11 // pred_check_branch
          %226 = sbr.rel (%p224) target = $region24
        $region23: #{tpu_custom_call.1} parent=11 // pred_region
          _
        $region24: #{tpu_custom_call.1} parent=11 // pred_fallthru
          _
        // Predicated region
        $region25: #{tpu_custom_call.1} parent=11 // pred_check
          %p227 = pneg %p130
        $region26: #{tpu_custom_call.1} parent=11 // pred_check_branch
          %229 = sbr.rel (%p227) target = $region28
        $region27: #{tpu_custom_call.1} parent=11 // pred_region
          _
        $region28: #{tpu_custom_call.1} parent=11 // pred_fallthru
          _
        // Predicated region
        $region29: #{tpu_custom_call.1} parent=11 // pred_check
          %p230 = pneg %p151
        $region30: #{tpu_custom_call.1} parent=11 // pred_check_branch
          %232 = sbr.rel (%p230) target = $region32
        $region31: #{tpu_custom_call.1} parent=11 // pred_region
          _
        $region32: #{tpu_custom_call.1} parent=11 // pred_fallthru
          _
      $region12: #{tpu_custom_call.1} parent=5 // pred_fallthru
        _
      %p233 = scmp.lt.s32.totalorder %s20, 2
      // Predicated region
      $region33: #{tpu_custom_call.1} parent=5 // pred_check
        %p234 = pneg %p233
      $region34: #{tpu_custom_call.1} parent=5 // pred_check_branch
        %236 = sbr.rel (%p234) target = $region36
      $region35: #{tpu_custom_call.1} parent=5 // pred_region
        // Predicated region
        $region37: #{tpu_custom_call.1} parent=35 // pred_check
          %p237 = pneg %p40
        $region38: #{tpu_custom_call.1} parent=35 // pred_check_branch
          %239 = sbr.rel (%p237) target = $region40
        $region39: #{tpu_custom_call.1} parent=35 // pred_region
          %p240 = scmp.lt.s32.totalorder %s20, 1
          %s241 = scalar_select %p240, %s20, 1
          %s242 = smul.addr %s241, 32
          %s243 = smul.addr %s242, 4
          %s244 = scalar_lea.vmem %s0, %s243
        $region40: #{tpu_custom_call.1} parent=35 // pred_fallthru
          _
      $region36: #{tpu_custom_call.1} parent=5 // pred_fallthru
        _
      %p245 = scmp.le.s32.totalorder 1, %s20
      %p246 = scmp.lt.s32.totalorder %s20, 3
      %p247 = pnand %p245, %p246
      %p248 = pneg %p247
      // Predicated region
      $region41: #{tpu_custom_call.1} parent=5 // pred_check
        _
      $region42: #{tpu_custom_call.1} parent=5 // pred_check_branch
        %250 = sbr.rel (%p247) target = $region44
      $region43: #{tpu_custom_call.1} parent=5 // pred_region
        %s251 = ssub.s32 %s20, 1
        %p252 = scmp.lt.s32.totalorder %s25, 1
        %s253 = scalar_select %p252, %s25, 1
        %s254 = smul.addr %s253, 32
        %s255 = smul.addr %s254, 4
        %s256 = scalar_lea.vmem %s0, %s255
        %p257 = pneg %p46
        %p258 = pneg %p43
        %p259 = pneg %p67
        %p260 = pneg %p64
        %p261 = pneg %p88
        %p262 = pneg %p85
        %p263 = pneg %p109
        %p264 = pneg %p106
        %p265 = pneg %p130
        %p266 = pneg %p127
        %p267 = pneg %p151
        %p268 = pneg %p148
        %p269 = pneg %p177
        %p270 = pneg %p174
        %s271 = sand.u32 %s164, 1
        %s272 = scalar_lea.sflag [#allocation3], %s271
        %s273 = sand.u32 %s164, 1
        %s274 = smul.addr %s273, 128
        %s275 = scalar_lea.vmem [#allocation2], %s274
        %p276 = pneg %p203
        %p277 = pneg %p200
        %s278 = sand.u32 %s190, 1
        %s279 = scalar_lea.sflag [#allocation5], %s278
        %s280 = sand.u32 %s190, 1
        %s281 = scalar_lea.vmem [#allocation4], %s280
        %p282 = scmp.lt.s32.totalorder %s25, 1
        %s283 = scalar_select %p282, %s25, 1
        %s284 = smul.addr %s283, 32
        %s285 = smul.addr %s284, 4
        %s286 = scalar_lea.vmem %s0, %s285
        %v289 = vld [vmem:[%s286] sm:$0xf]
        %v290 = vld [vmem:[%s286 + $0x4] sm:$0xf]
        %v291 = vld [vmem:[%s286 + $0x8] sm:$0xf]
        %v292 = vld [vmem:[%s286 + $0xc] sm:$0xf]
        %v293 = vld [vmem:[%s286 + $0x10] sm:$0xf]
        %v294 = vld [vmem:[%s286 + $0x14] sm:$0xf]
        %v295 = vld [vmem:[%s286 + $0x18] sm:$0xf]
        %v296 = vld [vmem:[%s286 + $0x1c] sm:$0xf]
        %v297 = vld [vmem:[%s286 + $0x20] sm:$0xf]
        %v298 = vld [vmem:[%s286 + $0x24] sm:$0xf]
        %v299 = vld [vmem:[%s286 + $0x28] sm:$0xf]
        %v300 = vld [vmem:[%s286 + $0x2c] sm:$0xf]
        %v301 = vld [vmem:[%s286 + $0x30] sm:$0xf]
        %v302 = vld [vmem:[%s286 + $0x34] sm:$0xf]
        %v303 = vld [vmem:[%s286 + $0x38] sm:$0xf]
        %v304 = vld [vmem:[%s286 + $0x3c] sm:$0xf]
        %v305 = vld [vmem:[%s286 + $0x40] sm:$0xf]
        %v306 = vld [vmem:[%s286 + $0x44] sm:$0xf]
        %v307 = vld [vmem:[%s286 + $0x48] sm:$0xf]
        %v308 = vld [vmem:[%s286 + $0x4c] sm:$0xf]
        %v309 = vld [vmem:[%s286 + $0x50] sm:$0xf]
        %v310 = vld [vmem:[%s286 + $0x54] sm:$0xf]
        %v311 = vld [vmem:[%s286 + $0x58] sm:$0xf]
        %v312 = vld [vmem:[%s286 + $0x5c] sm:$0xf]
        %v313 = vld [vmem:[%s286 + $0x60] sm:$0xf]
        %v314 = vld [vmem:[%s286 + $0x64] sm:$0xf]
        %v315 = vld [vmem:[%s286 + $0x68] sm:$0xf]
        %v316 = vld [vmem:[%s286 + $0x6c] sm:$0xf]
        %v317 = vld [vmem:[%s286 + $0x70] sm:$0xf]
        %v318 = vld [vmem:[%s286 + $0x74] sm:$0xf]
        %v319 = vld [vmem:[%s286 + $0x78] sm:$0xf]
        %v320 = vld [vmem:[%s286 + $0x7c] sm:$0xf]
        %v353 = vunpack.c.l.b16 %v289
        %v354 = vunpack.c.l.b16 %v290
        %v355 = vunpack.c.l.b16 %v291
        %v356 = vunpack.c.l.b16 %v292
        %v357 = vunpack.c.l.b16 %v293
        %v358 = vunpack.c.l.b16 %v294
        %v359 = vunpack.c.l.b16 %v295
        %v360 = vunpack.c.l.b16 %v296
        %v361 = vunpack.c.l.b16 %v297
        %v362 = vunpack.c.l.b16 %v298
        %v363 = vunpack.c.l.b16 %v299
        %v364 = vunpack.c.l.b16 %v300
        %v365 = vunpack.c.l.b16 %v301
        %v366 = vunpack.c.l.b16 %v302
        %v367 = vunpack.c.l.b16 %v303
        %v368 = vunpack.c.l.b16 %v304
        %v369 = vunpack.c.l.b16 %v305
        %v370 = vunpack.c.l.b16 %v306
        %v371 = vunpack.c.l.b16 %v307
        %v372 = vunpack.c.l.b16 %v308
        %v373 = vunpack.c.l.b16 %v309
        %v374 = vunpack.c.l.b16 %v310
        %v375 = vunpack.c.l.b16 %v311
        %v376 = vunpack.c.l.b16 %v312
        %v377 = vunpack.c.l.b16 %v313
        %v378 = vunpack.c.l.b16 %v314
        %v379 = vunpack.c.l.b16 %v315
        %v380 = vunpack.c.l.b16 %v316
        %v381 = vunpack.c.l.b16 %v317
        %v382 = vunpack.c.l.b16 %v318
        %v383 = vunpack.c.l.b16 %v319
        %v384 = vunpack.c.l.b16 %v320
        %v385 = vpack.c.b16 %v354, %v353
        %v386 = vpack.c.b16 %v356, %v355
        %v387 = vpack.c.b16 %v358, %v357
        %v388 = vpack.c.b16 %v360, %v359
        %v389 = vpack.c.b16 %v362, %v361
        %v390 = vpack.c.b16 %v364, %v363
        %v391 = vpack.c.b16 %v366, %v365
        %v392 = vpack.c.b16 %v368, %v367
        %v393 = vpack.c.b16 %v370, %v369
        %v394 = vpack.c.b16 %v372, %v371
        %v395 = vpack.c.b16 %v374, %v373
        %v396 = vpack.c.b16 %v376, %v375
        %v397 = vpack.c.b16 %v378, %v377
        %v398 = vpack.c.b16 %v380, %v379
        %v399 = vpack.c.b16 %v382, %v381
        %v400 = vpack.c.b16 %v384, %v383
        %v402 = vrot.slane 0, 5
        %v403 = vrot.slane %v385, 5
        %v404 = vrot.slane %v386, 5
        %v405 = vrot.slane %v387, 5
        %v406 = vrot.slane %v388, 5
        %v407 = vrot.slane %v389, 5
        %v408 = vrot.slane %v390, 5
        %v409 = vrot.slane %v391, 5
        %v410 = vrot.slane %v392, 5
        %v411 = vrot.slane %v393, 5
        %v412 = vrot.slane %v394, 5
        %v413 = vrot.slane %v395, 5
        %v414 = vrot.slane %v396, 5
        %v415 = vrot.slane %v397, 5
        %v416 = vrot.slane %v398, 5
        %v417 = vrot.slane %v399, 5
        %v418 = vrot.slane %v400, 5
        %vm419 = vcmask 1042432
        %v422 = vsel %vm419, 0, %v402
        %v424 = vsel %vm419, 0, %v403
        %v426 = vsel %vm419, 0, %v404
        %v428 = vsel %vm419, 0, %v405
        %v430 = vsel %vm419, 0, %v406
        %v432 = vsel %vm419, 0, %v407
        %v434 = vsel %vm419, 0, %v408
        %v436 = vsel %vm419, 0, %v409
        %v438 = vsel %vm419, 0, %v410
        %v440 = vsel %vm419, 0, %v411
        %v442 = vsel %vm419, 0, %v412
        %v444 = vsel %vm419, 0, %v413
        %v446 = vsel %vm419, 0, %v414
        %v448 = vsel %vm419, 0, %v415
        %v450 = vsel %vm419, 0, %v416
        %v452 = vsel %vm419, 0, %v417
        %v454 = vsel %vm419, 0, %v418
        %v455 = vsel %vm419, %v402, 0
        %v456 = vsel %vm419, %v403, 0
        %v457 = vsel %vm419, %v404, 0
        %v458 = vsel %vm419, %v405, 0
        %v459 = vsel %vm419, %v406, 0
        %v460 = vsel %vm419, %v407, 0
        %v461 = vsel %vm419, %v408, 0
        %v462 = vsel %vm419, %v409, 0
        %v463 = vsel %vm419, %v410, 0
        %v464 = vsel %vm419, %v411, 0
        %v465 = vsel %vm419, %v412, 0
        %v466 = vsel %vm419, %v413, 0
        %v467 = vsel %vm419, %v414, 0
        %v468 = vsel %vm419, %v415, 0
        %v469 = vsel %vm419, %v416, 0
        %v470 = vsel %vm419, %v417, 0
        %v471 = vsel %vm419, %v418, 0
        %v472 = vld [vmem:[%s1] sm:$0xf]
        %v473 = vld [vmem:[%s1 + $0x4] sm:$0xf]
        %v474 = vld [vmem:[%s1 + $0x8] sm:$0xf]
        %v475 = vld [vmem:[%s1 + $0xc] sm:$0xf]
        %v480 = vunpack.c.l.b16 %v472
        %v481 = vunpack.c.l.b16 %v473
        %v482 = vunpack.c.l.b16 %v474
        %v483 = vunpack.c.l.b16 %v475
        %v484 = vpack.c.b16 %v481, %v480
        %v485 = vpack.c.b16 %v483, %v482
        %vm488 = vcmask 261120
        %v490 = vsel %vm488, %v385, 0
        %v493 = vsel %vm488, %v386, 0
        %v496 = vsel %vm488, %v387, 0
        %v499 = vsel %vm488, %v388, 0
        %v502 = vsel %vm488, %v389, 0
        %v505 = vsel %vm488, %v390, 0
        %v508 = vsel %vm488, %v391, 0
        %v511 = vsel %vm488, %v392, 0
        %v514 = vsel %vm488, %v393, 0
        %v517 = vsel %vm488, %v394, 0
        %v520 = vsel %vm488, %v395, 0
        %v523 = vsel %vm488, %v396, 0
        %v526 = vsel %vm488, %v397, 0
        %v529 = vsel %vm488, %v398, 0
        %v532 = vsel %vm488, %v399, 0
        %v535 = vsel %vm488, %v400, 0
        %537 = vmatpush.bf16.msra.mxu0 0
        %538 = vmatpush.bf16.msra.mxu0 0
        %539 = vmatpush.bf16.msra.mxu0 0
        %540 = vmatpush.bf16.msra.mxu0 0
        %541 = vmatpush.bf16.msra.mxu0 0
        %542 = vmatpush.bf16.msra.mxu0 0
        %543 = vmatpush.bf16.msra.mxu0 %v485
        %544 = vmatpush.bf16.msra.mxu0 %v484
        %545 = vmatmul.bf16.gmra.mxu0 %v490
        %v546 = vpop.f32.mrf.mxu0
        %v547 = vadd.f32 0.0, %v546
        %v548 = vpop.f32.mrf.mxu0
        %v549 = vadd.f32 0.0, %v548
        %550 = vmatmul.bf16.gmra.mxu0 %v493
        %v551 = vpop.f32.mrf.mxu0
        %v552 = vadd.f32 0.0, %v551
        %v553 = vpop.f32.mrf.mxu0
        %v554 = vadd.f32 0.0, %v553
        %555 = vmatmul.bf16.gmra.mxu0 %v496
        %v556 = vpop.f32.mrf.mxu0
        %v557 = vadd.f32 0.0, %v556
        %v558 = vpop.f32.mrf.mxu0
        %v559 = vadd.f32 0.0, %v558
        %560 = vmatmul.bf16.gmra.mxu0 %v499
        %v561 = vpop.f32.mrf.mxu0
        %v562 = vadd.f32 0.0, %v561
        %v563 = vpop.f32.mrf.mxu0
        %v564 = vadd.f32 0.0, %v563
        %565 = vmatmul.bf16.gmra.mxu0 %v502
        %v566 = vpop.f32.mrf.mxu0
        %v567 = vadd.f32 0.0, %v566
        %v568 = vpop.f32.mrf.mxu0
        %v569 = vadd.f32 0.0, %v568
        %570 = vmatmul.bf16.gmra.mxu0 %v505
        %v571 = vpop.f32.mrf.mxu0
        %v572 = vadd.f32 0.0, %v571
        %v573 = vpop.f32.mrf.mxu0
        %v574 = vadd.f32 0.0, %v573
        %575 = vmatmul.bf16.gmra.mxu0 %v508
        %v576 = vpop.f32.mrf.mxu0
        %v577 = vadd.f32 0.0, %v576
        %v578 = vpop.f32.mrf.mxu0
        %v579 = vadd.f32 0.0, %v578
        %580 = vmatmul.bf16.gmra.mxu0 %v511
        %v581 = vpop.f32.mrf.mxu0
        %v582 = vadd.f32 0.0, %v581
        %v583 = vpop.f32.mrf.mxu0
        %v584 = vadd.f32 0.0, %v583
        %585 = vmatmul.bf16.gmra.mxu0 %v514
        %v586 = vpop.f32.mrf.mxu0
        %v587 = vadd.f32 0.0, %v586
        %v588 = vpop.f32.mrf.mxu0
        %v589 = vadd.f32 0.0, %v588
        %590 = vmatmul.bf16.gmra.mxu0 %v517
        %v591 = vpop.f32.mrf.mxu0
        %v592 = vadd.f32 0.0, %v591
        %v593 = vpop.f32.mrf.mxu0
        %v594 = vadd.f32 0.0, %v593
        %595 = vmatmul.bf16.gmra.mxu0 %v520
        %v596 = vpop.f32.mrf.mxu0
        %v597 = vadd.f32 0.0, %v596
        %v598 = vpop.f32.mrf.mxu0
        %v599 = vadd.f32 0.0, %v598
        %600 = vmatmul.bf16.gmra.mxu0 %v523
        %v601 = vpop.f32.mrf.mxu0
        %v602 = vadd.f32 0.0, %v601
        %v603 = vpop.f32.mrf.mxu0
        %v604 = vadd.f32 0.0, %v603
        %605 = vmatmul.bf16.gmra.mxu0 %v526
        %v606 = vpop.f32.mrf.mxu0
        %v607 = vadd.f32 0.0, %v606
        %v608 = vpop.f32.mrf.mxu0
        %v609 = vadd.f32 0.0, %v608
        %610 = vmatmul.bf16.gmra.mxu0 %v529
        %v611 = vpop.f32.mrf.mxu0
        %v612 = vadd.f32 0.0, %v611
        %v613 = vpop.f32.mrf.mxu0
        %v614 = vadd.f32 0.0, %v613
        %615 = vmatmul.bf16.gmra.mxu0 %v532
        %v616 = vpop.f32.mrf.mxu0
        %v617 = vadd.f32 0.0, %v616
        %v618 = vpop.f32.mrf.mxu0
        %v619 = vadd.f32 0.0, %v618
        %620 = vmatmul.bf16.gmra.mxu0 %v535
        %v621 = vpop.f32.mrf.mxu0
        %v622 = vadd.f32 0.0, %v621
        %v623 = vpop.f32.mrf.mxu0
        %v624 = vadd.f32 0.0, %v623
        %625 = vdwg.mxu0
        %v626 = vld [vmem:[%s4] sm:$0x1]
        %v628 = vperm.slane %v626, 0
        %v630 = vadd.f32 %v547, %v628
        %v631 = vadd.f32 %v549, %v628
        %v632 = vadd.f32 %v552, %v628
        %v633 = vadd.f32 %v554, %v628
        %v634 = vadd.f32 %v557, %v628
        %v635 = vadd.f32 %v559, %v628
        %v636 = vadd.f32 %v562, %v628
        %v637 = vadd.f32 %v564, %v628
        %v638 = vadd.f32 %v567, %v628
        %v639 = vadd.f32 %v569, %v628
        %v640 = vadd.f32 %v572, %v628
        %v641 = vadd.f32 %v574, %v628
        %v642 = vadd.f32 %v577, %v628
        %v643 = vadd.f32 %v579, %v628
        %v644 = vadd.f32 %v582, %v628
        %v645 = vadd.f32 %v584, %v628
        %v646 = vadd.f32 %v587, %v628
        %v647 = vadd.f32 %v589, %v628
        %v648 = vadd.f32 %v592, %v628
        %v649 = vadd.f32 %v594, %v628
        %v650 = vadd.f32 %v597, %v628
        %v651 = vadd.f32 %v599, %v628
        %v652 = vadd.f32 %v602, %v628
        %v653 = vadd.f32 %v604, %v628
        %v654 = vadd.f32 %v607, %v628
        %v655 = vadd.f32 %v609, %v628
        %v656 = vadd.f32 %v612, %v628
        %v657 = vadd.f32 %v614, %v628
        %v658 = vadd.f32 %v617, %v628
        %v659 = vadd.f32 %v619, %v628
        %v660 = vadd.f32 %v622, %v628
        %v661 = vadd.f32 %v624, %v628
        %v662 = vmax.f32 %v630, 0.0
        %v663 = vmax.f32 %v631, 0.0
        %v664 = vmax.f32 %v632, 0.0
        %v665 = vmax.f32 %v633, 0.0
        %v666 = vmax.f32 %v634, 0.0
        %v667 = vmax.f32 %v635, 0.0
        %v668 = vmax.f32 %v636, 0.0
        %v669 = vmax.f32 %v637, 0.0
        %v670 = vmax.f32 %v638, 0.0
        %v671 = vmax.f32 %v639, 0.0
        %v672 = vmax.f32 %v640, 0.0
        %v673 = vmax.f32 %v641, 0.0
        %v674 = vmax.f32 %v642, 0.0
        %v675 = vmax.f32 %v643, 0.0
        %v676 = vmax.f32 %v644, 0.0
        %v677 = vmax.f32 %v645, 0.0
        %v678 = vmax.f32 %v646, 0.0
        %v679 = vmax.f32 %v647, 0.0
        %v680 = vmax.f32 %v648, 0.0
        %v681 = vmax.f32 %v649, 0.0
        %v682 = vmax.f32 %v650, 0.0
        %v683 = vmax.f32 %v651, 0.0
        %v684 = vmax.f32 %v652, 0.0
        %v685 = vmax.f32 %v653, 0.0
        %v686 = vmax.f32 %v654, 0.0
        %v687 = vmax.f32 %v655, 0.0
        %v688 = vmax.f32 %v656, 0.0
        %v689 = vmax.f32 %v657, 0.0
        %v690 = vmax.f32 %v658, 0.0
        %v691 = vmax.f32 %v659, 0.0
        %v692 = vmax.f32 %v660, 0.0
        %v693 = vmax.f32 %v661, 0.0
        %v694 = vpack.c.bf16 %v662, %v662
        %v695 = vpack.c.bf16 %v663, %v663
        %v696 = vpack.c.bf16 %v664, %v664
        %v697 = vpack.c.bf16 %v665, %v665
        %v698 = vpack.c.bf16 %v666, %v666
        %v699 = vpack.c.bf16 %v667, %v667
        %v700 = vpack.c.bf16 %v668, %v668
        %v701 = vpack.c.bf16 %v669, %v669
        %v702 = vpack.c.bf16 %v670, %v670
        %v703 = vpack.c.bf16 %v671, %v671
        %v704 = vpack.c.bf16 %v672, %v672
        %v705 = vpack.c.bf16 %v673, %v673
        %v706 = vpack.c.bf16 %v674, %v674
        %v707 = vpack.c.bf16 %v675, %v675
        %v708 = vpack.c.bf16 %v676, %v676
        %v709 = vpack.c.bf16 %v677, %v677
        %v710 = vpack.c.bf16 %v678, %v678
        %v711 = vpack.c.bf16 %v679, %v679
        %v712 = vpack.c.bf16 %v680, %v680
        %v713 = vpack.c.bf16 %v681, %v681
        %v714 = vpack.c.bf16 %v682, %v682
        %v715 = vpack.c.bf16 %v683, %v683
        %v716 = vpack.c.bf16 %v684, %v684
        %v717 = vpack.c.bf16 %v685, %v685
        %v718 = vpack.c.bf16 %v686, %v686
        %v719 = vpack.c.bf16 %v687, %v687
        %v720 = vpack.c.bf16 %v688, %v688
        %v721 = vpack.c.bf16 %v689, %v689
        %v722 = vpack.c.bf16 %v690, %v690
        %v723 = vpack.c.bf16 %v691, %v691
        %v724 = vpack.c.bf16 %v692, %v692
        %v725 = vpack.c.bf16 %v693, %v693
        %vm726 = vcmask 257024
        %727 = vst.msk [vmem:[%s275] sm:$0xf] %vm726, %v694
        %728 = vst.msk [vmem:[%s275 + $0x4] sm:$0xf] %vm726, %v695
        %729 = vst.msk [vmem:[%s275 + $0x8] sm:$0xf] %vm726, %v696
        %730 = vst.msk [vmem:[%s275 + $0xc] sm:$0xf] %vm726, %v697
        %731 = vst.msk [vmem:[%s275 + $0x10] sm:$0xf] %vm726, %v698
        %732 = vst.msk [vmem:[%s275 + $0x14] sm:$0xf] %vm726, %v699
        %733 = vst.msk [vmem:[%s275 + $0x18] sm:$0xf] %vm726, %v700
        %734 = vst.msk [vmem:[%s275 + $0x1c] sm:$0xf] %vm726, %v701
        %735 = vst.msk [vmem:[%s275 + $0x20] sm:$0xf] %vm726, %v702
        %736 = vst.msk [vmem:[%s275 + $0x24] sm:$0xf] %vm726, %v703
        %737 = vst.msk [vmem:[%s275 + $0x28] sm:$0xf] %vm726, %v704
        %738 = vst.msk [vmem:[%s275 + $0x2c] sm:$0xf] %vm726, %v705
        %739 = vst.msk [vmem:[%s275 + $0x30] sm:$0xf] %vm726, %v706
        %740 = vst.msk [vmem:[%s275 + $0x34] sm:$0xf] %vm726, %v707
        %741 = vst.msk [vmem:[%s275 + $0x38] sm:$0xf] %vm726, %v708
        %742 = vst.msk [vmem:[%s275 + $0x3c] sm:$0xf] %vm726, %v709
        %743 = vst.msk [vmem:[%s275 + $0x40] sm:$0xf] %vm726, %v710
        %744 = vst.msk [vmem:[%s275 + $0x44] sm:$0xf] %vm726, %v711
        %745 = vst.msk [vmem:[%s275 + $0x48] sm:$0xf] %vm726, %v712
        %746 = vst.msk [vmem:[%s275 + $0x4c] sm:$0xf] %vm726, %v713
        %747 = vst.msk [vmem:[%s275 + $0x50] sm:$0xf] %vm726, %v714
        %748 = vst.msk [vmem:[%s275 + $0x54] sm:$0xf] %vm726, %v715
        %749 = vst.msk [vmem:[%s275 + $0x58] sm:$0xf] %vm726, %v716
        %750 = vst.msk [vmem:[%s275 + $0x5c] sm:$0xf] %vm726, %v717
        %751 = vst.msk [vmem:[%s275 + $0x60] sm:$0xf] %vm726, %v718
        %752 = vst.msk [vmem:[%s275 + $0x64] sm:$0xf] %vm726, %v719
        %753 = vst.msk [vmem:[%s275 + $0x68] sm:$0xf] %vm726, %v720
        %754 = vst.msk [vmem:[%s275 + $0x6c] sm:$0xf] %vm726, %v721
        %755 = vst.msk [vmem:[%s275 + $0x70] sm:$0xf] %vm726, %v722
        %756 = vst.msk [vmem:[%s275 + $0x74] sm:$0xf] %vm726, %v723
        %757 = vst.msk [vmem:[%s275 + $0x78] sm:$0xf] %vm726, %v724
        %758 = vst.msk [vmem:[%s275 + $0x7c] sm:$0xf] %vm726, %v725
        %vm789 = vcmask 1045504
        %v790 = vrot.slane %v422, 2
        %v791 = vrot.slane %v455, 2
        %v792 = vsel %vm789, %v790, %v791
        %v793 = vrot.slane %v424, 2
        %v794 = vrot.slane %v456, 2
        %v795 = vsel %vm789, %v793, %v794
        %v796 = vrot.slane %v426, 2
        %v797 = vrot.slane %v457, 2
        %v798 = vsel %vm789, %v796, %v797
        %v799 = vrot.slane %v428, 2
        %v800 = vrot.slane %v458, 2
        %v801 = vsel %vm789, %v799, %v800
        %v802 = vrot.slane %v430, 2
        %v803 = vrot.slane %v459, 2
        %v804 = vsel %vm789, %v802, %v803
        %v805 = vrot.slane %v432, 2
        %v806 = vrot.slane %v460, 2
        %v807 = vsel %vm789, %v805, %v806
        %v808 = vrot.slane %v434, 2
        %v809 = vrot.slane %v461, 2
        %v810 = vsel %vm789, %v808, %v809
        %v811 = vrot.slane %v436, 2
        %v812 = vrot.slane %v462, 2
        %v813 = vsel %vm789, %v811, %v812
        %v814 = vrot.slane %v438, 2
        %v815 = vrot.slane %v463, 2
        %v816 = vsel %vm789, %v814, %v815
        %v817 = vrot.slane %v440, 2
        %v818 = vrot.slane %v464, 2
        %v819 = vsel %vm789, %v817, %v818
        %v820 = vrot.slane %v442, 2
        %v821 = vrot.slane %v465, 2
        %v822 = vsel %vm789, %v820, %v821
        %v823 = vrot.slane %v444, 2
        %v824 = vrot.slane %v466, 2
        %v825 = vsel %vm789, %v823, %v824
        %v826 = vrot.slane %v446, 2
        %v827 = vrot.slane %v467, 2
        %v828 = vsel %vm789, %v826, %v827
        %v829 = vrot.slane %v448, 2
        %v830 = vrot.slane %v468, 2
        %v831 = vsel %vm789, %v829, %v830
        %v832 = vrot.slane %v450, 2
        %v833 = vrot.slane %v469, 2
        %v834 = vsel %vm789, %v832, %v833
        %vm835 = vcmask 1044480
        %v836 = vrot.slane %v422, 3
        %v837 = vrot.slane %v455, 3
        %v838 = vsel %vm835, %v836, %v837
        %v839 = vrot.slane %v424, 3
        %v840 = vrot.slane %v456, 3
        %v841 = vsel %vm835, %v839, %v840
        %v842 = vrot.slane %v426, 3
        %v843 = vrot.slane %v457, 3
        %v844 = vsel %vm835, %v842, %v843
        %v845 = vrot.slane %v428, 3
        %v846 = vrot.slane %v458, 3
        %v847 = vsel %vm835, %v845, %v846
        %v848 = vrot.slane %v430, 3
        %v849 = vrot.slane %v459, 3
        %v850 = vsel %vm835, %v848, %v849
        %v851 = vrot.slane %v432, 3
        %v852 = vrot.slane %v460, 3
        %v853 = vsel %vm835, %v851, %v852
        %v854 = vrot.slane %v434, 3
        %v855 = vrot.slane %v461, 3
        %v856 = vsel %vm835, %v854, %v855
        %v857 = vrot.slane %v436, 3
        %v858 = vrot.slane %v462, 3
        %v859 = vsel %vm835, %v857, %v858
        %v860 = vrot.slane %v438, 3
        %v861 = vrot.slane %v463, 3
        %v862 = vsel %vm835, %v860, %v861
        %v863 = vrot.slane %v440, 3
        %v864 = vrot.slane %v464, 3
        %v865 = vsel %vm835, %v863, %v864
        %v866 = vrot.slane %v442, 3
        %v867 = vrot.slane %v465, 3
        %v868 = vsel %vm835, %v866, %v867
        %v869 = vrot.slane %v444, 3
        %v870 = vrot.slane %v466, 3
        %v871 = vsel %vm835, %v869, %v870
        %v872 = vrot.slane %v446, 3
        %v873 = vrot.slane %v467, 3
        %v874 = vsel %vm835, %v872, %v873
        %v875 = vrot.slane %v448, 3
        %v876 = vrot.slane %v468, 3
        %v877 = vsel %vm835, %v875, %v876
        %v878 = vrot.slane %v450, 3
        %v879 = vrot.slane %v469, 3
        %v880 = vsel %vm835, %v878, %v879
        %vm881 = vcmask 1043456
        %v882 = vrot.slane %v422, 4
        %v883 = vrot.slane %v455, 4
        %v884 = vsel %vm881, %v882, %v883
        %v885 = vrot.slane %v424, 4
        %v886 = vrot.slane %v456, 4
        %v887 = vsel %vm881, %v885, %v886
        %v888 = vrot.slane %v426, 4
        %v889 = vrot.slane %v457, 4
        %v890 = vsel %vm881, %v888, %v889
        %v891 = vrot.slane %v428, 4
        %v892 = vrot.slane %v458, 4
        %v893 = vsel %vm881, %v891, %v892
        %v894 = vrot.slane %v430, 4
        %v895 = vrot.slane %v459, 4
        %v896 = vsel %vm881, %v894, %v895
        %v897 = vrot.slane %v432, 4
        %v898 = vrot.slane %v460, 4
        %v899 = vsel %vm881, %v897, %v898
        %v900 = vrot.slane %v434, 4
        %v901 = vrot.slane %v461, 4
        %v902 = vsel %vm881, %v900, %v901
        %v903 = vrot.slane %v436, 4
        %v904 = vrot.slane %v462, 4
        %v905 = vsel %vm881, %v903, %v904
        %v906 = vrot.slane %v438, 4
        %v907 = vrot.slane %v463, 4
        %v908 = vsel %vm881, %v906, %v907
        %v909 = vrot.slane %v440, 4
        %v910 = vrot.slane %v464, 4
        %v911 = vsel %vm881, %v909, %v910
        %v912 = vrot.slane %v442, 4
        %v913 = vrot.slane %v465, 4
        %v914 = vsel %vm881, %v912, %v913
        %v915 = vrot.slane %v444, 4
        %v916 = vrot.slane %v466, 4
        %v917 = vsel %vm881, %v915, %v916
        %v918 = vrot.slane %v446, 4
        %v919 = vrot.slane %v467, 4
        %v920 = vsel %vm881, %v918, %v919
        %v921 = vrot.slane %v448, 4
        %v922 = vrot.slane %v468, 4
        %v923 = vsel %vm881, %v921, %v922
        %v924 = vrot.slane %v450, 4
        %v925 = vrot.slane %v469, 4
        %v926 = vsel %vm881, %v924, %v925
        %v931 = vrot.slane %v452, 2
        %v932 = vrot.slane %v470, 2
        %v933 = vsel %vm789, %v931, %v932
        %v934 = vrot.slane %v454, 2
        %v935 = vrot.slane %v471, 2
        %v936 = vsel %vm789, %v934, %v935
        %v937 = vrot.slane %v452, 4
        %v938 = vrot.slane %v470, 4
        %v939 = vsel %vm881, %v937, %v938
        %v940 = vrot.slane %v454, 4
        %v941 = vrot.slane %v471, 4
        %v942 = vsel %vm881, %v940, %v941
        %v943 = vrot.slane %v452, 3
        %v944 = vrot.slane %v470, 3
        %v945 = vsel %vm835, %v943, %v944
        %v946 = vrot.slane %v454, 3
        %v947 = vrot.slane %v471, 3
        %v948 = vsel %vm835, %v946, %v947
        %949 = vrot.lane.b32.xlu0 %v838, 32
        %v950 = vpop.permute.xlu0 %949
        %951 = vrot.lane.b32.xlu0 %v841, 32
        %v952 = vpop.permute.xlu0 %951
        %953 = vrot.lane.b32.xlu0 %v844, 32
        %v954 = vpop.permute.xlu0 %953
        %955 = vrot.lane.b32.xlu0 %v847, 32
        %v956 = vpop.permute.xlu0 %955
        %957 = vrot.lane.b32.xlu0 %v850, 32
        %v958 = vpop.permute.xlu0 %957
        %959 = vrot.lane.b32.xlu0 %v853, 32
        %v960 = vpop.permute.xlu0 %959
        %961 = vrot.lane.b32.xlu0 %v856, 32
        %v962 = vpop.permute.xlu0 %961
        %963 = vrot.lane.b32.xlu0 %v859, 32
        %v964 = vpop.permute.xlu0 %963
        %965 = vrot.lane.b32.xlu0 %v862, 32
        %v966 = vpop.permute.xlu0 %965
        %967 = vrot.lane.b32.xlu0 %v865, 32
        %v968 = vpop.permute.xlu0 %967
        %969 = vrot.lane.b32.xlu0 %v868, 32
        %v970 = vpop.permute.xlu0 %969
        %971 = vrot.lane.b32.xlu0 %v871, 32
        %v972 = vpop.permute.xlu0 %971
        %973 = vrot.lane.b32.xlu0 %v874, 32
        %v974 = vpop.permute.xlu0 %973
        %975 = vrot.lane.b32.xlu0 %v877, 32
        %v976 = vpop.permute.xlu0 %975
        %977 = vrot.lane.b32.xlu0 %v880, 32
        %v978 = vpop.permute.xlu0 %977
        %979 = vrot.lane.b32.xlu0 %v884, 64
        %v980 = vpop.permute.xlu0 %979
        %981 = vrot.lane.b32.xlu0 %v887, 64
        %v982 = vpop.permute.xlu0 %981
        %983 = vrot.lane.b32.xlu0 %v890, 64
        %v984 = vpop.permute.xlu0 %983
        %985 = vrot.lane.b32.xlu0 %v893, 64
        %v986 = vpop.permute.xlu0 %985
        %987 = vrot.lane.b32.xlu0 %v896, 64
        %v988 = vpop.permute.xlu0 %987
        %989 = vrot.lane.b32.xlu0 %v899, 64
        %v990 = vpop.permute.xlu0 %989
        %991 = vrot.lane.b32.xlu0 %v902, 64
        %v992 = vpop.permute.xlu0 %991
        %993 = vrot.lane.b32.xlu0 %v905, 64
        %v994 = vpop.permute.xlu0 %993
        %995 = vrot.lane.b32.xlu0 %v908, 64
        %v996 = vpop.permute.xlu0 %995
        %997 = vrot.lane.b32.xlu0 %v911, 64
        %v998 = vpop.permute.xlu0 %997
        %999 = vrot.lane.b32.xlu0 %v914, 64
        %v1000 = vpop.permute.xlu0 %999
        %1001 = vrot.lane.b32.xlu0 %v917, 64
        %v1002 = vpop.permute.xlu0 %1001
        %1003 = vrot.lane.b32.xlu0 %v920, 64
        %v1004 = vpop.permute.xlu0 %1003
        %1005 = vrot.lane.b32.xlu0 %v923, 64
        %v1006 = vpop.permute.xlu0 %1005
        %1007 = vrot.lane.b32.xlu0 %v926, 64
        %v1008 = vpop.permute.xlu0 %1007
        %1009 = vrot.lane.b32.xlu0 %v795, 96
        %v1010 = vpop.permute.xlu0 %1009
        %1011 = vrot.lane.b32.xlu0 %v798, 96
        %v1012 = vpop.permute.xlu0 %1011
        %1013 = vrot.lane.b32.xlu0 %v801, 96
        %v1014 = vpop.permute.xlu0 %1013
        %1015 = vrot.lane.b32.xlu0 %v804, 96
        %v1016 = vpop.permute.xlu0 %1015
        %1017 = vrot.lane.b32.xlu0 %v807, 96
        %v1018 = vpop.permute.xlu0 %1017
        %1019 = vrot.lane.b32.xlu0 %v810, 96
        %v1020 = vpop.permute.xlu0 %1019
        %1021 = vrot.lane.b32.xlu0 %v813, 96
        %v1022 = vpop.permute.xlu0 %1021
        %1023 = vrot.lane.b32.xlu0 %v816, 96
        %v1024 = vpop.permute.xlu0 %1023
        %1025 = vrot.lane.b32.xlu0 %v819, 96
        %v1026 = vpop.permute.xlu0 %1025
        %1027 = vrot.lane.b32.xlu0 %v822, 96
        %v1028 = vpop.permute.xlu0 %1027
        %1029 = vrot.lane.b32.xlu0 %v825, 96
        %v1030 = vpop.permute.xlu0 %1029
        %1031 = vrot.lane.b32.xlu0 %v828, 96
        %v1032 = vpop.permute.xlu0 %1031
        %1033 = vrot.lane.b32.xlu0 %v831, 96
        %v1034 = vpop.permute.xlu0 %1033
        %1035 = vrot.lane.b32.xlu0 %v834, 96
        %v1036 = vpop.permute.xlu0 %1035
        %1037 = vrot.lane.b32.xlu0 %v933, 96
        %v1038 = vpop.permute.xlu0 %1037
        %1039 = vrot.lane.b32.xlu0 %v936, 96
        %v1040 = vpop.permute.xlu0 %1039
        %1041 = vrot.lane.b32.xlu0 %v801, 32
        %v1042 = vpop.permute.xlu0 %1041
        %1043 = vrot.lane.b32.xlu0 %v804, 32
        %v1044 = vpop.permute.xlu0 %1043
        %1045 = vrot.lane.b32.xlu0 %v807, 32
        %v1046 = vpop.permute.xlu0 %1045
        %1047 = vrot.lane.b32.xlu0 %v810, 32
        %v1048 = vpop.permute.xlu0 %1047
        %1049 = vrot.lane.b32.xlu0 %v813, 32
        %v1050 = vpop.permute.xlu0 %1049
        %1051 = vrot.lane.b32.xlu0 %v816, 32
        %v1052 = vpop.permute.xlu0 %1051
        %1053 = vrot.lane.b32.xlu0 %v819, 32
        %v1054 = vpop.permute.xlu0 %1053
        %1055 = vrot.lane.b32.xlu0 %v822, 32
        %v1056 = vpop.permute.xlu0 %1055
        %1057 = vrot.lane.b32.xlu0 %v825, 32
        %v1058 = vpop.permute.xlu0 %1057
        %1059 = vrot.lane.b32.xlu0 %v828, 32
        %v1060 = vpop.permute.xlu0 %1059
        %1061 = vrot.lane.b32.xlu0 %v831, 32
        %v1062 = vpop.permute.xlu0 %1061
        %1063 = vrot.lane.b32.xlu0 %v834, 32
        %v1064 = vpop.permute.xlu0 %1063
        %1065 = vrot.lane.b32.xlu0 %v933, 32
        %v1066 = vpop.permute.xlu0 %1065
        %1067 = vrot.lane.b32.xlu0 %v936, 32
        %v1068 = vpop.permute.xlu0 %1067
        %1069 = vrot.lane.b32.xlu0 %v792, 32
        %v1070 = vpop.permute.xlu0 %1069
        %1071 = vrot.lane.b32.xlu0 %v847, 64
        %v1072 = vpop.permute.xlu0 %1071
        %1073 = vrot.lane.b32.xlu0 %v850, 64
        %v1074 = vpop.permute.xlu0 %1073
        %1075 = vrot.lane.b32.xlu0 %v853, 64
        %v1076 = vpop.permute.xlu0 %1075
        %1077 = vrot.lane.b32.xlu0 %v856, 64
        %v1078 = vpop.permute.xlu0 %1077
        %1079 = vrot.lane.b32.xlu0 %v859, 64
        %v1080 = vpop.permute.xlu0 %1079
        %1081 = vrot.lane.b32.xlu0 %v862, 64
        %v1082 = vpop.permute.xlu0 %1081
        %1083 = vrot.lane.b32.xlu0 %v865, 64
        %v1084 = vpop.permute.xlu0 %1083
        %1085 = vrot.lane.b32.xlu0 %v868, 64
        %v1086 = vpop.permute.xlu0 %1085
        %1087 = vrot.lane.b32.xlu0 %v871, 64
        %v1088 = vpop.permute.xlu0 %1087
        %1089 = vrot.lane.b32.xlu0 %v874, 64
        %v1090 = vpop.permute.xlu0 %1089
        %1091 = vrot.lane.b32.xlu0 %v877, 64
        %v1092 = vpop.permute.xlu0 %1091
        %1093 = vrot.lane.b32.xlu0 %v880, 64
        %v1094 = vpop.permute.xlu0 %1093
        %1095 = vrot.lane.b32.xlu0 %v945, 64
        %v1096 = vpop.permute.xlu0 %1095
        %1097 = vrot.lane.b32.xlu0 %v948, 64
        %v1098 = vpop.permute.xlu0 %1097
        %1099 = vrot.lane.b32.xlu0 %v838, 64
        %v1100 = vpop.permute.xlu0 %1099
        %1101 = vrot.lane.b32.xlu0 %v893, 96
        %v1102 = vpop.permute.xlu0 %1101
        %1103 = vrot.lane.b32.xlu0 %v896, 96
        %v1104 = vpop.permute.xlu0 %1103
        %1105 = vrot.lane.b32.xlu0 %v899, 96
        %v1106 = vpop.permute.xlu0 %1105
        %1107 = vrot.lane.b32.xlu0 %v902, 96
        %v1108 = vpop.permute.xlu0 %1107
        %1109 = vrot.lane.b32.xlu0 %v905, 96
        %v1110 = vpop.permute.xlu0 %1109
        %1111 = vrot.lane.b32.xlu0 %v908, 96
        %v1112 = vpop.permute.xlu0 %1111
        %1113 = vrot.lane.b32.xlu0 %v911, 96
        %v1114 = vpop.permute.xlu0 %1113
        %1115 = vrot.lane.b32.xlu0 %v914, 96
        %v1116 = vpop.permute.xlu0 %1115
        %1117 = vrot.lane.b32.xlu0 %v917, 96
        %v1118 = vpop.permute.xlu0 %1117
        %1119 = vrot.lane.b32.xlu0 %v920, 96
        %v1120 = vpop.permute.xlu0 %1119
        %1121 = vrot.lane.b32.xlu0 %v923, 96
        %v1122 = vpop.permute.xlu0 %1121
        %1123 = vrot.lane.b32.xlu0 %v926, 96
        %v1124 = vpop.permute.xlu0 %1123
        %1125 = vrot.lane.b32.xlu0 %v939, 96
        %v1126 = vpop.permute.xlu0 %1125
        %1127 = vrot.lane.b32.xlu0 %v942, 96
        %v1128 = vpop.permute.xlu0 %1127
        %1129 = vrot.lane.b32.xlu0 %v884, 96
        %v1130 = vpop.permute.xlu0 %1129
        %v1133 = vsel %vm488, %v792, %v950
        %v1136 = vsel %vm488, %v795, %v952
        %v1139 = vsel %vm488, %v798, %v954
        %v1142 = vsel %vm488, %v801, %v956
        %v1145 = vsel %vm488, %v804, %v958
        %v1148 = vsel %vm488, %v807, %v960
        %v1151 = vsel %vm488, %v810, %v962
        %v1154 = vsel %vm488, %v813, %v964
        %v1157 = vsel %vm488, %v816, %v966
        %v1160 = vsel %vm488, %v819, %v968
        %v1163 = vsel %vm488, %v822, %v970
        %v1166 = vsel %vm488, %v825, %v972
        %v1169 = vsel %vm488, %v828, %v974
        %v1172 = vsel %vm488, %v831, %v976
        %v1175 = vsel %vm488, %v834, %v978
        %vm1176 = vcmask 523264
        %v1178 = vsel %vm1176, %v1133, %v980
        %v1180 = vsel %vm1176, %v1136, %v982
        %v1182 = vsel %vm1176, %v1139, %v984
        %v1184 = vsel %vm1176, %v1142, %v986
        %v1186 = vsel %vm1176, %v1145, %v988
        %v1188 = vsel %vm1176, %v1148, %v990
        %v1190 = vsel %vm1176, %v1151, %v992
        %v1192 = vsel %vm1176, %v1154, %v994
        %v1194 = vsel %vm1176, %v1157, %v996
        %v1196 = vsel %vm1176, %v1160, %v998
        %v1198 = vsel %vm1176, %v1163, %v1000
        %v1200 = vsel %vm1176, %v1166, %v1002
        %v1202 = vsel %vm1176, %v1169, %v1004
        %v1204 = vsel %vm1176, %v1172, %v1006
        %v1206 = vsel %vm1176, %v1175, %v1008
        %vm1207 = vcmask 785408
        %v1209 = vsel %vm1207, %v1178, %v1010
        %v1212 = vsel %vm1207, %v1178, %v1012
        %v1215 = vsel %vm1207, %v1180, %v1014
        %v1218 = vsel %vm1207, %v1182, %v1016
        %v1221 = vsel %vm1207, %v1184, %v1018
        %v1224 = vsel %vm1207, %v1186, %v1020
        %v1227 = vsel %vm1207, %v1188, %v1022
        %v1230 = vsel %vm1207, %v1190, %v1024
        %v1233 = vsel %vm1207, %v1192, %v1026
        %v1236 = vsel %vm1207, %v1194, %v1028
        %v1239 = vsel %vm1207, %v1196, %v1030
        %v1242 = vsel %vm1207, %v1198, %v1032
        %v1245 = vsel %vm1207, %v1200, %v1034
        %v1248 = vsel %vm1207, %v1202, %v1036
        %v1251 = vsel %vm1207, %v1204, %v1038
        %v1254 = vsel %vm1207, %v1206, %v1040
        %v1258 = vsel %vm488, %v887, %v1042
        %v1261 = vsel %vm488, %v890, %v1044
        %v1264 = vsel %vm488, %v893, %v1046
        %v1267 = vsel %vm488, %v896, %v1048
        %v1270 = vsel %vm488, %v899, %v1050
        %v1273 = vsel %vm488, %v902, %v1052
        %v1276 = vsel %vm488, %v905, %v1054
        %v1279 = vsel %vm488, %v908, %v1056
        %v1282 = vsel %vm488, %v911, %v1058
        %v1285 = vsel %vm488, %v914, %v1060
        %v1288 = vsel %vm488, %v917, %v1062
        %v1291 = vsel %vm488, %v920, %v1064
        %v1294 = vsel %vm488, %v923, %v1066
        %v1297 = vsel %vm488, %v926, %v1068
        %v1300 = vsel %vm488, %v939, %v1070
        %v1302 = vsel %vm488, %v942, %v1070
        %v1304 = vsel %vm1176, %v1258, %v1072
        %v1306 = vsel %vm1176, %v1261, %v1074
        %v1308 = vsel %vm1176, %v1264, %v1076
        %v1310 = vsel %vm1176, %v1267, %v1078
        %v1312 = vsel %vm1176, %v1270, %v1080
        %v1314 = vsel %vm1176, %v1273, %v1082
        %v1316 = vsel %vm1176, %v1276, %v1084
        %v1318 = vsel %vm1176, %v1279, %v1086
        %v1320 = vsel %vm1176, %v1282, %v1088
        %v1322 = vsel %vm1176, %v1285, %v1090
        %v1324 = vsel %vm1176, %v1288, %v1092
        %v1326 = vsel %vm1176, %v1291, %v1094
        %v1328 = vsel %vm1176, %v1294, %v1096
        %v1330 = vsel %vm1176, %v1297, %v1098
        %v1332 = vsel %vm1176, %v1300, %v1100
        %v1333 = vsel %vm1176, %v1302, %v1100
        %v1335 = vsel %vm1207, %v1304, %v1102
        %v1338 = vsel %vm1207, %v1306, %v1104
        %v1341 = vsel %vm1207, %v1308, %v1106
        %v1344 = vsel %vm1207, %v1310, %v1108
        %v1347 = vsel %vm1207, %v1312, %v1110
        %v1350 = vsel %vm1207, %v1314, %v1112
        %v1353 = vsel %vm1207, %v1316, %v1114
        %v1356 = vsel %vm1207, %v1318, %v1116
        %v1359 = vsel %vm1207, %v1320, %v1118
        %v1362 = vsel %vm1207, %v1322, %v1120
        %v1365 = vsel %vm1207, %v1324, %v1122
        %v1368 = vsel %vm1207, %v1326, %v1124
        %v1371 = vsel %vm1207, %v1328, %v1126
        %v1374 = vsel %vm1207, %v1330, %v1128
        %v1377 = vsel %vm1207, %v1332, %v1130
        %v1379 = vsel %vm1207, %v1333, %v1130
        %v1381 = vld [vmem:[%s2] sm:$0xf]
        %v1382 = vld [vmem:[%s2 + $0x4] sm:$0xf]
        %v1383 = vld [vmem:[%s2 + $0x8] sm:$0xf]
        %v1384 = vld [vmem:[%s2 + $0xc] sm:$0xf]
        %v1385 = vld [vmem:[%s2 + $0x10] sm:$0xf]
        %v1386 = vld [vmem:[%s2 + $0x14] sm:$0xf]
        %v1387 = vld [vmem:[%s2 + $0x18] sm:$0xf]
        %v1388 = vld [vmem:[%s2 + $0x1c] sm:$0xf]
        %v1389 = vld [vmem:[%s2 + $0x20] sm:$0xf]
        %v1390 = vld [vmem:[%s2 + $0x24] sm:$0xf]
        %v1391 = vld [vmem:[%s2 + $0x28] sm:$0xf]
        %v1392 = vld [vmem:[%s2 + $0x2c] sm:$0xf]
        %v1393 = vld [vmem:[%s2 + $0x30] sm:$0xf]
        %v1394 = vld [vmem:[%s2 + $0x34] sm:$0xf]
        %v1395 = vld [vmem:[%s2 + $0x38] sm:$0xf]
        %v1396 = vld [vmem:[%s2 + $0x3c] sm:$0xf]
        %v1397 = vld [vmem:[%s2 + $0x40] sm:$0xf]
        %v1398 = vld [vmem:[%s2 + $0x44] sm:$0xf]
        %v1399 = vld [vmem:[%s2 + $0x48] sm:$0xf]
        %v1400 = vld [vmem:[%s2 + $0x4c] sm:$0xf]
        %v1401 = vld [vmem:[%s2 + $0x50] sm:$0xf]
        %v1402 = vld [vmem:[%s2 + $0x54] sm:$0xf]
        %v1403 = vld [vmem:[%s2 + $0x58] sm:$0xf]
        %v1404 = vld [vmem:[%s2 + $0x5c] sm:$0xf]
        %v1405 = vld [vmem:[%s2 + $0x60] sm:$0xf]
        %v1406 = vld [vmem:[%s2 + $0x64] sm:$0xf]
        %v1407 = vld [vmem:[%s2 + $0x68] sm:$0xf]
        %v1408 = vld [vmem:[%s2 + $0x6c] sm:$0xf]
        %v1409 = vld [vmem:[%s2 + $0x70] sm:$0xf]
        %v1410 = vld [vmem:[%s2 + $0x74] sm:$0xf]
        %v1411 = vld [vmem:[%s2 + $0x78] sm:$0xf]
        %v1412 = vld [vmem:[%s2 + $0x7c] sm:$0xf]
        %v1445 = vunpack.c.l.b16 %v1381
        %v1446 = vunpack.c.l.b16 %v1382
        %v1447 = vunpack.c.l.b16 %v1383
        %v1448 = vunpack.c.l.b16 %v1384
        %v1449 = vunpack.c.l.b16 %v1385
        %v1450 = vunpack.c.l.b16 %v1386
        %v1451 = vunpack.c.l.b16 %v1387
        %v1452 = vunpack.c.l.b16 %v1388
        %v1453 = vunpack.c.l.b16 %v1389
        %v1454 = vunpack.c.l.b16 %v1390
        %v1455 = vunpack.c.l.b16 %v1391
        %v1456 = vunpack.c.l.b16 %v1392
        %v1457 = vunpack.c.l.b16 %v1393
        %v1458 = vunpack.c.l.b16 %v1394
        %v1459 = vunpack.c.l.b16 %v1395
        %v1460 = vunpack.c.l.b16 %v1396
        %v1461 = vunpack.c.l.b16 %v1397
        %v1462 = vunpack.c.l.b16 %v1398
        %v1463 = vunpack.c.l.b16 %v1399
        %v1464 = vunpack.c.l.b16 %v1400
        %v1465 = vunpack.c.l.b16 %v1401
        %v1466 = vunpack.c.l.b16 %v1402
        %v1467 = vunpack.c.l.b16 %v1403
        %v1468 = vunpack.c.l.b16 %v1404
        %v1469 = vunpack.c.l.b16 %v1405
        %v1470 = vunpack.c.l.b16 %v1406
        %v1471 = vunpack.c.l.b16 %v1407
        %v1472 = vunpack.c.l.b16 %v1408
        %v1473 = vunpack.c.l.b16 %v1409
        %v1474 = vunpack.c.l.b16 %v1410
        %v1475 = vunpack.c.l.b16 %v1411
        %v1476 = vunpack.c.l.b16 %v1412
        %v1477 = vpack.c.b16 %v1446, %v1445
        %v1478 = vpack.c.b16 %v1448, %v1447
        %v1479 = vpack.c.b16 %v1450, %v1449
        %v1480 = vpack.c.b16 %v1452, %v1451
        %v1481 = vpack.c.b16 %v1454, %v1453
        %v1482 = vpack.c.b16 %v1456, %v1455
        %v1483 = vpack.c.b16 %v1458, %v1457
        %v1484 = vpack.c.b16 %v1460, %v1459
        %v1485 = vpack.c.b16 %v1462, %v1461
        %v1486 = vpack.c.b16 %v1464, %v1463
        %v1487 = vpack.c.b16 %v1466, %v1465
        %v1488 = vpack.c.b16 %v1468, %v1467
        %v1489 = vpack.c.b16 %v1470, %v1469
        %v1490 = vpack.c.b16 %v1472, %v1471
        %v1491 = vpack.c.b16 %v1474, %v1473
        %v1492 = vpack.c.b16 %v1476, %v1475
        %1509 = vmatpush.bf16.msra.mxu0 %v1484
        %1510 = vmatpush.bf16.msra.mxu0 %v1483
        %1511 = vmatpush.bf16.msra.mxu0 %v1482
        %1512 = vmatpush.bf16.msra.mxu0 %v1481
        %1513 = vmatpush.bf16.msra.mxu0 %v1480
        %1514 = vmatpush.bf16.msra.mxu0 %v1479
        %1515 = vmatpush.bf16.msra.mxu0 %v1478
        %1516 = vmatpush.bf16.msra.mxu0 %v1477
        %1517 = vmatmul.bf16.gmra.mxu0 %v1209
        %v1518 = vpop.f32.mrf.mxu0
        %v1519 = vadd.f32 0.0, %v1518
        %v1520 = vpop.f32.mrf.mxu0
        %v1521 = vadd.f32 0.0, %v1520
        %1522 = vmatmul.bf16.gmra.mxu0 %v1212
        %v1523 = vpop.f32.mrf.mxu0
        %v1524 = vadd.f32 0.0, %v1523
        %v1525 = vpop.f32.mrf.mxu0
        %v1526 = vadd.f32 0.0, %v1525
        %1527 = vmatmul.bf16.gmra.mxu0 %v1215
        %v1528 = vpop.f32.mrf.mxu0
        %v1529 = vadd.f32 0.0, %v1528
        %v1530 = vpop.f32.mrf.mxu0
        %v1531 = vadd.f32 0.0, %v1530
        %1532 = vmatmul.bf16.gmra.mxu0 %v1218
        %v1533 = vpop.f32.mrf.mxu0
        %v1534 = vadd.f32 0.0, %v1533
        %v1535 = vpop.f32.mrf.mxu0
        %v1536 = vadd.f32 0.0, %v1535
        %1537 = vmatmul.bf16.gmra.mxu0 %v1221
        %v1538 = vpop.f32.mrf.mxu0
        %v1539 = vadd.f32 0.0, %v1538
        %v1540 = vpop.f32.mrf.mxu0
        %v1541 = vadd.f32 0.0, %v1540
        %1542 = vmatmul.bf16.gmra.mxu0 %v1224
        %v1543 = vpop.f32.mrf.mxu0
        %v1544 = vadd.f32 0.0, %v1543
        %v1545 = vpop.f32.mrf.mxu0
        %v1546 = vadd.f32 0.0, %v1545
        %1547 = vmatmul.bf16.gmra.mxu0 %v1227
        %v1548 = vpop.f32.mrf.mxu0
        %v1549 = vadd.f32 0.0, %v1548
        %v1550 = vpop.f32.mrf.mxu0
        %v1551 = vadd.f32 0.0, %v1550
        %1552 = vmatmul.bf16.gmra.mxu0 %v1230
        %v1553 = vpop.f32.mrf.mxu0
        %v1554 = vadd.f32 0.0, %v1553
        %v1555 = vpop.f32.mrf.mxu0
        %v1556 = vadd.f32 0.0, %v1555
        %1557 = vmatmul.bf16.gmra.mxu0 %v1233
        %v1558 = vpop.f32.mrf.mxu0
        %v1559 = vadd.f32 0.0, %v1558
        %v1560 = vpop.f32.mrf.mxu0
        %v1561 = vadd.f32 0.0, %v1560
        %1562 = vmatmul.bf16.gmra.mxu0 %v1236
        %v1563 = vpop.f32.mrf.mxu0
        %v1564 = vadd.f32 0.0, %v1563
        %v1565 = vpop.f32.mrf.mxu0
        %v1566 = vadd.f32 0.0, %v1565
        %1567 = vmatmul.bf16.gmra.mxu0 %v1239
        %v1568 = vpop.f32.mrf.mxu0
        %v1569 = vadd.f32 0.0, %v1568
        %v1570 = vpop.f32.mrf.mxu0
        %v1571 = vadd.f32 0.0, %v1570
        %1572 = vmatmul.bf16.gmra.mxu0 %v1242
        %v1573 = vpop.f32.mrf.mxu0
        %v1574 = vadd.f32 0.0, %v1573
        %v1575 = vpop.f32.mrf.mxu0
        %v1576 = vadd.f32 0.0, %v1575
        %1577 = vmatmul.bf16.gmra.mxu0 %v1245
        %v1578 = vpop.f32.mrf.mxu0
        %v1579 = vadd.f32 0.0, %v1578
        %v1580 = vpop.f32.mrf.mxu0
        %v1581 = vadd.f32 0.0, %v1580
        %1582 = vmatmul.bf16.gmra.mxu0 %v1248
        %v1583 = vpop.f32.mrf.mxu0
        %v1584 = vadd.f32 0.0, %v1583
        %v1585 = vpop.f32.mrf.mxu0
        %v1586 = vadd.f32 0.0, %v1585
        %1587 = vmatmul.bf16.gmra.mxu0 %v1251
        %v1588 = vpop.f32.mrf.mxu0
        %v1589 = vadd.f32 0.0, %v1588
        %v1590 = vpop.f32.mrf.mxu0
        %v1591 = vadd.f32 0.0, %v1590
        %1592 = vmatmul.bf16.gmra.mxu0 %v1254
        %v1593 = vpop.f32.mrf.mxu0
        %v1594 = vadd.f32 0.0, %v1593
        %v1595 = vpop.f32.mrf.mxu0
        %v1596 = vadd.f32 0.0, %v1595
        %1597 = vdwg.mxu0
        %1598 = vmatpush.bf16.msra.mxu0 %v1492
        %1599 = vmatpush.bf16.msra.mxu0 %v1491
        %1600 = vmatpush.bf16.msra.mxu0 %v1490
        %1601 = vmatpush.bf16.msra.mxu0 %v1489
        %1602 = vmatpush.bf16.msra.mxu0 %v1488
        %1603 = vmatpush.bf16.msra.mxu0 %v1487
        %1604 = vmatpush.bf16.msra.mxu0 %v1486
        %1605 = vmatpush.bf16.msra.mxu0 %v1485
        %1606 = vmatmul.bf16.gmra.mxu0 %v1335
        %v1607 = vpop.f32.mrf.mxu0
        %v1608 = vadd.f32 %v1519, %v1607
        %v1609 = vpop.f32.mrf.mxu0
        %v1610 = vadd.f32 %v1521, %v1609
        %1611 = vmatmul.bf16.gmra.mxu0 %v1338
        %v1612 = vpop.f32.mrf.mxu0
        %v1613 = vadd.f32 %v1524, %v1612
        %v1614 = vpop.f32.mrf.mxu0
        %v1615 = vadd.f32 %v1526, %v1614
        %1616 = vmatmul.bf16.gmra.mxu0 %v1341
        %v1617 = vpop.f32.mrf.mxu0
        %v1618 = vadd.f32 %v1529, %v1617
        %v1619 = vpop.f32.mrf.mxu0
        %v1620 = vadd.f32 %v1531, %v1619
        %1621 = vmatmul.bf16.gmra.mxu0 %v1344
        %v1622 = vpop.f32.mrf.mxu0
        %v1623 = vadd.f32 %v1534, %v1622
        %v1624 = vpop.f32.mrf.mxu0
        %v1625 = vadd.f32 %v1536, %v1624
        %1626 = vmatmul.bf16.gmra.mxu0 %v1347
        %v1627 = vpop.f32.mrf.mxu0
        %v1628 = vadd.f32 %v1539, %v1627
        %v1629 = vpop.f32.mrf.mxu0
        %v1630 = vadd.f32 %v1541, %v1629
        %1631 = vmatmul.bf16.gmra.mxu0 %v1350
        %v1632 = vpop.f32.mrf.mxu0
        %v1633 = vadd.f32 %v1544, %v1632
        %v1634 = vpop.f32.mrf.mxu0
        %v1635 = vadd.f32 %v1546, %v1634
        %1636 = vmatmul.bf16.gmra.mxu0 %v1353
        %v1637 = vpop.f32.mrf.mxu0
        %v1638 = vadd.f32 %v1549, %v1637
        %v1639 = vpop.f32.mrf.mxu0
        %v1640 = vadd.f32 %v1551, %v1639
        %1641 = vmatmul.bf16.gmra.mxu0 %v1356
        %v1642 = vpop.f32.mrf.mxu0
        %v1643 = vadd.f32 %v1554, %v1642
        %v1644 = vpop.f32.mrf.mxu0
        %v1645 = vadd.f32 %v1556, %v1644
        %1646 = vmatmul.bf16.gmra.mxu0 %v1359
        %v1647 = vpop.f32.mrf.mxu0
        %v1648 = vadd.f32 %v1559, %v1647
        %v1649 = vpop.f32.mrf.mxu0
        %v1650 = vadd.f32 %v1561, %v1649
        %1651 = vmatmul.bf16.gmra.mxu0 %v1362
        %v1652 = vpop.f32.mrf.mxu0
        %v1653 = vadd.f32 %v1564, %v1652
        %v1654 = vpop.f32.mrf.mxu0
        %v1655 = vadd.f32 %v1566, %v1654
        %1656 = vmatmul.bf16.gmra.mxu0 %v1365
        %v1657 = vpop.f32.mrf.mxu0
        %v1658 = vadd.f32 %v1569, %v1657
        %v1659 = vpop.f32.mrf.mxu0
        %v1660 = vadd.f32 %v1571, %v1659
        %1661 = vmatmul.bf16.gmra.mxu0 %v1368
        %v1662 = vpop.f32.mrf.mxu0
        %v1663 = vadd.f32 %v1574, %v1662
        %v1664 = vpop.f32.mrf.mxu0
        %v1665 = vadd.f32 %v1576, %v1664
        %1666 = vmatmul.bf16.gmra.mxu0 %v1371
        %v1667 = vpop.f32.mrf.mxu0
        %v1668 = vadd.f32 %v1579, %v1667
        %v1669 = vpop.f32.mrf.mxu0
        %v1670 = vadd.f32 %v1581, %v1669
        %1671 = vmatmul.bf16.gmra.mxu0 %v1374
        %v1672 = vpop.f32.mrf.mxu0
        %v1673 = vadd.f32 %v1584, %v1672
        %v1674 = vpop.f32.mrf.mxu0
        %v1675 = vadd.f32 %v1586, %v1674
        %1676 = vmatmul.bf16.gmra.mxu0 %v1377
        %v1677 = vpop.f32.mrf.mxu0
        %v1678 = vadd.f32 %v1589, %v1677
        %v1679 = vpop.f32.mrf.mxu0
        %v1680 = vadd.f32 %v1591, %v1679
        %1681 = vmatmul.bf16.gmra.mxu0 %v1379
        %v1682 = vpop.f32.mrf.mxu0
        %v1683 = vadd.f32 %v1594, %v1682
        %v1684 = vpop.f32.mrf.mxu0
        %v1685 = vadd.f32 %v1596, %v1684
        %1686 = vdwg.mxu0
        %1719 = vrot.lane.b32.xlu0 %v1608, 32
        %v1720 = vpop.permute.xlu0 %1719
        %1721 = vrot.lane.b32.xlu0 %v1610, 32
        %v1722 = vpop.permute.xlu0 %1721
        %1723 = vrot.lane.b32.xlu0 %v1613, 32
        %v1724 = vpop.permute.xlu0 %1723
        %1725 = vrot.lane.b32.xlu0 %v1615, 32
        %v1726 = vpop.permute.xlu0 %1725
        %1727 = vrot.lane.b32.xlu0 %v1618, 32
        %v1728 = vpop.permute.xlu0 %1727
        %1729 = vrot.lane.b32.xlu0 %v1620, 32
        %v1730 = vpop.permute.xlu0 %1729
        %1731 = vrot.lane.b32.xlu0 %v1623, 32
        %v1732 = vpop.permute.xlu0 %1731
        %1733 = vrot.lane.b32.xlu0 %v1625, 32
        %v1734 = vpop.permute.xlu0 %1733
        %1735 = vrot.lane.b32.xlu0 %v1628, 32
        %v1736 = vpop.permute.xlu0 %1735
        %1737 = vrot.lane.b32.xlu0 %v1630, 32
        %v1738 = vpop.permute.xlu0 %1737
        %1739 = vrot.lane.b32.xlu0 %v1633, 32
        %v1740 = vpop.permute.xlu0 %1739
        %1741 = vrot.lane.b32.xlu0 %v1635, 32
        %v1742 = vpop.permute.xlu0 %1741
        %1743 = vrot.lane.b32.xlu0 %v1638, 32
        %v1744 = vpop.permute.xlu0 %1743
        %1745 = vrot.lane.b32.xlu0 %v1640, 32
        %v1746 = vpop.permute.xlu0 %1745
        %1747 = vrot.lane.b32.xlu0 %v1643, 32
        %v1748 = vpop.permute.xlu0 %1747
        %1749 = vrot.lane.b32.xlu0 %v1645, 32
        %v1750 = vpop.permute.xlu0 %1749
        %1751 = vrot.lane.b32.xlu0 %v1648, 32
        %v1752 = vpop.permute.xlu0 %1751
        %1753 = vrot.lane.b32.xlu0 %v1650, 32
        %v1754 = vpop.permute.xlu0 %1753
        %1755 = vrot.lane.b32.xlu0 %v1653, 32
        %v1756 = vpop.permute.xlu0 %1755
        %1757 = vrot.lane.b32.xlu0 %v1655, 32
        %v1758 = vpop.permute.xlu0 %1757
        %1759 = vrot.lane.b32.xlu0 %v1658, 32
        %v1760 = vpop.permute.xlu0 %1759
        %1761 = vrot.lane.b32.xlu0 %v1660, 32
        %v1762 = vpop.permute.xlu0 %1761
        %1763 = vrot.lane.b32.xlu0 %v1663, 32
        %v1764 = vpop.permute.xlu0 %1763
        %1765 = vrot.lane.b32.xlu0 %v1665, 32
        %v1766 = vpop.permute.xlu0 %1765
        %1767 = vrot.lane.b32.xlu0 %v1668, 32
        %v1768 = vpop.permute.xlu0 %1767
        %1769 = vrot.lane.b32.xlu0 %v1670, 32
        %v1770 = vpop.permute.xlu0 %1769
        %1771 = vrot.lane.b32.xlu0 %v1673, 32
        %v1772 = vpop.permute.xlu0 %1771
        %1773 = vrot.lane.b32.xlu0 %v1675, 32
        %v1774 = vpop.permute.xlu0 %1773
        %1775 = vrot.lane.b32.xlu0 %v1678, 32
        %v1776 = vpop.permute.xlu0 %1775
        %1777 = vrot.lane.b32.xlu0 %v1680, 32
        %v1778 = vpop.permute.xlu0 %1777
        %1779 = vrot.lane.b32.xlu0 %v1683, 32
        %v1780 = vpop.permute.xlu0 %1779
        %1781 = vrot.lane.b32.xlu0 %v1685, 32
        %v1782 = vpop.permute.xlu0 %1781
        %v1815 = vadd.f32 %v547, %v1720
        %v1816 = vadd.f32 %v549, %v1722
        %v1817 = vadd.f32 %v552, %v1724
        %v1818 = vadd.f32 %v554, %v1726
        %v1819 = vadd.f32 %v557, %v1728
        %v1820 = vadd.f32 %v559, %v1730
        %v1821 = vadd.f32 %v562, %v1732
        %v1822 = vadd.f32 %v564, %v1734
        %v1823 = vadd.f32 %v567, %v1736
        %v1824 = vadd.f32 %v569, %v1738
        %v1825 = vadd.f32 %v572, %v1740
        %v1826 = vadd.f32 %v574, %v1742
        %v1827 = vadd.f32 %v577, %v1744
        %v1828 = vadd.f32 %v579, %v1746
        %v1829 = vadd.f32 %v582, %v1748
        %v1830 = vadd.f32 %v584, %v1750
        %v1831 = vadd.f32 %v587, %v1752
        %v1832 = vadd.f32 %v589, %v1754
        %v1833 = vadd.f32 %v592, %v1756
        %v1834 = vadd.f32 %v594, %v1758
        %v1835 = vadd.f32 %v597, %v1760
        %v1836 = vadd.f32 %v599, %v1762
        %v1837 = vadd.f32 %v602, %v1764
        %v1838 = vadd.f32 %v604, %v1766
        %v1839 = vadd.f32 %v607, %v1768
        %v1840 = vadd.f32 %v609, %v1770
        %v1841 = vadd.f32 %v612, %v1772
        %v1842 = vadd.f32 %v614, %v1774
        %v1843 = vadd.f32 %v617, %v1776
        %v1844 = vadd.f32 %v619, %v1778
        %v1845 = vadd.f32 %v622, %v1780
        %v1846 = vadd.f32 %v624, %v1782
        %v1847 = vld [vmem:[%s4] sm:$0x1]
        %v1849 = vperm.slane %v1847, 0
        %v1851 = vadd.f32 %v1815, %v1849
        %v1852 = vadd.f32 %v1816, %v1849
        %v1853 = vadd.f32 %v1817, %v1849
        %v1854 = vadd.f32 %v1818, %v1849
        %v1855 = vadd.f32 %v1819, %v1849
        %v1856 = vadd.f32 %v1820, %v1849
        %v1857 = vadd.f32 %v1821, %v1849
        %v1858 = vadd.f32 %v1822, %v1849
        %v1859 = vadd.f32 %v1823, %v1849
        %v1860 = vadd.f32 %v1824, %v1849
        %v1861 = vadd.f32 %v1825, %v1849
        %v1862 = vadd.f32 %v1826, %v1849
        %v1863 = vadd.f32 %v1827, %v1849
        %v1864 = vadd.f32 %v1828, %v1849
        %v1865 = vadd.f32 %v1829, %v1849
        %v1866 = vadd.f32 %v1830, %v1849
        %v1867 = vadd.f32 %v1831, %v1849
        %v1868 = vadd.f32 %v1832, %v1849
        %v1869 = vadd.f32 %v1833, %v1849
        %v1870 = vadd.f32 %v1834, %v1849
        %v1871 = vadd.f32 %v1835, %v1849
        %v1872 = vadd.f32 %v1836, %v1849
        %v1873 = vadd.f32 %v1837, %v1849
        %v1874 = vadd.f32 %v1838, %v1849
        %v1875 = vadd.f32 %v1839, %v1849
        %v1876 = vadd.f32 %v1840, %v1849
        %v1877 = vadd.f32 %v1841, %v1849
        %v1878 = vadd.f32 %v1842, %v1849
        %v1879 = vadd.f32 %v1843, %v1849
        %v1880 = vadd.f32 %v1844, %v1849
        %v1881 = vadd.f32 %v1845, %v1849
        %v1882 = vadd.f32 %v1846, %v1849
        %v1883 = vmax.f32 %v1851, 0.0
        %v1884 = vmax.f32 %v1852, 0.0
        %v1885 = vmax.f32 %v1853, 0.0
        %v1886 = vmax.f32 %v1854, 0.0
        %v1887 = vmax.f32 %v1855, 0.0
        %v1888 = vmax.f32 %v1856, 0.0
        %v1889 = vmax.f32 %v1857, 0.0
        %v1890 = vmax.f32 %v1858, 0.0
        %v1891 = vmax.f32 %v1859, 0.0
        %v1892 = vmax.f32 %v1860, 0.0
        %v1893 = vmax.f32 %v1861, 0.0
        %v1894 = vmax.f32 %v1862, 0.0
        %v1895 = vmax.f32 %v1863, 0.0
        %v1896 = vmax.f32 %v1864, 0.0
        %v1897 = vmax.f32 %v1865, 0.0
        %v1898 = vmax.f32 %v1866, 0.0
        %v1899 = vmax.f32 %v1867, 0.0
        %v1900 = vmax.f32 %v1868, 0.0
        %v1901 = vmax.f32 %v1869, 0.0
        %v1902 = vmax.f32 %v1870, 0.0
        %v1903 = vmax.f32 %v1871, 0.0
        %v1904 = vmax.f32 %v1872, 0.0
        %v1905 = vmax.f32 %v1873, 0.0
        %v1906 = vmax.f32 %v1874, 0.0
        %v1907 = vmax.f32 %v1875, 0.0
        %v1908 = vmax.f32 %v1876, 0.0
        %v1909 = vmax.f32 %v1877, 0.0
        %v1910 = vmax.f32 %v1878, 0.0
        %v1911 = vmax.f32 %v1879, 0.0
        %v1912 = vmax.f32 %v1880, 0.0
        %v1913 = vmax.f32 %v1881, 0.0
        %v1914 = vmax.f32 %v1882, 0.0
        %v1915 = vpack.c.bf16 %v1883, %v1883
        %v1916 = vpack.c.bf16 %v1884, %v1884
        %v1917 = vpack.c.bf16 %v1885, %v1885
        %v1918 = vpack.c.bf16 %v1886, %v1886
        %v1919 = vpack.c.bf16 %v1887, %v1887
        %v1920 = vpack.c.bf16 %v1888, %v1888
        %v1921 = vpack.c.bf16 %v1889, %v1889
        %v1922 = vpack.c.bf16 %v1890, %v1890
        %v1923 = vpack.c.bf16 %v1891, %v1891
        %v1924 = vpack.c.bf16 %v1892, %v1892
        %v1925 = vpack.c.bf16 %v1893, %v1893
        %v1926 = vpack.c.bf16 %v1894, %v1894
        %v1927 = vpack.c.bf16 %v1895, %v1895
        %v1928 = vpack.c.bf16 %v1896, %v1896
        %v1929 = vpack.c.bf16 %v1897, %v1897
        %v1930 = vpack.c.bf16 %v1898, %v1898
        %v1931 = vpack.c.bf16 %v1899, %v1899
        %v1932 = vpack.c.bf16 %v1900, %v1900
        %v1933 = vpack.c.bf16 %v1901, %v1901
        %v1934 = vpack.c.bf16 %v1902, %v1902
        %v1935 = vpack.c.bf16 %v1903, %v1903
        %v1936 = vpack.c.bf16 %v1904, %v1904
        %v1937 = vpack.c.bf16 %v1905, %v1905
        %v1938 = vpack.c.bf16 %v1906, %v1906
        %v1939 = vpack.c.bf16 %v1907, %v1907
        %v1940 = vpack.c.bf16 %v1908, %v1908
        %v1941 = vpack.c.bf16 %v1909, %v1909
        %v1942 = vpack.c.bf16 %v1910, %v1910
        %v1943 = vpack.c.bf16 %v1911, %v1911
        %v1944 = vpack.c.bf16 %v1912, %v1912
        %v1945 = vpack.c.bf16 %v1913, %v1913
        %v1946 = vpack.c.bf16 %v1914, %v1914
        %vm1947 = vcmask 519424
        %1948 = vst.msk [vmem:[%s275] sm:$0xf] %vm1947, %v1915
        %1949 = vst.msk [vmem:[%s275 + $0x4] sm:$0xf] %vm1947, %v1916
        %1950 = vst.msk [vmem:[%s275 + $0x8] sm:$0xf] %vm1947, %v1917
        %1951 = vst.msk [vmem:[%s275 + $0xc] sm:$0xf] %vm1947, %v1918
        %1952 = vst.msk [vmem:[%s275 + $0x10] sm:$0xf] %vm1947, %v1919
        %1953 = vst.msk [vmem:[%s275 + $0x14] sm:$0xf] %vm1947, %v1920
        %1954 = vst.msk [vmem:[%s275 + $0x18] sm:$0xf] %vm1947, %v1921
        %1955 = vst.msk [vmem:[%s275 + $0x1c] sm:$0xf] %vm1947, %v1922
        %1956 = vst.msk [vmem:[%s275 + $0x20] sm:$0xf] %vm1947, %v1923
        %1957 = vst.msk [vmem:[%s275 + $0x24] sm:$0xf] %vm1947, %v1924
        %1958 = vst.msk [vmem:[%s275 + $0x28] sm:$0xf] %vm1947, %v1925
        %1959 = vst.msk [vmem:[%s275 + $0x2c] sm:$0xf] %vm1947, %v1926
        %1960 = vst.msk [vmem:[%s275 + $0x30] sm:$0xf] %vm1947, %v1927
        %1961 = vst.msk [vmem:[%s275 + $0x34] sm:$0xf] %vm1947, %v1928
        %1962 = vst.msk [vmem:[%s275 + $0x38] sm:$0xf] %vm1947, %v1929
        %1963 = vst.msk [vmem:[%s275 + $0x3c] sm:$0xf] %vm1947, %v1930
        %1964 = vst.msk [vmem:[%s275 + $0x40] sm:$0xf] %vm1947, %v1931
        %1965 = vst.msk [vmem:[%s275 + $0x44] sm:$0xf] %vm1947, %v1932
        %1966 = vst.msk [vmem:[%s275 + $0x48] sm:$0xf] %vm1947, %v1933
        %1967 = vst.msk [vmem:[%s275 + $0x4c] sm:$0xf] %vm1947, %v1934
        %1968 = vst.msk [vmem:[%s275 + $0x50] sm:$0xf] %vm1947, %v1935
        %1969 = vst.msk [vmem:[%s275 + $0x54] sm:$0xf] %vm1947, %v1936
        %1970 = vst.msk [vmem:[%s275 + $0x58] sm:$0xf] %vm1947, %v1937
        %1971 = vst.msk [vmem:[%s275 + $0x5c] sm:$0xf] %vm1947, %v1938
        %1972 = vst.msk [vmem:[%s275 + $0x60] sm:$0xf] %vm1947, %v1939
        %1973 = vst.msk [vmem:[%s275 + $0x64] sm:$0xf] %vm1947, %v1940
        %1974 = vst.msk [vmem:[%s275 + $0x68] sm:$0xf] %vm1947, %v1941
        %1975 = vst.msk [vmem:[%s275 + $0x6c] sm:$0xf] %vm1947, %v1942
        %1976 = vst.msk [vmem:[%s275 + $0x70] sm:$0xf] %vm1947, %v1943
        %1977 = vst.msk [vmem:[%s275 + $0x74] sm:$0xf] %vm1947, %v1944
        %1978 = vst.msk [vmem:[%s275 + $0x78] sm:$0xf] %vm1947, %v1945
        %1979 = vst.msk [vmem:[%s275 + $0x7c] sm:$0xf] %vm1947, %v1946
        %vm1980 = vcmask 1046528
        %v1981 = vrot.slane %v422, 1
        %v1982 = vrot.slane %v455, 1
        %v1983 = vsel %vm1980, %v1981, %v1982
        %v1984 = vrot.slane %v424, 1
        %v1985 = vrot.slane %v456, 1
        %v1986 = vsel %vm1980, %v1984, %v1985
        %v1987 = vrot.slane %v426, 1
        %v1988 = vrot.slane %v457, 1
        %v1989 = vsel %vm1980, %v1987, %v1988
        %v1990 = vrot.slane %v428, 1
        %v1991 = vrot.slane %v458, 1
        %v1992 = vsel %vm1980, %v1990, %v1991
        %v1993 = vrot.slane %v430, 1
        %v1994 = vrot.slane %v459, 1
        %v1995 = vsel %vm1980, %v1993, %v1994
        %v1996 = vrot.slane %v432, 1
        %v1997 = vrot.slane %v460, 1
        %v1998 = vsel %vm1980, %v1996, %v1997
        %v1999 = vrot.slane %v434, 1
        %v2000 = vrot.slane %v461, 1
        %v2001 = vsel %vm1980, %v1999, %v2000
        %v2002 = vrot.slane %v436, 1
        %v2003 = vrot.slane %v462, 1
        %v2004 = vsel %vm1980, %v2002, %v2003
        %v2005 = vrot.slane %v438, 1
        %v2006 = vrot.slane %v463, 1
        %v2007 = vsel %vm1980, %v2005, %v2006
        %v2008 = vrot.slane %v440, 1
        %v2009 = vrot.slane %v464, 1
        %v2010 = vsel %vm1980, %v2008, %v2009
        %v2011 = vrot.slane %v442, 1
        %v2012 = vrot.slane %v465, 1
        %v2013 = vsel %vm1980, %v2011, %v2012
        %v2014 = vrot.slane %v444, 1
        %v2015 = vrot.slane %v466, 1
        %v2016 = vsel %vm1980, %v2014, %v2015
        %v2017 = vrot.slane %v446, 1
        %v2018 = vrot.slane %v467, 1
        %v2019 = vsel %vm1980, %v2017, %v2018
        %vm2020 = vcmask 1042432
        %v2021 = vrot.slane %v422, 5
        %v2022 = vrot.slane %v455, 5
        %v2023 = vsel %vm2020, %v2021, %v2022
        %v2024 = vrot.slane %v424, 5
        %v2025 = vrot.slane %v456, 5
        %v2026 = vsel %vm2020, %v2024, %v2025
        %v2027 = vrot.slane %v426, 5
        %v2028 = vrot.slane %v457, 5
        %v2029 = vsel %vm2020, %v2027, %v2028
        %v2030 = vrot.slane %v428, 5
        %v2031 = vrot.slane %v458, 5
        %v2032 = vsel %vm2020, %v2030, %v2031
        %v2033 = vrot.slane %v430, 5
        %v2034 = vrot.slane %v459, 5
        %v2035 = vsel %vm2020, %v2033, %v2034
        %v2036 = vrot.slane %v432, 5
        %v2037 = vrot.slane %v460, 5
        %v2038 = vsel %vm2020, %v2036, %v2037
        %v2039 = vrot.slane %v434, 5
        %v2040 = vrot.slane %v461, 5
        %v2041 = vsel %vm2020, %v2039, %v2040
        %v2042 = vrot.slane %v436, 5
        %v2043 = vrot.slane %v462, 5
        %v2044 = vsel %vm2020, %v2042, %v2043
        %v2045 = vrot.slane %v438, 5
        %v2046 = vrot.slane %v463, 5
        %v2047 = vsel %vm2020, %v2045, %v2046
        %v2048 = vrot.slane %v440, 5
        %v2049 = vrot.slane %v464, 5
        %v2050 = vsel %vm2020, %v2048, %v2049
        %v2051 = vrot.slane %v442, 5
        %v2052 = vrot.slane %v465, 5
        %v2053 = vsel %vm2020, %v2051, %v2052
        %v2054 = vrot.slane %v444, 5
        %v2055 = vrot.slane %v466, 5
        %v2056 = vsel %vm2020, %v2054, %v2055
        %v2057 = vrot.slane %v446, 5
        %v2058 = vrot.slane %v467, 5
        %v2059 = vsel %vm2020, %v2057, %v2058
        %v2060 = vrot.slane %v448, 1
        %v2061 = vrot.slane %v468, 1
        %v2062 = vsel %vm1980, %v2060, %v2061
        %v2063 = vrot.slane %v450, 1
        %v2064 = vrot.slane %v469, 1
        %v2065 = vsel %vm1980, %v2063, %v2064
        %v2066 = vrot.slane %v452, 1
        %v2067 = vrot.slane %v470, 1
        %v2068 = vsel %vm1980, %v2066, %v2067
        %v2069 = vrot.slane %v454, 1
        %v2070 = vrot.slane %v471, 1
        %v2071 = vsel %vm1980, %v2069, %v2070
        %v2072 = vrot.slane %v448, 5
        %v2073 = vrot.slane %v468, 5
        %v2074 = vsel %vm2020, %v2072, %v2073
        %v2075 = vrot.slane %v450, 5
        %v2076 = vrot.slane %v469, 5
        %v2077 = vsel %vm2020, %v2075, %v2076
        %v2078 = vrot.slane %v452, 5
        %v2079 = vrot.slane %v470, 5
        %v2080 = vsel %vm2020, %v2078, %v2079
        %v2081 = vrot.slane %v454, 5
        %v2082 = vrot.slane %v471, 5
        %v2083 = vsel %vm2020, %v2081, %v2082
        %2084 = vrot.lane.b32.xlu0 %v2023, 64
        %v2085 = vpop.permute.xlu0 %2084
        %2086 = vrot.lane.b32.xlu0 %v2026, 64
        %v2087 = vpop.permute.xlu0 %2086
        %2088 = vrot.lane.b32.xlu0 %v2029, 64
        %v2089 = vpop.permute.xlu0 %2088
        %2090 = vrot.lane.b32.xlu0 %v2032, 64
        %v2091 = vpop.permute.xlu0 %2090
        %2092 = vrot.lane.b32.xlu0 %v2035, 64
        %v2093 = vpop.permute.xlu0 %2092
        %2094 = vrot.lane.b32.xlu0 %v2038, 64
        %v2095 = vpop.permute.xlu0 %2094
        %2096 = vrot.lane.b32.xlu0 %v2041, 64
        %v2097 = vpop.permute.xlu0 %2096
        %2098 = vrot.lane.b32.xlu0 %v2044, 64
        %v2099 = vpop.permute.xlu0 %2098
        %2100 = vrot.lane.b32.xlu0 %v2047, 64
        %v2101 = vpop.permute.xlu0 %2100
        %2102 = vrot.lane.b32.xlu0 %v2050, 64
        %v2103 = vpop.permute.xlu0 %2102
        %2104 = vrot.lane.b32.xlu0 %v2053, 64
        %v2105 = vpop.permute.xlu0 %2104
        %2106 = vrot.lane.b32.xlu0 %v2056, 64
        %v2107 = vpop.permute.xlu0 %2106
        %2108 = vrot.lane.b32.xlu0 %v2059, 64
        %v2109 = vpop.permute.xlu0 %2108
        %2110 = vrot.lane.b32.xlu0 %v1986, 96
        %v2111 = vpop.permute.xlu0 %2110
        %2112 = vrot.lane.b32.xlu0 %v1989, 96
        %v2113 = vpop.permute.xlu0 %2112
        %2114 = vrot.lane.b32.xlu0 %v1992, 96
        %v2115 = vpop.permute.xlu0 %2114
        %2116 = vrot.lane.b32.xlu0 %v1995, 96
        %v2117 = vpop.permute.xlu0 %2116
        %2118 = vrot.lane.b32.xlu0 %v1998, 96
        %v2119 = vpop.permute.xlu0 %2118
        %2120 = vrot.lane.b32.xlu0 %v2001, 96
        %v2121 = vpop.permute.xlu0 %2120
        %2122 = vrot.lane.b32.xlu0 %v2004, 96
        %v2123 = vpop.permute.xlu0 %2122
        %2124 = vrot.lane.b32.xlu0 %v2007, 96
        %v2125 = vpop.permute.xlu0 %2124
        %2126 = vrot.lane.b32.xlu0 %v2010, 96
        %v2127 = vpop.permute.xlu0 %2126
        %2128 = vrot.lane.b32.xlu0 %v2013, 96
        %v2129 = vpop.permute.xlu0 %2128
        %2130 = vrot.lane.b32.xlu0 %v2016, 96
        %v2131 = vpop.permute.xlu0 %2130
        %2132 = vrot.lane.b32.xlu0 %v2019, 96
        %v2133 = vpop.permute.xlu0 %2132
        %2134 = vrot.lane.b32.xlu0 %v2062, 96
        %v2135 = vpop.permute.xlu0 %2134
        %2136 = vrot.lane.b32.xlu0 %v2065, 96
        %v2137 = vpop.permute.xlu0 %2136
        %2138 = vrot.lane.b32.xlu0 %v2068, 96
        %v2139 = vpop.permute.xlu0 %2138
        %2140 = vrot.lane.b32.xlu0 %v2071, 96
        %v2141 = vpop.permute.xlu0 %2140
        %2142 = vrot.lane.b32.xlu0 %v1998, 32
        %v2143 = vpop.permute.xlu0 %2142
        %2144 = vrot.lane.b32.xlu0 %v2001, 32
        %v2145 = vpop.permute.xlu0 %2144
        %2146 = vrot.lane.b32.xlu0 %v2004, 32
        %v2147 = vpop.permute.xlu0 %2146
        %2148 = vrot.lane.b32.xlu0 %v2007, 32
        %v2149 = vpop.permute.xlu0 %2148
        %2150 = vrot.lane.b32.xlu0 %v2010, 32
        %v2151 = vpop.permute.xlu0 %2150
        %2152 = vrot.lane.b32.xlu0 %v2013, 32
        %v2153 = vpop.permute.xlu0 %2152
        %2154 = vrot.lane.b32.xlu0 %v2016, 32
        %v2155 = vpop.permute.xlu0 %2154
        %2156 = vrot.lane.b32.xlu0 %v2019, 32
        %v2157 = vpop.permute.xlu0 %2156
        %2158 = vrot.lane.b32.xlu0 %v2062, 32
        %v2159 = vpop.permute.xlu0 %2158
        %2160 = vrot.lane.b32.xlu0 %v2065, 32
        %v2161 = vpop.permute.xlu0 %2160
        %2162 = vrot.lane.b32.xlu0 %v2068, 32
        %v2163 = vpop.permute.xlu0 %2162
        %2164 = vrot.lane.b32.xlu0 %v2071, 32
        %v2165 = vpop.permute.xlu0 %2164
        %2166 = vrot.lane.b32.xlu0 %v1983, 32
        %v2167 = vpop.permute.xlu0 %2166
        %2168 = vrot.lane.b32.xlu0 %v2038, 96
        %v2169 = vpop.permute.xlu0 %2168
        %2170 = vrot.lane.b32.xlu0 %v2041, 96
        %v2171 = vpop.permute.xlu0 %2170
        %2172 = vrot.lane.b32.xlu0 %v2044, 96
        %v2173 = vpop.permute.xlu0 %2172
        %2174 = vrot.lane.b32.xlu0 %v2047, 96
        %v2175 = vpop.permute.xlu0 %2174
        %2176 = vrot.lane.b32.xlu0 %v2050, 96
        %v2177 = vpop.permute.xlu0 %2176
        %2178 = vrot.lane.b32.xlu0 %v2053, 96
        %v2179 = vpop.permute.xlu0 %2178
        %2180 = vrot.lane.b32.xlu0 %v2056, 96
        %v2181 = vpop.permute.xlu0 %2180
        %2182 = vrot.lane.b32.xlu0 %v2059, 96
        %v2183 = vpop.permute.xlu0 %2182
        %2184 = vrot.lane.b32.xlu0 %v2074, 96
        %v2185 = vpop.permute.xlu0 %2184
        %2186 = vrot.lane.b32.xlu0 %v2077, 96
        %v2187 = vpop.permute.xlu0 %2186
        %2188 = vrot.lane.b32.xlu0 %v2080, 96
        %v2189 = vpop.permute.xlu0 %2188
        %2190 = vrot.lane.b32.xlu0 %v2083, 96
        %v2191 = vpop.permute.xlu0 %2190
        %2192 = vrot.lane.b32.xlu0 %v2023, 96
        %v2193 = vpop.permute.xlu0 %2192
        %v2195 = vsel %vm488, %v1983, %v950
        %v2197 = vsel %vm488, %v1986, %v952
        %v2199 = vsel %vm488, %v1989, %v954
        %v2201 = vsel %vm488, %v1992, %v956
        %v2203 = vsel %vm488, %v1995, %v958
        %v2205 = vsel %vm488, %v1998, %v960
        %v2207 = vsel %vm488, %v2001, %v962
        %v2209 = vsel %vm488, %v2004, %v964
        %v2211 = vsel %vm488, %v2007, %v966
        %v2213 = vsel %vm488, %v2010, %v968
        %v2215 = vsel %vm488, %v2013, %v970
        %v2217 = vsel %vm488, %v2016, %v972
        %v2219 = vsel %vm488, %v2019, %v974
        %v2221 = vsel %vm1176, %v2195, %v2085
        %v2223 = vsel %vm1176, %v2197, %v2087
        %v2225 = vsel %vm1176, %v2199, %v2089
        %v2227 = vsel %vm1176, %v2201, %v2091
        %v2229 = vsel %vm1176, %v2203, %v2093
        %v2231 = vsel %vm1176, %v2205, %v2095
        %v2233 = vsel %vm1176, %v2207, %v2097
        %v2235 = vsel %vm1176, %v2209, %v2099
        %v2237 = vsel %vm1176, %v2211, %v2101
        %v2239 = vsel %vm1176, %v2213, %v2103
        %v2241 = vsel %vm1176, %v2215, %v2105
        %v2243 = vsel %vm1176, %v2217, %v2107
        %v2245 = vsel %vm1176, %v2219, %v2109
        %v2247 = vsel %vm1207, %v2221, %v2111
        %v2250 = vsel %vm1207, %v2221, %v2113
        %v2253 = vsel %vm1207, %v2221, %v2115
        %v2256 = vsel %vm1207, %v2221, %v2117
        %v2259 = vsel %vm1207, %v2223, %v2119
        %v2262 = vsel %vm1207, %v2225, %v2121
        %v2265 = vsel %vm1207, %v2227, %v2123
        %v2268 = vsel %vm1207, %v2229, %v2125
        %v2271 = vsel %vm1207, %v2231, %v2127
        %v2274 = vsel %vm1207, %v2233, %v2129
        %v2277 = vsel %vm1207, %v2235, %v2131
        %v2280 = vsel %vm1207, %v2237, %v2133
        %v2283 = vsel %vm1207, %v2239, %v2135
        %v2286 = vsel %vm1207, %v2241, %v2137
        %v2289 = vsel %vm1207, %v2243, %v2139
        %v2292 = vsel %vm1207, %v2245, %v2141
        %v2296 = vsel %vm488, %v2026, %v2143
        %v2299 = vsel %vm488, %v2029, %v2145
        %v2302 = vsel %vm488, %v2032, %v2147
        %v2305 = vsel %vm488, %v2035, %v2149
        %v2308 = vsel %vm488, %v2038, %v2151
        %v2311 = vsel %vm488, %v2041, %v2153
        %v2314 = vsel %vm488, %v2044, %v2155
        %v2317 = vsel %vm488, %v2047, %v2157
        %v2320 = vsel %vm488, %v2050, %v2159
        %v2323 = vsel %vm488, %v2053, %v2161
        %v2326 = vsel %vm488, %v2056, %v2163
        %v2329 = vsel %vm488, %v2059, %v2165
        %v2332 = vsel %vm488, %v2074, %v2167
        %v2334 = vsel %vm488, %v2077, %v2167
        %v2336 = vsel %vm488, %v2080, %v2167
        %v2338 = vsel %vm488, %v2083, %v2167
        %v2339 = vsel %vm1176, %v2296, %v1076
        %v2340 = vsel %vm1176, %v2299, %v1078
        %v2341 = vsel %vm1176, %v2302, %v1080
        %v2342 = vsel %vm1176, %v2305, %v1082
        %v2343 = vsel %vm1176, %v2308, %v1084
        %v2344 = vsel %vm1176, %v2311, %v1086
        %v2345 = vsel %vm1176, %v2314, %v1088
        %v2346 = vsel %vm1176, %v2317, %v1090
        %v2347 = vsel %vm1176, %v2320, %v1092
        %v2348 = vsel %vm1176, %v2323, %v1094
        %v2349 = vsel %vm1176, %v2326, %v1096
        %v2350 = vsel %vm1176, %v2329, %v1098
        %v2351 = vsel %vm1176, %v2332, %v1100
        %v2352 = vsel %vm1176, %v2334, %v1100
        %v2353 = vsel %vm1176, %v2336, %v1100
        %v2354 = vsel %vm1176, %v2338, %v1100
        %v2356 = vsel %vm1207, %v2339, %v2169
        %v2359 = vsel %vm1207, %v2340, %v2171
        %v2362 = vsel %vm1207, %v2341, %v2173
        %v2365 = vsel %vm1207, %v2342, %v2175
        %v2368 = vsel %vm1207, %v2343, %v2177
        %v2371 = vsel %vm1207, %v2344, %v2179
        %v2374 = vsel %vm1207, %v2345, %v2181
        %v2377 = vsel %vm1207, %v2346, %v2183
        %v2380 = vsel %vm1207, %v2347, %v2185
        %v2383 = vsel %vm1207, %v2348, %v2187
        %v2386 = vsel %vm1207, %v2349, %v2189
        %v2389 = vsel %vm1207, %v2350, %v2191
        %v2392 = vsel %vm1207, %v2351, %v2193
        %v2394 = vsel %vm1207, %v2352, %v2193
        %v2396 = vsel %vm1207, %v2353, %v2193
        %v2398 = vsel %vm1207, %v2354, %v2193
        %s2400 = scalar_lea.vmem %s2, 128
        %v2401 = vld [vmem:[%s2400] sm:$0xf]
        %v2402 = vld [vmem:[%s2400 + $0x4] sm:$0xf]
        %v2403 = vld [vmem:[%s2400 + $0x8] sm:$0xf]
        %v2404 = vld [vmem:[%s2400 + $0xc] sm:$0xf]
        %v2405 = vld [vmem:[%s2400 + $0x10] sm:$0xf]
        %v2406 = vld [vmem:[%s2400 + $0x14] sm:$0xf]
        %v2407 = vld [vmem:[%s2400 + $0x18] sm:$0xf]
        %v2408 = vld [vmem:[%s2400 + $0x1c] sm:$0xf]
        %v2409 = vld [vmem:[%s2400 + $0x20] sm:$0xf]
        %v2410 = vld [vmem:[%s2400 + $0x24] sm:$0xf]
        %v2411 = vld [vmem:[%s2400 + $0x28] sm:$0xf]
        %v2412 = vld [vmem:[%s2400 + $0x2c] sm:$0xf]
        %v2413 = vld [vmem:[%s2400 + $0x30] sm:$0xf]
        %v2414 = vld [vmem:[%s2400 + $0x34] sm:$0xf]
        %v2415 = vld [vmem:[%s2400 + $0x38] sm:$0xf]
        %v2416 = vld [vmem:[%s2400 + $0x3c] sm:$0xf]
        %v2417 = vld [vmem:[%s2400 + $0x40] sm:$0xf]
        %v2418 = vld [vmem:[%s2400 + $0x44] sm:$0xf]
        %v2419 = vld [vmem:[%s2400 + $0x48] sm:$0xf]
        %v2420 = vld [vmem:[%s2400 + $0x4c] sm:$0xf]
        %v2421 = vld [vmem:[%s2400 + $0x50] sm:$0xf]
        %v2422 = vld [vmem:[%s2400 + $0x54] sm:$0xf]
        %v2423 = vld [vmem:[%s2400 + $0x58] sm:$0xf]
        %v2424 = vld [vmem:[%s2400 + $0x5c] sm:$0xf]
        %v2425 = vld [vmem:[%s2400 + $0x60] sm:$0xf]
        %v2426 = vld [vmem:[%s2400 + $0x64] sm:$0xf]
        %v2427 = vld [vmem:[%s2400 + $0x68] sm:$0xf]
        %v2428 = vld [vmem:[%s2400 + $0x6c] sm:$0xf]
        %v2429 = vld [vmem:[%s2400 + $0x70] sm:$0xf]
        %v2430 = vld [vmem:[%s2400 + $0x74] sm:$0xf]
        %v2431 = vld [vmem:[%s2400 + $0x78] sm:$0xf]
        %v2432 = vld [vmem:[%s2400 + $0x7c] sm:$0xf]
        %v2465 = vunpack.c.l.b16 %v2401
        %v2466 = vunpack.c.l.b16 %v2402
        %v2467 = vunpack.c.l.b16 %v2403
        %v2468 = vunpack.c.l.b16 %v2404
        %v2469 = vunpack.c.l.b16 %v2405
        %v2470 = vunpack.c.l.b16 %v2406
        %v2471 = vunpack.c.l.b16 %v2407
        %v2472 = vunpack.c.l.b16 %v2408
        %v2473 = vunpack.c.l.b16 %v2409
        %v2474 = vunpack.c.l.b16 %v2410
        %v2475 = vunpack.c.l.b16 %v2411
        %v2476 = vunpack.c.l.b16 %v2412
        %v2477 = vunpack.c.l.b16 %v2413
        %v2478 = vunpack.c.l.b16 %v2414
        %v2479 = vunpack.c.l.b16 %v2415
        %v2480 = vunpack.c.l.b16 %v2416
        %v2481 = vunpack.c.l.b16 %v2417
        %v2482 = vunpack.c.l.b16 %v2418
        %v2483 = vunpack.c.l.b16 %v2419
        %v2484 = vunpack.c.l.b16 %v2420
        %v2485 = vunpack.c.l.b16 %v2421
        %v2486 = vunpack.c.l.b16 %v2422
        %v2487 = vunpack.c.l.b16 %v2423
        %v2488 = vunpack.c.l.b16 %v2424
        %v2489 = vunpack.c.l.b16 %v2425
        %v2490 = vunpack.c.l.b16 %v2426
        %v2491 = vunpack.c.l.b16 %v2427
        %v2492 = vunpack.c.l.b16 %v2428
        %v2493 = vunpack.c.l.b16 %v2429
        %v2494 = vunpack.c.l.b16 %v2430
        %v2495 = vunpack.c.l.b16 %v2431
        %v2496 = vunpack.c.l.b16 %v2432
        %v2497 = vpack.c.b16 %v2466, %v2465
        %v2498 = vpack.c.b16 %v2468, %v2467
        %v2499 = vpack.c.b16 %v2470, %v2469
        %v2500 = vpack.c.b16 %v2472, %v2471
        %v2501 = vpack.c.b16 %v2474, %v2473
        %v2502 = vpack.c.b16 %v2476, %v2475
        %v2503 = vpack.c.b16 %v2478, %v2477
        %v2504 = vpack.c.b16 %v2480, %v2479
        %v2505 = vpack.c.b16 %v2482, %v2481
        %v2506 = vpack.c.b16 %v2484, %v2483
        %v2507 = vpack.c.b16 %v2486, %v2485
        %v2508 = vpack.c.b16 %v2488, %v2487
        %v2509 = vpack.c.b16 %v2490, %v2489
        %v2510 = vpack.c.b16 %v2492, %v2491
        %v2511 = vpack.c.b16 %v2494, %v2493
        %v2512 = vpack.c.b16 %v2496, %v2495
        %2529 = vmatpush.bf16.msra.mxu0 %v2504
        %2530 = vmatpush.bf16.msra.mxu0 %v2503
        %2531 = vmatpush.bf16.msra.mxu0 %v2502
        %2532 = vmatpush.bf16.msra.mxu0 %v2501
        %2533 = vmatpush.bf16.msra.mxu0 %v2500
        %2534 = vmatpush.bf16.msra.mxu0 %v2499
        %2535 = vmatpush.bf16.msra.mxu0 %v2498
        %2536 = vmatpush.bf16.msra.mxu0 %v2497
        %2537 = vmatmul.bf16.gmra.mxu0 %v2247
        %v2538 = vpop.f32.mrf.mxu0
        %v2539 = vadd.f32 0.0, %v2538
        %v2540 = vpop.f32.mrf.mxu0
        %v2541 = vadd.f32 0.0, %v2540
        %2542 = vmatmul.bf16.gmra.mxu0 %v2250
        %v2543 = vpop.f32.mrf.mxu0
        %v2544 = vadd.f32 0.0, %v2543
        %v2545 = vpop.f32.mrf.mxu0
        %v2546 = vadd.f32 0.0, %v2545
        %2547 = vmatmul.bf16.gmra.mxu0 %v2253
        %v2548 = vpop.f32.mrf.mxu0
        %v2549 = vadd.f32 0.0, %v2548
        %v2550 = vpop.f32.mrf.mxu0
        %v2551 = vadd.f32 0.0, %v2550
        %2552 = vmatmul.bf16.gmra.mxu0 %v2256
        %v2553 = vpop.f32.mrf.mxu0
        %v2554 = vadd.f32 0.0, %v2553
        %v2555 = vpop.f32.mrf.mxu0
        %v2556 = vadd.f32 0.0, %v2555
        %2557 = vmatmul.bf16.gmra.mxu0 %v2259
        %v2558 = vpop.f32.mrf.mxu0
        %v2559 = vadd.f32 0.0, %v2558
        %v2560 = vpop.f32.mrf.mxu0
        %v2561 = vadd.f32 0.0, %v2560
        %2562 = vmatmul.bf16.gmra.mxu0 %v2262
        %v2563 = vpop.f32.mrf.mxu0
        %v2564 = vadd.f32 0.0, %v2563
        %v2565 = vpop.f32.mrf.mxu0
        %v2566 = vadd.f32 0.0, %v2565
        %2567 = vmatmul.bf16.gmra.mxu0 %v2265
        %v2568 = vpop.f32.mrf.mxu0
        %v2569 = vadd.f32 0.0, %v2568
        %v2570 = vpop.f32.mrf.mxu0
        %v2571 = vadd.f32 0.0, %v2570
        %2572 = vmatmul.bf16.gmra.mxu0 %v2268
        %v2573 = vpop.f32.mrf.mxu0
        %v2574 = vadd.f32 0.0, %v2573
        %v2575 = vpop.f32.mrf.mxu0
        %v2576 = vadd.f32 0.0, %v2575
        %2577 = vmatmul.bf16.gmra.mxu0 %v2271
        %v2578 = vpop.f32.mrf.mxu0
        %v2579 = vadd.f32 0.0, %v2578
        %v2580 = vpop.f32.mrf.mxu0
        %v2581 = vadd.f32 0.0, %v2580
        %2582 = vmatmul.bf16.gmra.mxu0 %v2274
        %v2583 = vpop.f32.mrf.mxu0
        %v2584 = vadd.f32 0.0, %v2583
        %v2585 = vpop.f32.mrf.mxu0
        %v2586 = vadd.f32 0.0, %v2585
        %2587 = vmatmul.bf16.gmra.mxu0 %v2277
        %v2588 = vpop.f32.mrf.mxu0
        %v2589 = vadd.f32 0.0, %v2588
        %v2590 = vpop.f32.mrf.mxu0
        %v2591 = vadd.f32 0.0, %v2590
        %2592 = vmatmul.bf16.gmra.mxu0 %v2280
        %v2593 = vpop.f32.mrf.mxu0
        %v2594 = vadd.f32 0.0, %v2593
        %v2595 = vpop.f32.mrf.mxu0
        %v2596 = vadd.f32 0.0, %v2595
        %2597 = vmatmul.bf16.gmra.mxu0 %v2283
        %v2598 = vpop.f32.mrf.mxu0
        %v2599 = vadd.f32 0.0, %v2598
        %v2600 = vpop.f32.mrf.mxu0
        %v2601 = vadd.f32 0.0, %v2600
        %2602 = vmatmul.bf16.gmra.mxu0 %v2286
        %v2603 = vpop.f32.mrf.mxu0
        %v2604 = vadd.f32 0.0, %v2603
        %v2605 = vpop.f32.mrf.mxu0
        %v2606 = vadd.f32 0.0, %v2605
        %2607 = vmatmul.bf16.gmra.mxu0 %v2289
        %v2608 = vpop.f32.mrf.mxu0
        %v2609 = vadd.f32 0.0, %v2608
        %v2610 = vpop.f32.mrf.mxu0
        %v2611 = vadd.f32 0.0, %v2610
        %2612 = vmatmul.bf16.gmra.mxu0 %v2292
        %v2613 = vpop.f32.mrf.mxu0
        %v2614 = vadd.f32 0.0, %v2613
        %v2615 = vpop.f32.mrf.mxu0
        %v2616 = vadd.f32 0.0, %v2615
        %2617 = vdwg.mxu0
        %2618 = vmatpush.bf16.msra.mxu0 %v2512
        %2619 = vmatpush.bf16.msra.mxu0 %v2511
        %2620 = vmatpush.bf16.msra.mxu0 %v2510
        %2621 = vmatpush.bf16.msra.mxu0 %v2509
        %2622 = vmatpush.bf16.msra.mxu0 %v2508
        %2623 = vmatpush.bf16.msra.mxu0 %v2507
        %2624 = vmatpush.bf16.msra.mxu0 %v2506
        %2625 = vmatpush.bf16.msra.mxu0 %v2505
        %2626 = vmatmul.bf16.gmra.mxu0 %v2356
        %v2627 = vpop.f32.mrf.mxu0
        %v2628 = vadd.f32 %v2539, %v2627
        %v2629 = vpop.f32.mrf.mxu0
        %v2630 = vadd.f32 %v2541, %v2629
        %2631 = vmatmul.bf16.gmra.mxu0 %v2359
        %v2632 = vpop.f32.mrf.mxu0
        %v2633 = vadd.f32 %v2544, %v2632
        %v2634 = vpop.f32.mrf.mxu0
        %v2635 = vadd.f32 %v2546, %v2634
        %2636 = vmatmul.bf16.gmra.mxu0 %v2362
        %v2637 = vpop.f32.mrf.mxu0
        %v2638 = vadd.f32 %v2549, %v2637
        %v2639 = vpop.f32.mrf.mxu0
        %v2640 = vadd.f32 %v2551, %v2639
        %2641 = vmatmul.bf16.gmra.mxu0 %v2365
        %v2642 = vpop.f32.mrf.mxu0
        %v2643 = vadd.f32 %v2554, %v2642
        %v2644 = vpop.f32.mrf.mxu0
        %v2645 = vadd.f32 %v2556, %v2644
        %2646 = vmatmul.bf16.gmra.mxu0 %v2368
        %v2647 = vpop.f32.mrf.mxu0
        %v2648 = vadd.f32 %v2559, %v2647
        %v2649 = vpop.f32.mrf.mxu0
        %v2650 = vadd.f32 %v2561, %v2649
        %2651 = vmatmul.bf16.gmra.mxu0 %v2371
        %v2652 = vpop.f32.mrf.mxu0
        %v2653 = vadd.f32 %v2564, %v2652
        %v2654 = vpop.f32.mrf.mxu0
        %v2655 = vadd.f32 %v2566, %v2654
        %2656 = vmatmul.bf16.gmra.mxu0 %v2374
        %v2657 = vpop.f32.mrf.mxu0
        %v2658 = vadd.f32 %v2569, %v2657
        %v2659 = vpop.f32.mrf.mxu0
        %v2660 = vadd.f32 %v2571, %v2659
        %2661 = vmatmul.bf16.gmra.mxu0 %v2377
        %v2662 = vpop.f32.mrf.mxu0
        %v2663 = vadd.f32 %v2574, %v2662
        %v2664 = vpop.f32.mrf.mxu0
        %v2665 = vadd.f32 %v2576, %v2664
        %2666 = vmatmul.bf16.gmra.mxu0 %v2380
        %v2667 = vpop.f32.mrf.mxu0
        %v2668 = vadd.f32 %v2579, %v2667
        %v2669 = vpop.f32.mrf.mxu0
        %v2670 = vadd.f32 %v2581, %v2669
        %2671 = vmatmul.bf16.gmra.mxu0 %v2383
        %v2672 = vpop.f32.mrf.mxu0
        %v2673 = vadd.f32 %v2584, %v2672
        %v2674 = vpop.f32.mrf.mxu0
        %v2675 = vadd.f32 %v2586, %v2674
        %2676 = vmatmul.bf16.gmra.mxu0 %v2386
        %v2677 = vpop.f32.mrf.mxu0
        %v2678 = vadd.f32 %v2589, %v2677
        %v2679 = vpop.f32.mrf.mxu0
        %v2680 = vadd.f32 %v2591, %v2679
        %2681 = vmatmul.bf16.gmra.mxu0 %v2389
        %v2682 = vpop.f32.mrf.mxu0
        %v2683 = vadd.f32 %v2594, %v2682
        %v2684 = vpop.f32.mrf.mxu0
        %v2685 = vadd.f32 %v2596, %v2684
        %2686 = vmatmul.bf16.gmra.mxu0 %v2392
        %v2687 = vpop.f32.mrf.mxu0
        %v2688 = vadd.f32 %v2599, %v2687
        %v2689 = vpop.f32.mrf.mxu0
        %v2690 = vadd.f32 %v2601, %v2689
        %2691 = vmatmul.bf16.gmra.mxu0 %v2394
        %v2692 = vpop.f32.mrf.mxu0
        %v2693 = vadd.f32 %v2604, %v2692
        %v2694 = vpop.f32.mrf.mxu0
        %v2695 = vadd.f32 %v2606, %v2694
        %2696 = vmatmul.bf16.gmra.mxu0 %v2396
        %v2697 = vpop.f32.mrf.mxu0
        %v2698 = vadd.f32 %v2609, %v2697
        %v2699 = vpop.f32.mrf.mxu0
        %v2700 = vadd.f32 %v2611, %v2699
        %2701 = vmatmul.bf16.gmra.mxu0 %v2398
        %v2702 = vpop.f32.mrf.mxu0
        %v2703 = vadd.f32 %v2614, %v2702
        %v2704 = vpop.f32.mrf.mxu0
        %v2705 = vadd.f32 %v2616, %v2704
        %2706 = vdwg.mxu0
        %2739 = vrot.lane.b32.xlu0 %v2628, 64
        %v2740 = vpop.permute.xlu0 %2739
        %2741 = vrot.lane.b32.xlu0 %v2630, 64
        %v2742 = vpop.permute.xlu0 %2741
        %2743 = vrot.lane.b32.xlu0 %v2633, 64
        %v2744 = vpop.permute.xlu0 %2743
        %2745 = vrot.lane.b32.xlu0 %v2635, 64
        %v2746 = vpop.permute.xlu0 %2745
        %2747 = vrot.lane.b32.xlu0 %v2638, 64
        %v2748 = vpop.permute.xlu0 %2747
        %2749 = vrot.lane.b32.xlu0 %v2640, 64
        %v2750 = vpop.permute.xlu0 %2749
        %2751 = vrot.lane.b32.xlu0 %v2643, 64
        %v2752 = vpop.permute.xlu0 %2751
        %2753 = vrot.lane.b32.xlu0 %v2645, 64
        %v2754 = vpop.permute.xlu0 %2753
        %2755 = vrot.lane.b32.xlu0 %v2648, 64
        %v2756 = vpop.permute.xlu0 %2755
        %2757 = vrot.lane.b32.xlu0 %v2650, 64
        %v2758 = vpop.permute.xlu0 %2757
        %2759 = vrot.lane.b32.xlu0 %v2653, 64
        %v2760 = vpop.permute.xlu0 %2759
        %2761 = vrot.lane.b32.xlu0 %v2655, 64
        %v2762 = vpop.permute.xlu0 %2761
        %2763 = vrot.lane.b32.xlu0 %v2658, 64
        %v2764 = vpop.permute.xlu0 %2763
        %2765 = vrot.lane.b32.xlu0 %v2660, 64
        %v2766 = vpop.permute.xlu0 %2765
        %2767 = vrot.lane.b32.xlu0 %v2663, 64
        %v2768 = vpop.permute.xlu0 %2767
        %2769 = vrot.lane.b32.xlu0 %v2665, 64
        %v2770 = vpop.permute.xlu0 %2769
        %2771 = vrot.lane.b32.xlu0 %v2668, 64
        %v2772 = vpop.permute.xlu0 %2771
        %2773 = vrot.lane.b32.xlu0 %v2670, 64
        %v2774 = vpop.permute.xlu0 %2773
        %2775 = vrot.lane.b32.xlu0 %v2673, 64
        %v2776 = vpop.permute.xlu0 %2775
        %2777 = vrot.lane.b32.xlu0 %v2675, 64
        %v2778 = vpop.permute.xlu0 %2777
        %2779 = vrot.lane.b32.xlu0 %v2678, 64
        %v2780 = vpop.permute.xlu0 %2779
        %2781 = vrot.lane.b32.xlu0 %v2680, 64
        %v2782 = vpop.permute.xlu0 %2781
        %2783 = vrot.lane.b32.xlu0 %v2683, 64
        %v2784 = vpop.permute.xlu0 %2783
        %2785 = vrot.lane.b32.xlu0 %v2685, 64
        %v2786 = vpop.permute.xlu0 %2785
        %2787 = vrot.lane.b32.xlu0 %v2688, 64
        %v2788 = vpop.permute.xlu0 %2787
        %2789 = vrot.lane.b32.xlu0 %v2690, 64
        %v2790 = vpop.permute.xlu0 %2789
        %2791 = vrot.lane.b32.xlu0 %v2693, 64
        %v2792 = vpop.permute.xlu0 %2791
        %2793 = vrot.lane.b32.xlu0 %v2695, 64
        %v2794 = vpop.permute.xlu0 %2793
        %2795 = vrot.lane.b32.xlu0 %v2698, 64
        %v2796 = vpop.permute.xlu0 %2795
        %2797 = vrot.lane.b32.xlu0 %v2700, 64
        %v2798 = vpop.permute.xlu0 %2797
        %2799 = vrot.lane.b32.xlu0 %v2703, 64
        %v2800 = vpop.permute.xlu0 %2799
        %2801 = vrot.lane.b32.xlu0 %v2705, 64
        %v2802 = vpop.permute.xlu0 %2801
        %v2835 = vadd.f32 %v547, %v2740
        %v2836 = vadd.f32 %v549, %v2742
        %v2837 = vadd.f32 %v552, %v2744
        %v2838 = vadd.f32 %v554, %v2746
        %v2839 = vadd.f32 %v557, %v2748
        %v2840 = vadd.f32 %v559, %v2750
        %v2841 = vadd.f32 %v562, %v2752
        %v2842 = vadd.f32 %v564, %v2754
        %v2843 = vadd.f32 %v567, %v2756
        %v2844 = vadd.f32 %v569, %v2758
        %v2845 = vadd.f32 %v572, %v2760
        %v2846 = vadd.f32 %v574, %v2762
        %v2847 = vadd.f32 %v577, %v2764
        %v2848 = vadd.f32 %v579, %v2766
        %v2849 = vadd.f32 %v582, %v2768
        %v2850 = vadd.f32 %v584, %v2770
        %v2851 = vadd.f32 %v587, %v2772
        %v2852 = vadd.f32 %v589, %v2774
        %v2853 = vadd.f32 %v592, %v2776
        %v2854 = vadd.f32 %v594, %v2778
        %v2855 = vadd.f32 %v597, %v2780
        %v2856 = vadd.f32 %v599, %v2782
        %v2857 = vadd.f32 %v602, %v2784
        %v2858 = vadd.f32 %v604, %v2786
        %v2859 = vadd.f32 %v607, %v2788
        %v2860 = vadd.f32 %v609, %v2790
        %v2861 = vadd.f32 %v612, %v2792
        %v2862 = vadd.f32 %v614, %v2794
        %v2863 = vadd.f32 %v617, %v2796
        %v2864 = vadd.f32 %v619, %v2798
        %v2865 = vadd.f32 %v622, %v2800
        %v2866 = vadd.f32 %v624, %v2802
        %v2867 = vld [vmem:[%s4] sm:$0x1]
        %v2869 = vperm.slane %v2867, 0
        %v2871 = vadd.f32 %v2835, %v2869
        %v2872 = vadd.f32 %v2836, %v2869
        %v2873 = vadd.f32 %v2837, %v2869
        %v2874 = vadd.f32 %v2838, %v2869
        %v2875 = vadd.f32 %v2839, %v2869
        %v2876 = vadd.f32 %v2840, %v2869
        %v2877 = vadd.f32 %v2841, %v2869
        %v2878 = vadd.f32 %v2842, %v2869
        %v2879 = vadd.f32 %v2843, %v2869
        %v2880 = vadd.f32 %v2844, %v2869
        %v2881 = vadd.f32 %v2845, %v2869
        %v2882 = vadd.f32 %v2846, %v2869
        %v2883 = vadd.f32 %v2847, %v2869
        %v2884 = vadd.f32 %v2848, %v2869
        %v2885 = vadd.f32 %v2849, %v2869
        %v2886 = vadd.f32 %v2850, %v2869
        %v2887 = vadd.f32 %v2851, %v2869
        %v2888 = vadd.f32 %v2852, %v2869
        %v2889 = vadd.f32 %v2853, %v2869
        %v2890 = vadd.f32 %v2854, %v2869
        %v2891 = vadd.f32 %v2855, %v2869
        %v2892 = vadd.f32 %v2856, %v2869
        %v2893 = vadd.f32 %v2857, %v2869
        %v2894 = vadd.f32 %v2858, %v2869
        %v2895 = vadd.f32 %v2859, %v2869
        %v2896 = vadd.f32 %v2860, %v2869
        %v2897 = vadd.f32 %v2861, %v2869
        %v2898 = vadd.f32 %v2862, %v2869
        %v2899 = vadd.f32 %v2863, %v2869
        %v2900 = vadd.f32 %v2864, %v2869
        %v2901 = vadd.f32 %v2865, %v2869
        %v2902 = vadd.f32 %v2866, %v2869
        %v2903 = vmax.f32 %v2871, 0.0
        %v2904 = vmax.f32 %v2872, 0.0
        %v2905 = vmax.f32 %v2873, 0.0
        %v2906 = vmax.f32 %v2874, 0.0
        %v2907 = vmax.f32 %v2875, 0.0
        %v2908 = vmax.f32 %v2876, 0.0
        %v2909 = vmax.f32 %v2877, 0.0
        %v2910 = vmax.f32 %v2878, 0.0
        %v2911 = vmax.f32 %v2879, 0.0
        %v2912 = vmax.f32 %v2880, 0.0
        %v2913 = vmax.f32 %v2881, 0.0
        %v2914 = vmax.f32 %v2882, 0.0
        %v2915 = vmax.f32 %v2883, 0.0
        %v2916 = vmax.f32 %v2884, 0.0
        %v2917 = vmax.f32 %v2885, 0.0
        %v2918 = vmax.f32 %v2886, 0.0
        %v2919 = vmax.f32 %v2887, 0.0
        %v2920 = vmax.f32 %v2888, 0.0
        %v2921 = vmax.f32 %v2889, 0.0
        %v2922 = vmax.f32 %v2890, 0.0
        %v2923 = vmax.f32 %v2891, 0.0
        %v2924 = vmax.f32 %v2892, 0.0
        %v2925 = vmax.f32 %v2893, 0.0
        %v2926 = vmax.f32 %v2894, 0.0
        %v2927 = vmax.f32 %v2895, 0.0
        %v2928 = vmax.f32 %v2896, 0.0
        %v2929 = vmax.f32 %v2897, 0.0
        %v2930 = vmax.f32 %v2898, 0.0
        %v2931 = vmax.f32 %v2899, 0.0
        %v2932 = vmax.f32 %v2900, 0.0
        %v2933 = vmax.f32 %v2901, 0.0
        %v2934 = vmax.f32 %v2902, 0.0
        %v2935 = vpack.c.bf16 %v2903, %v2903
        %v2936 = vpack.c.bf16 %v2904, %v2904
        %v2937 = vpack.c.bf16 %v2905, %v2905
        %v2938 = vpack.c.bf16 %v2906, %v2906
        %v2939 = vpack.c.bf16 %v2907, %v2907
        %v2940 = vpack.c.bf16 %v2908, %v2908
        %v2941 = vpack.c.bf16 %v2909, %v2909
        %v2942 = vpack.c.bf16 %v2910, %v2910
        %v2943 = vpack.c.bf16 %v2911, %v2911
        %v2944 = vpack.c.bf16 %v2912, %v2912
        %v2945 = vpack.c.bf16 %v2913, %v2913
        %v2946 = vpack.c.bf16 %v2914, %v2914
        %v2947 = vpack.c.bf16 %v2915, %v2915
        %v2948 = vpack.c.bf16 %v2916, %v2916
        %v2949 = vpack.c.bf16 %v2917, %v2917
        %v2950 = vpack.c.bf16 %v2918, %v2918
        %v2951 = vpack.c.bf16 %v2919, %v2919
        %v2952 = vpack.c.bf16 %v2920, %v2920
        %v2953 = vpack.c.bf16 %v2921, %v2921
        %v2954 = vpack.c.bf16 %v2922, %v2922
        %v2955 = vpack.c.bf16 %v2923, %v2923
        %v2956 = vpack.c.bf16 %v2924, %v2924
        %v2957 = vpack.c.bf16 %v2925, %v2925
        %v2958 = vpack.c.bf16 %v2926, %v2926
        %v2959 = vpack.c.bf16 %v2927, %v2927
        %v2960 = vpack.c.bf16 %v2928, %v2928
        %v2961 = vpack.c.bf16 %v2929, %v2929
        %v2962 = vpack.c.bf16 %v2930, %v2930
        %v2963 = vpack.c.bf16 %v2931, %v2931
        %v2964 = vpack.c.bf16 %v2932, %v2932
        %v2965 = vpack.c.bf16 %v2933, %v2933
        %v2966 = vpack.c.bf16 %v2934, %v2934
        %vm2967 = vcmask 781824
        %2968 = vst.msk [vmem:[%s275] sm:$0xf] %vm2967, %v2935
        %2969 = vst.msk [vmem:[%s275 + $0x4] sm:$0xf] %vm2967, %v2936
        %2970 = vst.msk [vmem:[%s275 + $0x8] sm:$0xf] %vm2967, %v2937
        %2971 = vst.msk [vmem:[%s275 + $0xc] sm:$0xf] %vm2967, %v2938
        %2972 = vst.msk [vmem:[%s275 + $0x10] sm:$0xf] %vm2967, %v2939
        %2973 = vst.msk [vmem:[%s275 + $0x14] sm:$0xf] %vm2967, %v2940
        %2974 = vst.msk [vmem:[%s275 + $0x18] sm:$0xf] %vm2967, %v2941
        %2975 = vst.msk [vmem:[%s275 + $0x1c] sm:$0xf] %vm2967, %v2942
        %2976 = vst.msk [vmem:[%s275 + $0x20] sm:$0xf] %vm2967, %v2943
        %2977 = vst.msk [vmem:[%s275 + $0x24] sm:$0xf] %vm2967, %v2944
        %2978 = vst.msk [vmem:[%s275 + $0x28] sm:$0xf] %vm2967, %v2945
        %2979 = vst.msk [vmem:[%s275 + $0x2c] sm:$0xf] %vm2967, %v2946
        %2980 = vst.msk [vmem:[%s275 + $0x30] sm:$0xf] %vm2967, %v2947
        %2981 = vst.msk [vmem:[%s275 + $0x34] sm:$0xf] %vm2967, %v2948
        %2982 = vst.msk [vmem:[%s275 + $0x38] sm:$0xf] %vm2967, %v2949
        %2983 = vst.msk [vmem:[%s275 + $0x3c] sm:$0xf] %vm2967, %v2950
        %2984 = vst.msk [vmem:[%s275 + $0x40] sm:$0xf] %vm2967, %v2951
        %2985 = vst.msk [vmem:[%s275 + $0x44] sm:$0xf] %vm2967, %v2952
        %2986 = vst.msk [vmem:[%s275 + $0x48] sm:$0xf] %vm2967, %v2953
        %2987 = vst.msk [vmem:[%s275 + $0x4c] sm:$0xf] %vm2967, %v2954
        %2988 = vst.msk [vmem:[%s275 + $0x50] sm:$0xf] %vm2967, %v2955
        %2989 = vst.msk [vmem:[%s275 + $0x54] sm:$0xf] %vm2967, %v2956
        %2990 = vst.msk [vmem:[%s275 + $0x58] sm:$0xf] %vm2967, %v2957
        %2991 = vst.msk [vmem:[%s275 + $0x5c] sm:$0xf] %vm2967, %v2958
        %2992 = vst.msk [vmem:[%s275 + $0x60] sm:$0xf] %vm2967, %v2959
        %2993 = vst.msk [vmem:[%s275 + $0x64] sm:$0xf] %vm2967, %v2960
        %2994 = vst.msk [vmem:[%s275 + $0x68] sm:$0xf] %vm2967, %v2961
        %2995 = vst.msk [vmem:[%s275 + $0x6c] sm:$0xf] %vm2967, %v2962
        %2996 = vst.msk [vmem:[%s275 + $0x70] sm:$0xf] %vm2967, %v2963
        %2997 = vst.msk [vmem:[%s275 + $0x74] sm:$0xf] %vm2967, %v2964
        %2998 = vst.msk [vmem:[%s275 + $0x78] sm:$0xf] %vm2967, %v2965
        %2999 = vst.msk [vmem:[%s275 + $0x7c] sm:$0xf] %vm2967, %v2966
        %vm3000 = vcmask 1041408
        %v3001 = vrot.slane %v422, 6
        %v3002 = vrot.slane %v455, 6
        %v3003 = vsel %vm3000, %v3001, %v3002
        %v3004 = vrot.slane %v424, 6
        %v3005 = vrot.slane %v456, 6
        %v3006 = vsel %vm3000, %v3004, %v3005
        %v3007 = vrot.slane %v426, 6
        %v3008 = vrot.slane %v457, 6
        %v3009 = vsel %vm3000, %v3007, %v3008
        %v3010 = vrot.slane %v428, 6
        %v3011 = vrot.slane %v458, 6
        %v3012 = vsel %vm3000, %v3010, %v3011
        %v3013 = vrot.slane %v430, 6
        %v3014 = vrot.slane %v459, 6
        %v3015 = vsel %vm3000, %v3013, %v3014
        %v3016 = vrot.slane %v432, 6
        %v3017 = vrot.slane %v460, 6
        %v3018 = vsel %vm3000, %v3016, %v3017
        %v3019 = vrot.slane %v434, 6
        %v3020 = vrot.slane %v461, 6
        %v3021 = vsel %vm3000, %v3019, %v3020
        %v3022 = vrot.slane %v436, 6
        %v3023 = vrot.slane %v462, 6
        %v3024 = vsel %vm3000, %v3022, %v3023
        %v3025 = vrot.slane %v438, 6
        %v3026 = vrot.slane %v463, 6
        %v3027 = vsel %vm3000, %v3025, %v3026
        %v3028 = vrot.slane %v440, 6
        %v3029 = vrot.slane %v464, 6
        %v3030 = vsel %vm3000, %v3028, %v3029
        %v3031 = vrot.slane %v442, 6
        %v3032 = vrot.slane %v465, 6
        %v3033 = vsel %vm3000, %v3031, %v3032
        %v3034 = vrot.slane %v444, 6
        %v3035 = vrot.slane %v466, 6
        %v3036 = vsel %vm3000, %v3034, %v3035
        %v3037 = vrot.slane %v446, 6
        %v3038 = vrot.slane %v467, 6
        %v3039 = vsel %vm3000, %v3037, %v3038
        %v3040 = vrot.slane %v448, 6
        %v3041 = vrot.slane %v468, 6
        %v3042 = vsel %vm3000, %v3040, %v3041
        %v3043 = vrot.slane %v450, 6
        %v3044 = vrot.slane %v469, 6
        %v3045 = vsel %vm3000, %v3043, %v3044
        %v3046 = vrot.slane %v452, 6
        %v3047 = vrot.slane %v470, 6
        %v3048 = vsel %vm3000, %v3046, %v3047
        %v3049 = vrot.slane %v454, 6
        %v3050 = vrot.slane %v471, 6
        %v3051 = vsel %vm3000, %v3049, %v3050
        %3052 = vrot.lane.b32.xlu0 %v3003, 64
        %v3053 = vpop.permute.xlu0 %3052
        %3054 = vrot.lane.b32.xlu0 %v3006, 64
        %v3055 = vpop.permute.xlu0 %3054
        %3056 = vrot.lane.b32.xlu0 %v3009, 64
        %v3057 = vpop.permute.xlu0 %3056
        %3058 = vrot.lane.b32.xlu0 %v3012, 64
        %v3059 = vpop.permute.xlu0 %3058
        %3060 = vrot.lane.b32.xlu0 %v3015, 64
        %v3061 = vpop.permute.xlu0 %3060
        %3062 = vrot.lane.b32.xlu0 %v3018, 64
        %v3063 = vpop.permute.xlu0 %3062
        %3064 = vrot.lane.b32.xlu0 %v3021, 64
        %v3065 = vpop.permute.xlu0 %3064
        %3066 = vrot.lane.b32.xlu0 %v3024, 64
        %v3067 = vpop.permute.xlu0 %3066
        %3068 = vrot.lane.b32.xlu0 %v3027, 64
        %v3069 = vpop.permute.xlu0 %3068
        %3070 = vrot.lane.b32.xlu0 %v3030, 64
        %v3071 = vpop.permute.xlu0 %3070
        %3072 = vrot.lane.b32.xlu0 %v3033, 64
        %v3073 = vpop.permute.xlu0 %3072
        %3074 = vrot.lane.b32.xlu0 %v424, 96
        %v3075 = vpop.permute.xlu0 %3074
        %3076 = vrot.lane.b32.xlu0 %v426, 96
        %v3077 = vpop.permute.xlu0 %3076
        %3078 = vrot.lane.b32.xlu0 %v428, 96
        %v3079 = vpop.permute.xlu0 %3078
        %3080 = vrot.lane.b32.xlu0 %v430, 96
        %v3081 = vpop.permute.xlu0 %3080
        %3082 = vrot.lane.b32.xlu0 %v432, 96
        %v3083 = vpop.permute.xlu0 %3082
        %3084 = vrot.lane.b32.xlu0 %v434, 96
        %v3085 = vpop.permute.xlu0 %3084
        %3086 = vrot.lane.b32.xlu0 %v436, 96
        %v3087 = vpop.permute.xlu0 %3086
        %3088 = vrot.lane.b32.xlu0 %v438, 96
        %v3089 = vpop.permute.xlu0 %3088
        %3090 = vrot.lane.b32.xlu0 %v440, 96
        %v3091 = vpop.permute.xlu0 %3090
        %3092 = vrot.lane.b32.xlu0 %v442, 96
        %v3093 = vpop.permute.xlu0 %3092
        %3094 = vrot.lane.b32.xlu0 %v444, 96
        %v3095 = vpop.permute.xlu0 %3094
        %3096 = vrot.lane.b32.xlu0 %v446, 96
        %v3097 = vpop.permute.xlu0 %3096
        %3098 = vrot.lane.b32.xlu0 %v448, 96
        %v3099 = vpop.permute.xlu0 %3098
        %3100 = vrot.lane.b32.xlu0 %v450, 96
        %v3101 = vpop.permute.xlu0 %3100
        %3102 = vrot.lane.b32.xlu0 %v452, 96
        %v3103 = vpop.permute.xlu0 %3102
        %3104 = vrot.lane.b32.xlu0 %v454, 96
        %v3105 = vpop.permute.xlu0 %3104
        %3106 = vrot.lane.b32.xlu0 %v436, 32
        %v3107 = vpop.permute.xlu0 %3106
        %3108 = vrot.lane.b32.xlu0 %v438, 32
        %v3109 = vpop.permute.xlu0 %3108
        %3110 = vrot.lane.b32.xlu0 %v440, 32
        %v3111 = vpop.permute.xlu0 %3110
        %3112 = vrot.lane.b32.xlu0 %v442, 32
        %v3113 = vpop.permute.xlu0 %3112
        %3114 = vrot.lane.b32.xlu0 %v444, 32
        %v3115 = vpop.permute.xlu0 %3114
        %3116 = vrot.lane.b32.xlu0 %v446, 32
        %v3117 = vpop.permute.xlu0 %3116
        %3118 = vrot.lane.b32.xlu0 %v448, 32
        %v3119 = vpop.permute.xlu0 %3118
        %3120 = vrot.lane.b32.xlu0 %v450, 32
        %v3121 = vpop.permute.xlu0 %3120
        %3122 = vrot.lane.b32.xlu0 %v452, 32
        %v3123 = vpop.permute.xlu0 %3122
        %3124 = vrot.lane.b32.xlu0 %v454, 32
        %v3125 = vpop.permute.xlu0 %3124
        %3126 = vrot.lane.b32.xlu0 %v422, 32
        %v3127 = vpop.permute.xlu0 %3126
        %3128 = vrot.lane.b32.xlu0 %v3024, 96
        %v3129 = vpop.permute.xlu0 %3128
        %3130 = vrot.lane.b32.xlu0 %v3027, 96
        %v3131 = vpop.permute.xlu0 %3130
        %3132 = vrot.lane.b32.xlu0 %v3030, 96
        %v3133 = vpop.permute.xlu0 %3132
        %3134 = vrot.lane.b32.xlu0 %v3033, 96
        %v3135 = vpop.permute.xlu0 %3134
        %3136 = vrot.lane.b32.xlu0 %v3036, 96
        %v3137 = vpop.permute.xlu0 %3136
        %3138 = vrot.lane.b32.xlu0 %v3039, 96
        %v3139 = vpop.permute.xlu0 %3138
        %3140 = vrot.lane.b32.xlu0 %v3042, 96
        %v3141 = vpop.permute.xlu0 %3140
        %3142 = vrot.lane.b32.xlu0 %v3045, 96
        %v3143 = vpop.permute.xlu0 %3142
        %3144 = vrot.lane.b32.xlu0 %v3048, 96
        %v3145 = vpop.permute.xlu0 %3144
        %3146 = vrot.lane.b32.xlu0 %v3051, 96
        %v3147 = vpop.permute.xlu0 %3146
        %3148 = vrot.lane.b32.xlu0 %v3003, 96
        %v3149 = vpop.permute.xlu0 %3148
        %v3150 = vsel %vm488, %v422, %v950
        %v3151 = vsel %vm488, %v424, %v952
        %v3152 = vsel %vm488, %v426, %v954
        %v3153 = vsel %vm488, %v428, %v956
        %v3154 = vsel %vm488, %v430, %v958
        %v3155 = vsel %vm488, %v432, %v960
        %v3156 = vsel %vm488, %v434, %v962
        %v3157 = vsel %vm488, %v436, %v964
        %v3158 = vsel %vm488, %v438, %v966
        %v3159 = vsel %vm488, %v440, %v968
        %v3160 = vsel %vm488, %v442, %v970
        %v3162 = vsel %vm1176, %v3150, %v3053
        %v3164 = vsel %vm1176, %v3151, %v3055
        %v3166 = vsel %vm1176, %v3152, %v3057
        %v3168 = vsel %vm1176, %v3153, %v3059
        %v3170 = vsel %vm1176, %v3154, %v3061
        %v3172 = vsel %vm1176, %v3155, %v3063
        %v3174 = vsel %vm1176, %v3156, %v3065
        %v3176 = vsel %vm1176, %v3157, %v3067
        %v3178 = vsel %vm1176, %v3158, %v3069
        %v3180 = vsel %vm1176, %v3159, %v3071
        %v3182 = vsel %vm1176, %v3160, %v3073
        %v3184 = vsel %vm1207, %v3162, %v3075
        %v3187 = vsel %vm1207, %v3162, %v3077
        %v3190 = vsel %vm1207, %v3162, %v3079
        %v3193 = vsel %vm1207, %v3162, %v3081
        %v3196 = vsel %vm1207, %v3162, %v3083
        %v3199 = vsel %vm1207, %v3162, %v3085
        %v3202 = vsel %vm1207, %v3164, %v3087
        %v3205 = vsel %vm1207, %v3166, %v3089
        %v3208 = vsel %vm1207, %v3168, %v3091
        %v3211 = vsel %vm1207, %v3170, %v3093
        %v3214 = vsel %vm1207, %v3172, %v3095
        %v3217 = vsel %vm1207, %v3174, %v3097
        %v3220 = vsel %vm1207, %v3176, %v3099
        %v3223 = vsel %vm1207, %v3178, %v3101
        %v3226 = vsel %vm1207, %v3180, %v3103
        %v3229 = vsel %vm1207, %v3182, %v3105
        %v3233 = vsel %vm488, %v3006, %v3107
        %v3236 = vsel %vm488, %v3009, %v3109
        %v3239 = vsel %vm488, %v3012, %v3111
        %v3242 = vsel %vm488, %v3015, %v3113
        %v3245 = vsel %vm488, %v3018, %v3115
        %v3248 = vsel %vm488, %v3021, %v3117
        %v3251 = vsel %vm488, %v3024, %v3119
        %v3254 = vsel %vm488, %v3027, %v3121
        %v3257 = vsel %vm488, %v3030, %v3123
        %v3260 = vsel %vm488, %v3033, %v3125
        %v3263 = vsel %vm488, %v3036, %v3127
        %v3265 = vsel %vm488, %v3039, %v3127
        %v3267 = vsel %vm488, %v3042, %v3127
        %v3269 = vsel %vm488, %v3045, %v3127
        %v3271 = vsel %vm488, %v3048, %v3127
        %v3273 = vsel %vm488, %v3051, %v3127
        %v3274 = vsel %vm1176, %v3233, %v1080
        %v3275 = vsel %vm1176, %v3236, %v1082
        %v3276 = vsel %vm1176, %v3239, %v1084
        %v3277 = vsel %vm1176, %v3242, %v1086
        %v3278 = vsel %vm1176, %v3245, %v1088
        %v3279 = vsel %vm1176, %v3248, %v1090
        %v3280 = vsel %vm1176, %v3251, %v1092
        %v3281 = vsel %vm1176, %v3254, %v1094
        %v3282 = vsel %vm1176, %v3257, %v1096
        %v3283 = vsel %vm1176, %v3260, %v1098
        %v3284 = vsel %vm1176, %v3263, %v1100
        %v3285 = vsel %vm1176, %v3265, %v1100
        %v3286 = vsel %vm1176, %v3267, %v1100
        %v3287 = vsel %vm1176, %v3269, %v1100
        %v3288 = vsel %vm1176, %v3271, %v1100
        %v3289 = vsel %vm1176, %v3273, %v1100
        %v3291 = vsel %vm1207, %v3274, %v3129
        %v3294 = vsel %vm1207, %v3275, %v3131
        %v3297 = vsel %vm1207, %v3276, %v3133
        %v3300 = vsel %vm1207, %v3277, %v3135
        %v3303 = vsel %vm1207, %v3278, %v3137
        %v3306 = vsel %vm1207, %v3279, %v3139
        %v3309 = vsel %vm1207, %v3280, %v3141
        %v3312 = vsel %vm1207, %v3281, %v3143
        %v3315 = vsel %vm1207, %v3282, %v3145
        %v3318 = vsel %vm1207, %v3283, %v3147
        %v3321 = vsel %vm1207, %v3284, %v3149
        %v3323 = vsel %vm1207, %v3285, %v3149
        %v3325 = vsel %vm1207, %v3286, %v3149
        %v3327 = vsel %vm1207, %v3287, %v3149
        %v3329 = vsel %vm1207, %v3288, %v3149
        %v3331 = vsel %vm1207, %v3289, %v3149
        %s3333 = scalar_lea.vmem %s2, 256
        %v3334 = vld [vmem:[%s3333] sm:$0xf]
        %v3335 = vld [vmem:[%s3333 + $0x4] sm:$0xf]
        %v3336 = vld [vmem:[%s3333 + $0x8] sm:$0xf]
        %v3337 = vld [vmem:[%s3333 + $0xc] sm:$0xf]
        %v3338 = vld [vmem:[%s3333 + $0x10] sm:$0xf]
        %v3339 = vld [vmem:[%s3333 + $0x14] sm:$0xf]
        %v3340 = vld [vmem:[%s3333 + $0x18] sm:$0xf]
        %v3341 = vld [vmem:[%s3333 + $0x1c] sm:$0xf]
        %v3342 = vld [vmem:[%s3333 + $0x20] sm:$0xf]
        %v3343 = vld [vmem:[%s3333 + $0x24] sm:$0xf]
        %v3344 = vld [vmem:[%s3333 + $0x28] sm:$0xf]
        %v3345 = vld [vmem:[%s3333 + $0x2c] sm:$0xf]
        %v3346 = vld [vmem:[%s3333 + $0x30] sm:$0xf]
        %v3347 = vld [vmem:[%s3333 + $0x34] sm:$0xf]
        %v3348 = vld [vmem:[%s3333 + $0x38] sm:$0xf]
        %v3349 = vld [vmem:[%s3333 + $0x3c] sm:$0xf]
        %v3350 = vld [vmem:[%s3333 + $0x40] sm:$0xf]
        %v3351 = vld [vmem:[%s3333 + $0x44] sm:$0xf]
        %v3352 = vld [vmem:[%s3333 + $0x48] sm:$0xf]
        %v3353 = vld [vmem:[%s3333 + $0x4c] sm:$0xf]
        %v3354 = vld [vmem:[%s3333 + $0x50] sm:$0xf]
        %v3355 = vld [vmem:[%s3333 + $0x54] sm:$0xf]
        %v3356 = vld [vmem:[%s3333 + $0x58] sm:$0xf]
        %v3357 = vld [vmem:[%s3333 + $0x5c] sm:$0xf]
        %v3358 = vld [vmem:[%s3333 + $0x60] sm:$0xf]
        %v3359 = vld [vmem:[%s3333 + $0x64] sm:$0xf]
        %v3360 = vld [vmem:[%s3333 + $0x68] sm:$0xf]
        %v3361 = vld [vmem:[%s3333 + $0x6c] sm:$0xf]
        %v3362 = vld [vmem:[%s3333 + $0x70] sm:$0xf]
        %v3363 = vld [vmem:[%s3333 + $0x74] sm:$0xf]
        %v3364 = vld [vmem:[%s3333 + $0x78] sm:$0xf]
        %v3365 = vld [vmem:[%s3333 + $0x7c] sm:$0xf]
        %v3398 = vunpack.c.l.b16 %v3334
        %v3399 = vunpack.c.l.b16 %v3335
        %v3400 = vunpack.c.l.b16 %v3336
        %v3401 = vunpack.c.l.b16 %v3337
        %v3402 = vunpack.c.l.b16 %v3338
        %v3403 = vunpack.c.l.b16 %v3339
        %v3404 = vunpack.c.l.b16 %v3340
        %v3405 = vunpack.c.l.b16 %v3341
        %v3406 = vunpack.c.l.b16 %v3342
        %v3407 = vunpack.c.l.b16 %v3343
        %v3408 = vunpack.c.l.b16 %v3344
        %v3409 = vunpack.c.l.b16 %v3345
        %v3410 = vunpack.c.l.b16 %v3346
        %v3411 = vunpack.c.l.b16 %v3347
        %v3412 = vunpack.c.l.b16 %v3348
        %v3413 = vunpack.c.l.b16 %v3349
        %v3414 = vunpack.c.l.b16 %v3350
        %v3415 = vunpack.c.l.b16 %v3351
        %v3416 = vunpack.c.l.b16 %v3352
        %v3417 = vunpack.c.l.b16 %v3353
        %v3418 = vunpack.c.l.b16 %v3354
        %v3419 = vunpack.c.l.b16 %v3355
        %v3420 = vunpack.c.l.b16 %v3356
        %v3421 = vunpack.c.l.b16 %v3357
        %v3422 = vunpack.c.l.b16 %v3358
        %v3423 = vunpack.c.l.b16 %v3359
        %v3424 = vunpack.c.l.b16 %v3360
        %v3425 = vunpack.c.l.b16 %v3361
        %v3426 = vunpack.c.l.b16 %v3362
        %v3427 = vunpack.c.l.b16 %v3363
        %v3428 = vunpack.c.l.b16 %v3364
        %v3429 = vunpack.c.l.b16 %v3365
        %v3430 = vpack.c.b16 %v3399, %v3398
        %v3431 = vpack.c.b16 %v3401, %v3400
        %v3432 = vpack.c.b16 %v3403, %v3402
        %v3433 = vpack.c.b16 %v3405, %v3404
        %v3434 = vpack.c.b16 %v3407, %v3406
        %v3435 = vpack.c.b16 %v3409, %v3408
        %v3436 = vpack.c.b16 %v3411, %v3410
        %v3437 = vpack.c.b16 %v3413, %v3412
        %v3438 = vpack.c.b16 %v3415, %v3414
        %v3439 = vpack.c.b16 %v3417, %v3416
        %v3440 = vpack.c.b16 %v3419, %v3418
        %v3441 = vpack.c.b16 %v3421, %v3420
        %v3442 = vpack.c.b16 %v3423, %v3422
        %v3443 = vpack.c.b16 %v3425, %v3424
        %v3444 = vpack.c.b16 %v3427, %v3426
        %v3445 = vpack.c.b16 %v3429, %v3428
        %3462 = vmatpush.bf16.msra.mxu0 %v3437
        %3463 = vmatpush.bf16.msra.mxu0 %v3436
        %3464 = vmatpush.bf16.msra.mxu0 %v3435
        %3465 = vmatpush.bf16.msra.mxu0 %v3434
        %3466 = vmatpush.bf16.msra.mxu0 %v3433
        %3467 = vmatpush.bf16.msra.mxu0 %v3432
        %3468 = vmatpush.bf16.msra.mxu0 %v3431
        %3469 = vmatpush.bf16.msra.mxu0 %v3430
        %3470 = vmatmul.bf16.gmra.mxu0 %v3184
        %v3471 = vpop.f32.mrf.mxu0
        %v3472 = vadd.f32 0.0, %v3471
        %v3473 = vpop.f32.mrf.mxu0
        %v3474 = vadd.f32 0.0, %v3473
        %3475 = vmatmul.bf16.gmra.mxu0 %v3187
        %v3476 = vpop.f32.mrf.mxu0
        %v3477 = vadd.f32 0.0, %v3476
        %v3478 = vpop.f32.mrf.mxu0
        %v3479 = vadd.f32 0.0, %v3478
        %3480 = vmatmul.bf16.gmra.mxu0 %v3190
        %v3481 = vpop.f32.mrf.mxu0
        %v3482 = vadd.f32 0.0, %v3481
        %v3483 = vpop.f32.mrf.mxu0
        %v3484 = vadd.f32 0.0, %v3483
        %3485 = vmatmul.bf16.gmra.mxu0 %v3193
        %v3486 = vpop.f32.mrf.mxu0
        %v3487 = vadd.f32 0.0, %v3486
        %v3488 = vpop.f32.mrf.mxu0
        %v3489 = vadd.f32 0.0, %v3488
        %3490 = vmatmul.bf16.gmra.mxu0 %v3196
        %v3491 = vpop.f32.mrf.mxu0
        %v3492 = vadd.f32 0.0, %v3491
        %v3493 = vpop.f32.mrf.mxu0
        %v3494 = vadd.f32 0.0, %v3493
        %3495 = vmatmul.bf16.gmra.mxu0 %v3199
        %v3496 = vpop.f32.mrf.mxu0
        %v3497 = vadd.f32 0.0, %v3496
        %v3498 = vpop.f32.mrf.mxu0
        %v3499 = vadd.f32 0.0, %v3498
        %3500 = vmatmul.bf16.gmra.mxu0 %v3202
        %v3501 = vpop.f32.mrf.mxu0
        %v3502 = vadd.f32 0.0, %v3501
        %v3503 = vpop.f32.mrf.mxu0
        %v3504 = vadd.f32 0.0, %v3503
        %3505 = vmatmul.bf16.gmra.mxu0 %v3205
        %v3506 = vpop.f32.mrf.mxu0
        %v3507 = vadd.f32 0.0, %v3506
        %v3508 = vpop.f32.mrf.mxu0
        %v3509 = vadd.f32 0.0, %v3508
        %3510 = vmatmul.bf16.gmra.mxu0 %v3208
        %v3511 = vpop.f32.mrf.mxu0
        %v3512 = vadd.f32 0.0, %v3511
        %v3513 = vpop.f32.mrf.mxu0
        %v3514 = vadd.f32 0.0, %v3513
        %3515 = vmatmul.bf16.gmra.mxu0 %v3211
        %v3516 = vpop.f32.mrf.mxu0
        %v3517 = vadd.f32 0.0, %v3516
        %v3518 = vpop.f32.mrf.mxu0
        %v3519 = vadd.f32 0.0, %v3518
        %3520 = vmatmul.bf16.gmra.mxu0 %v3214
        %v3521 = vpop.f32.mrf.mxu0
        %v3522 = vadd.f32 0.0, %v3521
        %v3523 = vpop.f32.mrf.mxu0
        %v3524 = vadd.f32 0.0, %v3523
        %3525 = vmatmul.bf16.gmra.mxu0 %v3217
        %v3526 = vpop.f32.mrf.mxu0
        %v3527 = vadd.f32 0.0, %v3526
        %v3528 = vpop.f32.mrf.mxu0
        %v3529 = vadd.f32 0.0, %v3528
        %3530 = vmatmul.bf16.gmra.mxu0 %v3220
        %v3531 = vpop.f32.mrf.mxu0
        %v3532 = vadd.f32 0.0, %v3531
        %v3533 = vpop.f32.mrf.mxu0
        %v3534 = vadd.f32 0.0, %v3533
        %3535 = vmatmul.bf16.gmra.mxu0 %v3223
        %v3536 = vpop.f32.mrf.mxu0
        %v3537 = vadd.f32 0.0, %v3536
        %v3538 = vpop.f32.mrf.mxu0
        %v3539 = vadd.f32 0.0, %v3538
        %3540 = vmatmul.bf16.gmra.mxu0 %v3226
        %v3541 = vpop.f32.mrf.mxu0
        %v3542 = vadd.f32 0.0, %v3541
        %v3543 = vpop.f32.mrf.mxu0
        %v3544 = vadd.f32 0.0, %v3543
        %3545 = vmatmul.bf16.gmra.mxu0 %v3229
        %v3546 = vpop.f32.mrf.mxu0
        %v3547 = vadd.f32 0.0, %v3546
        %v3548 = vpop.f32.mrf.mxu0
        %v3549 = vadd.f32 0.0, %v3548
        %3550 = vdwg.mxu0
        %3551 = vmatpush.bf16.msra.mxu0 %v3445
        %3552 = vmatpush.bf16.msra.mxu0 %v3444
        %3553 = vmatpush.bf16.msra.mxu0 %v3443
        %3554 = vmatpush.bf16.msra.mxu0 %v3442
        %3555 = vmatpush.bf16.msra.mxu0 %v3441
        %3556 = vmatpush.bf16.msra.mxu0 %v3440
        %3557 = vmatpush.bf16.msra.mxu0 %v3439
        %3558 = vmatpush.bf16.msra.mxu0 %v3438
        %3559 = vmatmul.bf16.gmra.mxu0 %v3291
        %v3560 = vpop.f32.mrf.mxu0
        %v3561 = vadd.f32 %v3472, %v3560
        %v3562 = vpop.f32.mrf.mxu0
        %v3563 = vadd.f32 %v3474, %v3562
        %3564 = vmatmul.bf16.gmra.mxu0 %v3294
        %v3565 = vpop.f32.mrf.mxu0
        %v3566 = vadd.f32 %v3477, %v3565
        %v3567 = vpop.f32.mrf.mxu0
        %v3568 = vadd.f32 %v3479, %v3567
        %3569 = vmatmul.bf16.gmra.mxu0 %v3297
        %v3570 = vpop.f32.mrf.mxu0
        %v3571 = vadd.f32 %v3482, %v3570
        %v3572 = vpop.f32.mrf.mxu0
        %v3573 = vadd.f32 %v3484, %v3572
        %3574 = vmatmul.bf16.gmra.mxu0 %v3300
        %v3575 = vpop.f32.mrf.mxu0
        %v3576 = vadd.f32 %v3487, %v3575
        %v3577 = vpop.f32.mrf.mxu0
        %v3578 = vadd.f32 %v3489, %v3577
        %3579 = vmatmul.bf16.gmra.mxu0 %v3303
        %v3580 = vpop.f32.mrf.mxu0
        %v3581 = vadd.f32 %v3492, %v3580
        %v3582 = vpop.f32.mrf.mxu0
        %v3583 = vadd.f32 %v3494, %v3582
        %3584 = vmatmul.bf16.gmra.mxu0 %v3306
        %v3585 = vpop.f32.mrf.mxu0
        %v3586 = vadd.f32 %v3497, %v3585
        %v3587 = vpop.f32.mrf.mxu0
        %v3588 = vadd.f32 %v3499, %v3587
        %3589 = vmatmul.bf16.gmra.mxu0 %v3309
        %v3590 = vpop.f32.mrf.mxu0
        %v3591 = vadd.f32 %v3502, %v3590
        %v3592 = vpop.f32.mrf.mxu0
        %v3593 = vadd.f32 %v3504, %v3592
        %3594 = vmatmul.bf16.gmra.mxu0 %v3312
        %v3595 = vpop.f32.mrf.mxu0
        %v3596 = vadd.f32 %v3507, %v3595
        %v3597 = vpop.f32.mrf.mxu0
        %v3598 = vadd.f32 %v3509, %v3597
        %3599 = vmatmul.bf16.gmra.mxu0 %v3315
        %v3600 = vpop.f32.mrf.mxu0
        %v3601 = vadd.f32 %v3512, %v3600
        %v3602 = vpop.f32.mrf.mxu0
        %v3603 = vadd.f32 %v3514, %v3602
        %3604 = vmatmul.bf16.gmra.mxu0 %v3318
        %v3605 = vpop.f32.mrf.mxu0
        %v3606 = vadd.f32 %v3517, %v3605
        %v3607 = vpop.f32.mrf.mxu0
        %v3608 = vadd.f32 %v3519, %v3607
        %3609 = vmatmul.bf16.gmra.mxu0 %v3321
        %v3610 = vpop.f32.mrf.mxu0
        %v3611 = vadd.f32 %v3522, %v3610
        %v3612 = vpop.f32.mrf.mxu0
        %v3613 = vadd.f32 %v3524, %v3612
        %3614 = vmatmul.bf16.gmra.mxu0 %v3323
        %v3615 = vpop.f32.mrf.mxu0
        %v3616 = vadd.f32 %v3527, %v3615
        %v3617 = vpop.f32.mrf.mxu0
        %v3618 = vadd.f32 %v3529, %v3617
        %3619 = vmatmul.bf16.gmra.mxu0 %v3325
        %v3620 = vpop.f32.mrf.mxu0
        %v3621 = vadd.f32 %v3532, %v3620
        %v3622 = vpop.f32.mrf.mxu0
        %v3623 = vadd.f32 %v3534, %v3622
        %3624 = vmatmul.bf16.gmra.mxu0 %v3327
        %v3625 = vpop.f32.mrf.mxu0
        %v3626 = vadd.f32 %v3537, %v3625
        %v3627 = vpop.f32.mrf.mxu0
        %v3628 = vadd.f32 %v3539, %v3627
        %3629 = vmatmul.bf16.gmra.mxu0 %v3329
        %v3630 = vpop.f32.mrf.mxu0
        %v3631 = vadd.f32 %v3542, %v3630
        %v3632 = vpop.f32.mrf.mxu0
        %v3633 = vadd.f32 %v3544, %v3632
        %3634 = vmatmul.bf16.gmra.mxu0 %v3331
        %v3635 = vpop.f32.mrf.mxu0
        %v3636 = vadd.f32 %v3547, %v3635
        %v3637 = vpop.f32.mrf.mxu0
        %v3638 = vadd.f32 %v3549, %v3637
        %3639 = vdwg.mxu0
        %3672 = vrot.lane.b32.xlu0 %v3561, 96
        %v3673 = vpop.permute.xlu0 %3672
        %3674 = vrot.lane.b32.xlu0 %v3563, 96
        %v3675 = vpop.permute.xlu0 %3674
        %3676 = vrot.lane.b32.xlu0 %v3566, 96
        %v3677 = vpop.permute.xlu0 %3676
        %3678 = vrot.lane.b32.xlu0 %v3568, 96
        %v3679 = vpop.permute.xlu0 %3678
        %3680 = vrot.lane.b32.xlu0 %v3571, 96
        %v3681 = vpop.permute.xlu0 %3680
        %3682 = vrot.lane.b32.xlu0 %v3573, 96
        %v3683 = vpop.permute.xlu0 %3682
        %3684 = vrot.lane.b32.xlu0 %v3576, 96
        %v3685 = vpop.permute.xlu0 %3684
        %3686 = vrot.lane.b32.xlu0 %v3578, 96
        %v3687 = vpop.permute.xlu0 %3686
        %3688 = vrot.lane.b32.xlu0 %v3581, 96
        %v3689 = vpop.permute.xlu0 %3688
        %3690 = vrot.lane.b32.xlu0 %v3583, 96
        %v3691 = vpop.permute.xlu0 %3690
        %3692 = vrot.lane.b32.xlu0 %v3586, 96
        %v3693 = vpop.permute.xlu0 %3692
        %3694 = vrot.lane.b32.xlu0 %v3588, 96
        %v3695 = vpop.permute.xlu0 %3694
        %3696 = vrot.lane.b32.xlu0 %v3591, 96
        %v3697 = vpop.permute.xlu0 %3696
        %3698 = vrot.lane.b32.xlu0 %v3593, 96
        %v3699 = vpop.permute.xlu0 %3698
        %3700 = vrot.lane.b32.xlu0 %v3596, 96
        %v3701 = vpop.permute.xlu0 %3700
        %3702 = vrot.lane.b32.xlu0 %v3598, 96
        %v3703 = vpop.permute.xlu0 %3702
        %3704 = vrot.lane.b32.xlu0 %v3601, 96
        %v3705 = vpop.permute.xlu0 %3704
        %3706 = vrot.lane.b32.xlu0 %v3603, 96
        %v3707 = vpop.permute.xlu0 %3706
        %3708 = vrot.lane.b32.xlu0 %v3606, 96
        %v3709 = vpop.permute.xlu0 %3708
        %3710 = vrot.lane.b32.xlu0 %v3608, 96
        %v3711 = vpop.permute.xlu0 %3710
        %3712 = vrot.lane.b32.xlu0 %v3611, 96
        %v3713 = vpop.permute.xlu0 %3712
        %3714 = vrot.lane.b32.xlu0 %v3613, 96
        %v3715 = vpop.permute.xlu0 %3714
        %3716 = vrot.lane.b32.xlu0 %v3616, 96
        %v3717 = vpop.permute.xlu0 %3716
        %3718 = vrot.lane.b32.xlu0 %v3618, 96
        %v3719 = vpop.permute.xlu0 %3718
        %3720 = vrot.lane.b32.xlu0 %v3621, 96
        %v3721 = vpop.permute.xlu0 %3720
        %3722 = vrot.lane.b32.xlu0 %v3623, 96
        %v3723 = vpop.permute.xlu0 %3722
        %3724 = vrot.lane.b32.xlu0 %v3626, 96
        %v3725 = vpop.permute.xlu0 %3724
        %3726 = vrot.lane.b32.xlu0 %v3628, 96
        %v3727 = vpop.permute.xlu0 %3726
        %3728 = vrot.lane.b32.xlu0 %v3631, 96
        %v3729 = vpop.permute.xlu0 %3728
        %3730 = vrot.lane.b32.xlu0 %v3633, 96
        %v3731 = vpop.permute.xlu0 %3730
        %3732 = vrot.lane.b32.xlu0 %v3636, 96
        %v3733 = vpop.permute.xlu0 %3732
        %3734 = vrot.lane.b32.xlu0 %v3638, 96
        %v3735 = vpop.permute.xlu0 %3734
        %v3768 = vadd.f32 %v547, %v3673
        %v3769 = vadd.f32 %v549, %v3675
        %v3770 = vadd.f32 %v552, %v3677
        %v3771 = vadd.f32 %v554, %v3679
        %v3772 = vadd.f32 %v557, %v3681
        %v3773 = vadd.f32 %v559, %v3683
        %v3774 = vadd.f32 %v562, %v3685
        %v3775 = vadd.f32 %v564, %v3687
        %v3776 = vadd.f32 %v567, %v3689
        %v3777 = vadd.f32 %v569, %v3691
        %v3778 = vadd.f32 %v572, %v3693
        %v3779 = vadd.f32 %v574, %v3695
        %v3780 = vadd.f32 %v577, %v3697
        %v3781 = vadd.f32 %v579, %v3699
        %v3782 = vadd.f32 %v582, %v3701
        %v3783 = vadd.f32 %v584, %v3703
        %v3784 = vadd.f32 %v587, %v3705
        %v3785 = vadd.f32 %v589, %v3707
        %v3786 = vadd.f32 %v592, %v3709
        %v3787 = vadd.f32 %v594, %v3711
        %v3788 = vadd.f32 %v597, %v3713
        %v3789 = vadd.f32 %v599, %v3715
        %v3790 = vadd.f32 %v602, %v3717
        %v3791 = vadd.f32 %v604, %v3719
        %v3792 = vadd.f32 %v607, %v3721
        %v3793 = vadd.f32 %v609, %v3723
        %v3794 = vadd.f32 %v612, %v3725
        %v3795 = vadd.f32 %v614, %v3727
        %v3796 = vadd.f32 %v617, %v3729
        %v3797 = vadd.f32 %v619, %v3731
        %v3798 = vadd.f32 %v622, %v3733
        %v3799 = vadd.f32 %v624, %v3735
        %v3800 = vld [vmem:[%s4] sm:$0x1]
        %v3802 = vperm.slane %v3800, 0
        %v3804 = vadd.f32 %v3768, %v3802
        %v3805 = vadd.f32 %v3769, %v3802
        %v3806 = vadd.f32 %v3770, %v3802
        %v3807 = vadd.f32 %v3771, %v3802
        %v3808 = vadd.f32 %v3772, %v3802
        %v3809 = vadd.f32 %v3773, %v3802
        %v3810 = vadd.f32 %v3774, %v3802
        %v3811 = vadd.f32 %v3775, %v3802
        %v3812 = vadd.f32 %v3776, %v3802
        %v3813 = vadd.f32 %v3777, %v3802
        %v3814 = vadd.f32 %v3778, %v3802
        %v3815 = vadd.f32 %v3779, %v3802
        %v3816 = vadd.f32 %v3780, %v3802
        %v3817 = vadd.f32 %v3781, %v3802
        %v3818 = vadd.f32 %v3782, %v3802
        %v3819 = vadd.f32 %v3783, %v3802
        %v3820 = vadd.f32 %v3784, %v3802
        %v3821 = vadd.f32 %v3785, %v3802
        %v3822 = vadd.f32 %v3786, %v3802
        %v3823 = vadd.f32 %v3787, %v3802
        %v3824 = vadd.f32 %v3788, %v3802
        %v3825 = vadd.f32 %v3789, %v3802
        %v3826 = vadd.f32 %v3790, %v3802
        %v3827 = vadd.f32 %v3791, %v3802
        %v3828 = vadd.f32 %v3792, %v3802
        %v3829 = vadd.f32 %v3793, %v3802
        %v3830 = vadd.f32 %v3794, %v3802
        %v3831 = vadd.f32 %v3795, %v3802
        %v3832 = vadd.f32 %v3796, %v3802
        %v3833 = vadd.f32 %v3797, %v3802
        %v3834 = vadd.f32 %v3798, %v3802
        %v3835 = vadd.f32 %v3799, %v3802
        %v3836 = vmax.f32 %v3804, 0.0
        %v3837 = vmax.f32 %v3805, 0.0
        %v3838 = vmax.f32 %v3806, 0.0
        %v3839 = vmax.f32 %v3807, 0.0
        %v3840 = vmax.f32 %v3808, 0.0
        %v3841 = vmax.f32 %v3809, 0.0
        %v3842 = vmax.f32 %v3810, 0.0
        %v3843 = vmax.f32 %v3811, 0.0
        %v3844 = vmax.f32 %v3812, 0.0
        %v3845 = vmax.f32 %v3813, 0.0
        %v3846 = vmax.f32 %v3814, 0.0
        %v3847 = vmax.f32 %v3815, 0.0
        %v3848 = vmax.f32 %v3816, 0.0
        %v3849 = vmax.f32 %v3817, 0.0
        %v3850 = vmax.f32 %v3818, 0.0
        %v3851 = vmax.f32 %v3819, 0.0
        %v3852 = vmax.f32 %v3820, 0.0
        %v3853 = vmax.f32 %v3821, 0.0
        %v3854 = vmax.f32 %v3822, 0.0
        %v3855 = vmax.f32 %v3823, 0.0
        %v3856 = vmax.f32 %v3824, 0.0
        %v3857 = vmax.f32 %v3825, 0.0
        %v3858 = vmax.f32 %v3826, 0.0
        %v3859 = vmax.f32 %v3827, 0.0
        %v3860 = vmax.f32 %v3828, 0.0
        %v3861 = vmax.f32 %v3829, 0.0
        %v3862 = vmax.f32 %v3830, 0.0
        %v3863 = vmax.f32 %v3831, 0.0
        %v3864 = vmax.f32 %v3832, 0.0
        %v3865 = vmax.f32 %v3833, 0.0
        %v3866 = vmax.f32 %v3834, 0.0
        %v3867 = vmax.f32 %v3835, 0.0
        %v3868 = vpack.c.bf16 %v3836, %v3836
        %v3869 = vpack.c.bf16 %v3837, %v3837
        %v3870 = vpack.c.bf16 %v3838, %v3838
        %v3871 = vpack.c.bf16 %v3839, %v3839
        %v3872 = vpack.c.bf16 %v3840, %v3840
        %v3873 = vpack.c.bf16 %v3841, %v3841
        %v3874 = vpack.c.bf16 %v3842, %v3842
        %v3875 = vpack.c.bf16 %v3843, %v3843
        %v3876 = vpack.c.bf16 %v3844, %v3844
        %v3877 = vpack.c.bf16 %v3845, %v3845
        %v3878 = vpack.c.bf16 %v3846, %v3846
        %v3879 = vpack.c.bf16 %v3847, %v3847
        %v3880 = vpack.c.bf16 %v3848, %v3848
        %v3881 = vpack.c.bf16 %v3849, %v3849
        %v3882 = vpack.c.bf16 %v3850, %v3850
        %v3883 = vpack.c.bf16 %v3851, %v3851
        %v3884 = vpack.c.bf16 %v3852, %v3852
        %v3885 = vpack.c.bf16 %v3853, %v3853
        %v3886 = vpack.c.bf16 %v3854, %v3854
        %v3887 = vpack.c.bf16 %v3855, %v3855
        %v3888 = vpack.c.bf16 %v3856, %v3856
        %v3889 = vpack.c.bf16 %v3857, %v3857
        %v3890 = vpack.c.bf16 %v3858, %v3858
        %v3891 = vpack.c.bf16 %v3859, %v3859
        %v3892 = vpack.c.bf16 %v3860, %v3860
        %v3893 = vpack.c.bf16 %v3861, %v3861
        %v3894 = vpack.c.bf16 %v3862, %v3862
        %v3895 = vpack.c.bf16 %v3863, %v3863
        %v3896 = vpack.c.bf16 %v3864, %v3864
        %v3897 = vpack.c.bf16 %v3865, %v3865
        %v3898 = vpack.c.bf16 %v3866, %v3866
        %v3899 = vpack.c.bf16 %v3867, %v3867
        %vm3900 = vcmask 1044224
        %3901 = vst.msk [vmem:[%s275] sm:$0xf] %vm3900, %v3868
        %3902 = vst.msk [vmem:[%s275 + $0x4] sm:$0xf] %vm3900, %v3869
        %3903 = vst.msk [vmem:[%s275 + $0x8] sm:$0xf] %vm3900, %v3870
        %3904 = vst.msk [vmem:[%s275 + $0xc] sm:$0xf] %vm3900, %v3871
        %3905 = vst.msk [vmem:[%s275 + $0x10] sm:$0xf] %vm3900, %v3872
        %3906 = vst.msk [vmem:[%s275 + $0x14] sm:$0xf] %vm3900, %v3873
        %3907 = vst.msk [vmem:[%s275 + $0x18] sm:$0xf] %vm3900, %v3874
        %3908 = vst.msk [vmem:[%s275 + $0x1c] sm:$0xf] %vm3900, %v3875
        %3909 = vst.msk [vmem:[%s275 + $0x20] sm:$0xf] %vm3900, %v3876
        %3910 = vst.msk [vmem:[%s275 + $0x24] sm:$0xf] %vm3900, %v3877
        %3911 = vst.msk [vmem:[%s275 + $0x28] sm:$0xf] %vm3900, %v3878
        %3912 = vst.msk [vmem:[%s275 + $0x2c] sm:$0xf] %vm3900, %v3879
        %3913 = vst.msk [vmem:[%s275 + $0x30] sm:$0xf] %vm3900, %v3880
        %3914 = vst.msk [vmem:[%s275 + $0x34] sm:$0xf] %vm3900, %v3881
        %3915 = vst.msk [vmem:[%s275 + $0x38] sm:$0xf] %vm3900, %v3882
        %3916 = vst.msk [vmem:[%s275 + $0x3c] sm:$0xf] %vm3900, %v3883
        %3917 = vst.msk [vmem:[%s275 + $0x40] sm:$0xf] %vm3900, %v3884
        %3918 = vst.msk [vmem:[%s275 + $0x44] sm:$0xf] %vm3900, %v3885
        %3919 = vst.msk [vmem:[%s275 + $0x48] sm:$0xf] %vm3900, %v3886
        %3920 = vst.msk [vmem:[%s275 + $0x4c] sm:$0xf] %vm3900, %v3887
        %3921 = vst.msk [vmem:[%s275 + $0x50] sm:$0xf] %vm3900, %v3888
        %3922 = vst.msk [vmem:[%s275 + $0x54] sm:$0xf] %vm3900, %v3889
        %3923 = vst.msk [vmem:[%s275 + $0x58] sm:$0xf] %vm3900, %v3890
        %3924 = vst.msk [vmem:[%s275 + $0x5c] sm:$0xf] %vm3900, %v3891
        %3925 = vst.msk [vmem:[%s275 + $0x60] sm:$0xf] %vm3900, %v3892
        %3926 = vst.msk [vmem:[%s275 + $0x64] sm:$0xf] %vm3900, %v3893
        %3927 = vst.msk [vmem:[%s275 + $0x68] sm:$0xf] %vm3900, %v3894
        %3928 = vst.msk [vmem:[%s275 + $0x6c] sm:$0xf] %vm3900, %v3895
        %3929 = vst.msk [vmem:[%s275 + $0x70] sm:$0xf] %vm3900, %v3896
        %3930 = vst.msk [vmem:[%s275 + $0x74] sm:$0xf] %vm3900, %v3897
        %3931 = vst.msk [vmem:[%s275 + $0x78] sm:$0xf] %vm3900, %v3898
        %3932 = vst.msk [vmem:[%s275 + $0x7c] sm:$0xf] %vm3900, %v3899
        %3949 = vmatpush.bf16.msra.mxu0 %v392
        %3950 = vmatpush.bf16.msra.mxu0 %v391
        %3951 = vmatpush.bf16.msra.mxu0 %v390
        %3952 = vmatpush.bf16.msra.mxu0 %v389
        %3953 = vmatpush.bf16.msra.mxu0 %v388
        %3954 = vmatpush.bf16.msra.mxu0 %v387
        %3955 = vmatpush.bf16.msra.mxu0 %v386
        %3956 = vmatpush.bf16.msra.mxu0 %v385
        %3957 = vmatmul.bf16.gmra.mxu0 1065369472
        %v3958 = vpop.f32.mrf.mxu0
        %v3959 = vadd.f32 0.0, %v3958
        %v3960 = vpop.f32.mrf.mxu0
        %3961 = vdwg.mxu0
        %3962 = vmatpush.bf16.msra.mxu0 %v400
        %3963 = vmatpush.bf16.msra.mxu0 %v399
        %3964 = vmatpush.bf16.msra.mxu0 %v398
        %3965 = vmatpush.bf16.msra.mxu0 %v397
        %3966 = vmatpush.bf16.msra.mxu0 %v396
        %3967 = vmatpush.bf16.msra.mxu0 %v395
        %3968 = vmatpush.bf16.msra.mxu0 %v394
        %3969 = vmatpush.bf16.msra.mxu0 %v393
        %3970 = vmatmul.bf16.gmra.mxu0 1065369472
        %v3971 = vpop.f32.mrf.mxu0
        %v3972 = vadd.f32 %v3959, %v3971
        %v3973 = vpop.f32.mrf.mxu0
        %3974 = vdwg.mxu0
        %v3975 = vmul.f32 %v3972, 0.00390625
        %v3976 = vpack.c.bf16 %v3975, %v3975
        %v3977 = vld [vmem:[%s3] sm:$0xf]
        %v3978 = vld [vmem:[%s3 + $0x4] sm:$0xf]
        %v3979 = vld [vmem:[%s3 + $0x8] sm:$0xf]
        %v3980 = vld [vmem:[%s3 + $0xc] sm:$0xf]
        %v3981 = vld [vmem:[%s5] sm:$0x1]
        %v3986 = vunpack.c.l.b16 %v3977
        %v3987 = vunpack.c.l.b16 %v3978
        %v3988 = vunpack.c.l.b16 %v3979
        %v3989 = vunpack.c.l.b16 %v3980
        %v3990 = vpack.c.b16 %v3987, %v3986
        %v3991 = vpack.c.b16 %v3989, %v3988
        %v3995 = vsel %vm488, %v3976, 0
        %3997 = vmatpush.bf16.msra.mxu0 0
        %3998 = vmatpush.bf16.msra.mxu0 0
        %3999 = vmatpush.bf16.msra.mxu0 0
        %4000 = vmatpush.bf16.msra.mxu0 0
        %4001 = vmatpush.bf16.msra.mxu0 0
        %4002 = vmatpush.bf16.msra.mxu0 0
        %4003 = vmatpush.bf16.msra.mxu0 %v3991
        %4004 = vmatpush.bf16.msra.mxu0 %v3990
        %4005 = vmatmul.bf16.gmra.mxu0 %v3995
        %v4006 = vpop.f32.mrf.mxu0
        %v4007 = vadd.f32 %v3981, %v4006
        %v4008 = vpop.f32.mrf.mxu0
        %4009 = vdwg.mxu0
        %v4010 = vmax.f32 %v4007, 0.0
        %vm4011 = vcmask 253952
        %4012 = vst.msk [vmem:[%s281] sm:$0x1] %vm4011, %v4010
        %s4013 = sand.u32 %s164, 1
        %s4014 = scalar_lea.sflag [#allocation3], %s4013
        %s4015 = sand.u32 %s164, 1
        %s4016 = smul.addr %s4015, 128
        %s4017 = scalar_lea.vmem [#allocation2], %s4016
        %s4018 = sand.u32 %s190, 1
        %s4019 = scalar_lea.sflag [#allocation5], %s4018
        %s4020 = sand.u32 %s190, 1
        %s4021 = scalar_lea.vmem [#allocation4], %s4020
        // Predicated region
        $region45: #{tpu_custom_call.1} parent=43 // pred_check
          %p4022 = pneg %p174
        $region46: #{tpu_custom_call.1} parent=43 // pred_check_branch
          %4024 = sbr.rel (%p4022) target = $region48
        $region47: #{tpu_custom_call.1} parent=43 // pred_region
          %4026 = vsyncadd %s4014, 0
          %s4027 = smul.addr %s25, 32
          %s4028 = smul.addr %s4027, 4
          %s4029 = scalar_lea.hbm %s6, %s4028
          %s4030 = sshll.u32 %s4017, 4
          %s4031 = int_to_ptr.vmem [resolvable:$true] %s4030
          %s4032 = sshll.u32 %s4029, 4
          %s4033 = int_to_ptr.hbm [resolvable:$true] %s4032
          %4038 = dma.vmem_to_hbm [thread:$0]  %s4031, 2048, %s4033, %s4014, 64, 64, 4
        $region48: #{tpu_custom_call.1} parent=43 // pred_fallthru
          _
        // Predicated region
        $region49: #{tpu_custom_call.1} parent=43 // pred_check
          %p4039 = pneg %p200
        $region50: #{tpu_custom_call.1} parent=43 // pred_check_branch
          %4041 = sbr.rel (%p4039) target = $region52
        $region51: #{tpu_custom_call.1} parent=43 // pred_region
          %4043 = vsyncadd %s4019, 0
          %s4044 = scalar_lea.hbm %s7, %s25
          %s4046 = sshll.u32 %s4021, 4
          %s4047 = int_to_ptr.vmem [resolvable:$true] %s4046
          %s4048 = sshll.u32 %s4044, 4
          %s4049 = int_to_ptr.hbm [resolvable:$true] %s4048
          %4051 = dma.vmem_to_hbm [thread:$0]  %s4047, 16, %s4049, %s4019
        $region52: #{tpu_custom_call.1} parent=43 // pred_fallthru
          _
      $region44: #{tpu_custom_call.1} parent=5 // pred_fallthru
        _
      %p4052 = scmp.le.s32.totalorder 2, %s20
      // Predicated region
      $region53: #{tpu_custom_call.1} parent=5 // pred_check
        %p4053 = pneg %p4052
      $region54: #{tpu_custom_call.1} parent=5 // pred_check_branch
        %4055 = sbr.rel (%p4053) target = $region56
      $region55: #{tpu_custom_call.1} parent=5 // pred_region
        %s4056 = ssub.s32 %s20, 2
        // Predicated region
        $region57: #{tpu_custom_call.1} parent=55 // pred_check
          %p4057 = pneg %p180
        $region58: #{tpu_custom_call.1} parent=55 // pred_check_branch
          %4059 = sbr.rel (%p4057) target = $region60
        $region59: #{tpu_custom_call.1} parent=55 // pred_region
          %s4060 = sand.u32 %s165, 1
          %s4061 = scalar_lea.sflag [#allocation3], %s4060
          %s4062 = sand.u32 %s165, 1
          %s4063 = smul.addr %s4062, 128
          %s4064 = scalar_lea.vmem [#allocation2], %s4063
          %4066 = dma.done %s4061, 2048
        $region60: #{tpu_custom_call.1} parent=55 // pred_fallthru
          _
        // Predicated region
        $region61: #{tpu_custom_call.1} parent=55 // pred_check
          %p4067 = pneg %p206
        $region62: #{tpu_custom_call.1} parent=55 // pred_check_branch
          %4069 = sbr.rel (%p4067) target = $region64
        $region63: #{tpu_custom_call.1} parent=55 // pred_region
          %s4070 = sand.u32 %s191, 1
          %s4071 = scalar_lea.sflag [#allocation5], %s4070
          %s4072 = sand.u32 %s191, 1
          %s4073 = scalar_lea.vmem [#allocation4], %s4072
          %4075 = dma.done %s4071, 16
        $region64: #{tpu_custom_call.1} parent=55 // pred_fallthru
          _
      $region56: #{tpu_custom_call.1} parent=5 // pred_fallthru
        _
    $region6: #{tpu_custom_call.1} parent=1 // loop_footer
      %s24 = sadd.s32 1, %s20
    $region7: #{tpu_custom_call.1} parent=1 // loop_footer_branch
      %19 = sbr.rel target = $region3
    $region8: #{tpu_custom_call.1} parent=1 // loop_exit
      _
    %4076 = vsyncpa [#allocation3], 1
    %s4077 = scalar_lea.sflag [#allocation3], 1
    %4078 = vsyncpa %s4077, 1
    %4079 = vsyncpa [#allocation5], 1
    %s4080 = scalar_lea.sflag [#allocation5], 1
    %4081 = vsyncpa %s4080, 1

</llo_original>
